<compile_context>
chip_gen: v7x
topology: tpu7x:2x2x1
jax: 0.10.0
libtpu: 0.0.40
codegen_flags: <defaults>
</compile_context>

<pallas_src>
import functools

import jax
import jax.numpy as jnp
from jax.experimental import pallas as pl
from jax.experimental.pallas import tpu as pltpu

EPS = 1e-5
LANE = 128


def _round_up(x, m):
    return (x + m - 1) // m * m


def _tpu_tuning():
    """(max_row_tile, vmem_limit_bytes) per TPU generation.

    v4/v5e/v6e have 128 MiB VMEM -> larger row tiles + higher scoped limit.
    v7x has only 64 MiB -> keep the budget conservative.  Unknown device kinds
    fall back to the conservative setting (safe everywhere).
    """
    kind = ""
    try:
        kind = jax.devices()[0].device_kind.lower()
    except Exception:
        pass
    if any(tag in kind for tag in ("v4", "v5", "v6")):
        return 1024, 96 * 1024 * 1024
    return 512, 48 * 1024 * 1024


def _pick_row_tile(rows, max_tile):
    """Largest multiple-of-8 divisor of `rows` that is <= max_tile."""
    best = None
    for t in range(8, min(rows, max_tile) + 1, 8):
        if rows % t == 0:
            best = t
    return best if best is not None else rows


def _partial_stats(y_f32):
    """(rows, C) f32 -> (2, C): [per-tile mean ; per-tile sum of sq. deviations]."""
    mu = jnp.mean(y_f32, axis=0, keepdims=True)
    d = y_f32 - mu
    m2 = jnp.sum(d * d, axis=0, keepdims=True)
    return jnp.concatenate([mu, m2], axis=0)


def _fold_bn(pst, rows_per_tile, gamma, beta):
    """(T, 2, C) per-tile [mean, M2] -> folded (1, C) BN scale / shift (f32).

    Group-wise variance combine (exact for equal-size tiles); runs as a few-KB
    plain-JAX reduction between pallas_calls.
    """
    mu_i = pst[:, 0, :]
    m2_i = pst[:, 1, :]
    t = pst.shape[0]
    mean = jnp.mean(mu_i, axis=0, keepdims=True)
    var = (jnp.sum(m2_i, axis=0, keepdims=True)
           + rows_per_tile * jnp.sum(jnp.square(mu_i - mean), axis=0, keepdims=True)
           ) / (rows_per_tile * t)
    scale = gamma * jax.lax.rsqrt(var + EPS)
    shift = beta - mean * scale
    return scale, shift


# ----------------------------- kernels ------------------------------------ #

def _conv1_kernel(x_ref, w_ref, y_ref, pst_ref):
    # conv1 (1x1, no bias): one MXU matmul per row tile; stats from the f32
    # accumulator, activation stored bf16.
    y = jnp.dot(x_ref[...].astype(jnp.bfloat16), w_ref[...],
                preferred_element_type=jnp.float32)
    pst_ref[0] = _partial_stats(y)
    y_ref[...] = y.astype(y_ref.dtype)


def _bn1_conv2_kernel(y_ref, s_ref, t_ref, w_ref, o_ref, pst_ref, zp_ref, *, H, W):
    # bn1+relu (folded scale/shift FMA) -> 1-pixel spatial zero-pad in a VMEM
    # scratch -> 3x3 conv as a single K = 9*Pp matmul -> BN2 per-image stats.
    z = jnp.maximum(y_ref[0].astype(jnp.float32) * s_ref[...] + t_ref[...], 0.0)
    zp_ref[...] = jnp.zeros_like(zp_ref)
    zp_ref[1:H + 1, 1:W + 1, :] = z.reshape(H, W, -1)
    Pp = zp_ref.shape[-1]
    cols = [zp_ref[kh:kh + H, kw:kw + W, :].reshape(H * W, Pp)
            for kh in range(3) for kw in range(3)]
    patch = jnp.concatenate(cols, axis=-1).astype(jnp.bfloat16)   # (H*W, 9*Pp)
    y2 = jnp.dot(patch, w_ref[...], preferred_element_type=jnp.float32)
    pst_ref[0] = _partial_stats(y2)
    o_ref[0] = y2.astype(o_ref.dtype)


def _bn_conv1x1_kernel(y_ref, s_ref, t_ref, w_ref, o_ref, pst_ref):
    # bn2+relu (folded FMA) -> conv3 (1x1 expansion) -> BN3 per-tile stats.
    z = jnp.maximum(y_ref[...].astype(jnp.float32) * s_ref[...] + t_ref[...], 0.0)
    y = jnp.dot(z.astype(jnp.bfloat16), w_ref[...],
                preferred_element_type=jnp.float32)
    pst_ref[0] = _partial_stats(y)
    o_ref[...] = y.astype(o_ref.dtype)


def _bn3_residual_kernel(y_ref, s_ref, t_ref, res_ref, o_ref):
    # bn3 (folded FMA) -> += residual -> relu.
    z = y_ref[...].astype(jnp.float32) * s_ref[...] + t_ref[...]
    o_ref[...] = jnp.maximum(z + res_ref[...], 0.0)


# ----------------------------- wrapper ------------------------------------ #

def bottleneck_forward(x_nchw, params):
    """Bottleneck(inplanes, planes, stride=1, downsample=None) forward."""
    # TODO(synk): stride>1 / downsample (conv+BN shortcut) branch is not
    # implemented; only the downsample=None, inplanes == planes*4 config.
    N, Cin, H, W = x_nchw.shape
    P = params["w1"].shape[1]
    Cout = params["w3"].shape[1]
    assert Cin == Cout, "downsample=None requires inplanes == planes*4"

    Cp = _round_up(Cin, LANE)        # lane-dense in/out channel count
    Pp = _round_up(P, LANE)          # lane-dense bottleneck width
    R = N * H * W                    # BN reduces over all of N, H, W
    max_tile, vmem_limit = _tpu_tuning()
    tr = _pick_row_tile(R, max_tile)
    nt = R // tr

    # ---- one-time layout / padding glue (channels-last, zero-padded) ------
    f32, bf16 = jnp.float32, jnp.bfloat16
    x_nhwc = jnp.transpose(x_nchw, (0, 2, 3, 1)).astype(f32)
    x_flat = jnp.pad(x_nhwc.reshape(R, Cin), ((0, 0), (0, Cp - Cin)))

    # TODO(synk): for P < 128 the K/N padding of conv2 to 9*Pp/Pp inflates MXU
    # work ~4x (layer1-style shapes); pad only K to round_up(9*P, 128) instead.
    w1 = jnp.zeros((Cp, Pp), bf16).at[:Cin, :P].set(params["w1"].astype(bf16))
    w2 = (jnp.zeros((9, Pp, Pp), bf16)
          .at[:, :P, :P].set(params["w2"].astype(bf16))
          .reshape(9 * Pp, Pp))
    w3 = jnp.zeros((Pp, Cp), bf16).at[:P, :Cout].set(params["w3"].astype(bf16))
    g1 = jnp.pad(params["g1"].astype(f32), ((0, 0), (0, Pp - P)))
    b1 = jnp.pad(params["b1"].astype(f32), ((0, 0), (0, Pp - P)))
    g2 = jnp.pad(params["g2"].astype(f32), ((0, 0), (0, Pp - P)))
    b2 = jnp.pad(params["b2"].astype(f32), ((0, 0), (0, Pp - P)))
    g3 = jnp.pad(params["g3"].astype(f32), ((0, 0), (0, Cp - Cout)))
    b3 = jnp.pad(params["b3"].astype(f32), ((0, 0), (0, Cp - Cout)))

    cparams = pltpu.CompilerParams(dimension_semantics=("parallel",),
                                   vmem_limit_bytes=vmem_limit)

    # ---- pass 1: conv1 (1x1) -> bf16 y1 + BN1 per-tile stats ---------------
    y1, pst1 = pl.pallas_call(
        _conv1_kernel,
        grid=(nt,),
        in_specs=[pl.BlockSpec((tr, Cp), lambda i: (i, 0)),
                  pl.BlockSpec((Cp, Pp), lambda i: (0, 0))],
        out_specs=(pl.BlockSpec((tr, Pp), lambda i: (i, 0)),
                   pl.BlockSpec((1, 2, Pp), lambda i: (i, 0, 0))),
        out_shape=(jax.ShapeDtypeStruct((R, Pp), bf16),
                   jax.ShapeDtypeStruct((nt, 2, Pp), f32)),
        compiler_params=cparams,
    )(x_flat, w1)
    s1, t1 = _fold_bn(pst1, tr, g1, b1)

    # ---- pass 2: bn1+relu -> VMEM pad -> conv2 (3x3) + BN2 stats -----------
    # TODO(synk): for large images on v7x, tile H with a halo block; for tiny
    # H*W (late ResNet stages) batch several images per step so matmul M>=256.
    y2, pst2 = pl.pallas_call(
        functools.partial(_bn1_conv2_kernel, H=H, W=W),
        grid=(N,),
        in_specs=[pl.BlockSpec((1, H * W, Pp), lambda n: (n, 0, 0)),
                  pl.BlockSpec((1, Pp), lambda n: (0, 0)),
                  pl.BlockSpec((1, Pp), lambda n: (0, 0)),
                  pl.BlockSpec((9 * Pp, Pp), lambda n: (0, 0))],
        out_specs=(pl.BlockSpec((1, H * W, Pp), lambda n: (n, 0, 0)),
                   pl.BlockSpec((1, 2, Pp), lambda n: (n, 0, 0))),
        out_shape=(jax.ShapeDtypeStruct((N, H * W, Pp), bf16),
                   jax.ShapeDtypeStruct((N, 2, Pp), f32)),
        scratch_shapes=[pltpu.VMEM((H + 2, W + 2, Pp), f32)],
        compiler_params=cparams,
    )(y1.reshape(N, H * W, Pp), s1, t1, w2)
    s2, t2 = _fold_bn(pst2, H * W, g2, b2)

    # ---- pass 3: bn2+relu -> conv3 (1x1 expansion) + BN3 stats -------------
    y3, pst3 = pl.pallas_call(
        _bn_conv1x1_kernel,
        grid=(nt,),
        in_specs=[pl.BlockSpec((tr, Pp), lambda i: (i, 0)),
                  pl.BlockSpec((1, Pp), lambda i: (0, 0)),
                  pl.BlockSpec((1, Pp), lambda i: (0, 0)),
                  pl.BlockSpec((Pp, Cp), lambda i: (0, 0))],
        out_specs=(pl.BlockSpec((tr, Cp), lambda i: (i, 0)),
                   pl.BlockSpec((1, 2, Cp), lambda i: (i, 0, 0))),
        out_shape=(jax.ShapeDtypeStruct((R, Cp), bf16),
                   jax.ShapeDtypeStruct((nt, 2, Cp), f32)),
        compiler_params=cparams,
    )(y2.reshape(R, Pp), s2, t2, w3)
    s3, t3 = _fold_bn(pst3, tr, g3, b3)

    # ---- pass 4: bn3 + residual + relu (output aliases x's buffer) ---------
    out_flat = pl.pallas_call(
        _bn3_residual_kernel,
        grid=(nt,),
        in_specs=[pl.BlockSpec((tr, Cp), lambda i: (i, 0)),
                  pl.BlockSpec((1, Cp), lambda i: (0, 0)),
                  pl.BlockSpec((1, Cp), lambda i: (0, 0)),
                  pl.BlockSpec((tr, Cp), lambda i: (i, 0))],
        out_specs=pl.BlockSpec((tr, Cp), lambda i: (i, 0)),
        out_shape=jax.ShapeDtypeStruct((R, Cp), f32),
        input_output_aliases={3: 0},
        compiler_params=cparams,
    )(y3, s3, t3, x_flat)

    out = out_flat[:, :Cout].reshape(N, H, W, Cout)
    return jnp.transpose(out, (0, 3, 1, 2))


# ----------------------------- references --------------------------------- #

def _conv(a, w, pad):
    return jax.lax.conv_general_dilated(
        a.astype(jnp.bfloat16), w.astype(jnp.bfloat16), (1, 1), pad,
        dimension_numbers=('NHWC', 'HWIO', 'NHWC'),
        preferred_element_type=jnp.float32)


def _bn_fold_ref(y, g, b):
    mean = jnp.mean(y, axis=(0, 1, 2), keepdims=True)
    var = jnp.mean(jnp.square(y - mean), axis=(0, 1, 2), keepdims=True)
    scale = g.reshape(1, 1, 1, -1) * jax.lax.rsqrt(var + EPS)
    shift = b.reshape(1, 1, 1, -1) - mean * scale
    return scale, shift


def ref_forward(x_nchw, params, store_dtype):
    """Pure-JAX Bottleneck reference (training-mode BN, eps=1e-5).

    `store_dtype` is the precision of the activation carried between stages:
    bf16 mirrors the kernel's inter-pass storage, f32 mirrors the original
    full-f32 PyTorch module.  BN statistics always come from the f32 conv
    output (as in the kernel).
    """
    f32 = jnp.float32
    x = jnp.transpose(x_nchw, (0, 2, 3, 1)).astype(f32)
    Cin = x.shape[-1]
    P = params["w1"].shape[1]
    Cout = params["w3"].shape[1]
    w1 = params["w1"].reshape(1, 1, Cin, P)
    w2 = params["w2"].reshape(3, 3, P, P)
    w3 = params["w3"].reshape(1, 1, P, Cout)

    y1 = _conv(x, w1, 'VALID')
    s, t = _bn_fold_ref(y1, params["g1"], params["b1"])
    z1 = jnp.maximum(y1.astype(store_dtype).astype(f32) * s + t, 0.0)

    y2 = _conv(z1, w2, ((1, 1), (1, 1)))
    s, t = _bn_fold_ref(y2, params["g2"], params["b2"])
    z2 = jnp.maximum(y2.astype(store_dtype).astype(f32) * s + t, 0.0)

    y3 = _conv(z2, w3, 'VALID')
    s, t = _bn_fold_ref(y3, params["g3"], params["b3"])
    z3 = y3.astype(store_dtype).astype(f32) * s + t

    out = jnp.maximum(z3 + x, 0.0)
    return jnp.transpose(out, (0, 3, 1, 2))


if __name__ == "__main__":
    key = jax.random.PRNGKey(0)
    N, inplanes, H, W = 2, 16, 16, 16
    planes = 4
    Cout = planes * 4  # expansion = 4; equals inplanes so the residual add is valid

    keys = jax.random.split(key, 10)
    params = {
        # conv weights stored channels-last-friendly: 1x1 as (Cin, Cout),
        # 3x3 as (kh*kw, Cin, Cout)  [== HWIO flattened over kh,kw].
        "w1": 0.1 * jax.random.normal(keys[0], (inplanes, planes), jnp.float32),
        "g1": 1.0 + 0.1 * jax.random.normal(keys[1], (1, planes), jnp.float32),
        "b1": 0.1 * jax.random.normal(keys[2], (1, planes), jnp.float32),
        "w2": 0.1 * jax.random.normal(keys[3], (9, planes, planes), jnp.float32),
        "g2": 1.0 + 0.1 * jax.random.normal(keys[4], (1, planes), jnp.float32),
        "b2": 0.1 * jax.random.normal(keys[5], (1, planes), jnp.float32),
        "w3": 0.1 * jax.random.normal(keys[6], (planes, Cout), jnp.float32),
        "g3": 1.0 + 0.1 * jax.random.normal(keys[7], (1, Cout), jnp.float32),
        "b3": 0.1 * jax.random.normal(keys[8], (1, Cout), jnp.float32),
    }
    x = jax.random.normal(keys[9], (N, inplanes, H, W), jnp.float32)

    out = jax.block_until_ready(jax.jit(bottleneck_forward)(x, params))
    assert out.shape == (N, Cout, H, W), out.shape

    # Strict check vs a reference with the same (bf16 inter-pass) numerics.
    ref_q = ref_forward(x, params, jnp.bfloat16)
    err_q = float(jnp.max(jnp.abs(out - ref_q)))
    assert jnp.allclose(out, ref_q, atol=1e-3, rtol=1e-3), err_q
    # Sanity check vs the full-f32-activation (PyTorch-like) reference.
    ref_f = ref_forward(x, params, jnp.float32)
    err_f = float(jnp.max(jnp.abs(out - ref_f)))
    assert jnp.allclose(out, ref_f, atol=5e-2, rtol=5e-2), err_f

    print("KERNEL_OK")
</pallas_src>

<mosaic_0001>
module attributes {stable_mosaic.version = 11 : i64} {
  func.func @_conv1_kernel(%arg0: i32, %arg1: memref<512x128xf32, #tpu.memory_space<vmem>>, %arg2: memref<128x128xbf16, #tpu.memory_space<vmem>>, %arg3: memref<512x128xbf16, #tpu.memory_space<vmem>>, %arg4: memref<1x2x128xf32, #tpu.memory_space<vmem>>) attributes {dimension_semantics = [#tpu.dimension_semantics<parallel>], iteration_bounds = array<i64: 1>, scalar_prefetch = 0 : i64, scratch_operands = 0 : i64, tpu.core_type = #tpu.core_type<tc>, window_params = [{transform_indices = @transform_0, window_bounds = array<i64: 512, 128>}, {pipeline_mode = #tpu.pipeline_mode<synchronous>, transform_indices = @transform_1, window_bounds = array<i64: 128, 128>}, {transform_indices = @transform_2, window_bounds = array<i64: 512, 128>}, {transform_indices = @transform_3, window_bounds = array<i64: 1, 2, 128>}]} {
    %c0 = arith.constant 0 : index
    %c0_0 = arith.constant 0 : index
    %0 = vector.load %arg1[%c0, %c0_0] : memref<512x128xf32, #tpu.memory_space<vmem>>, vector<512x128xf32>
    %1 = arith.truncf %0 : vector<512x128xf32> to vector<512x128xbf16>
    %c0_1 = arith.constant 0 : index
    %c0_2 = arith.constant 0 : index
    %2 = vector.load %arg2[%c0_1, %c0_2] : memref<128x128xbf16, #tpu.memory_space<vmem>>, vector<128x128xbf16>
    %cst = arith.constant dense<0.000000e+00> : vector<512x128xf32>
    %3 = tpu.matmul %1, %2, %cst {dimension_numbers = #tpu.dot_dimension_numbers<[1], [0], [0], [1], [0, 0, 1, 1], [], []>} : vector<512x128xbf16>, vector<128x128xbf16>, vector<512x128xf32> -> vector<512x128xf32>
    %cst_3 = arith.constant dense<0.000000e+00> : vector<128xf32>
    %4 = vector.multi_reduction <add>, %3, %cst_3 [0] : vector<512x128xf32> to vector<128xf32>
    %5 = vector.shape_cast %4 : vector<128xf32> to vector<1x128xf32>
    %cst_4 = arith.constant 5.120000e+02 : f32
    %6 = vector.broadcast %cst_4 : f32 to vector<1x128xf32>
    %7 = arith.divf %5, %6 : vector<1x128xf32>
    %8 = vector.broadcast %7 : vector<1x128xf32> to vector<512x128xf32>
    %9 = arith.subf %3, %8 : vector<512x128xf32>
    %10 = arith.mulf %9, %9 : vector<512x128xf32>
    %cst_5 = arith.constant dense<0.000000e+00> : vector<128xf32>
    %11 = vector.multi_reduction <add>, %10, %cst_5 [0] : vector<512x128xf32> to vector<128xf32>
    %12 = vector.shape_cast %11 : vector<128xf32> to vector<1x128xf32>
    %13 = tpu.concatenate %7, %12 in 0 : vector<1x128xf32>, vector<1x128xf32> -> vector<2x128xf32>
    %c0_6 = arith.constant 0 : index
    %c0_7 = arith.constant 0 : index
    %c0_8 = arith.constant 0 : index
    %14 = vector.load %arg4[%c0_6, %c0_7, %c0_8] : memref<1x2x128xf32, #tpu.memory_space<vmem>>, vector<1x2x128xf32>
    %15 = vector.shape_cast %14 : vector<1x2x128xf32> to vector<2x128xf32>
    %16 = vector.shape_cast %13 : vector<2x128xf32> to vector<1x2x128xf32>
    tpu.vector_store %arg4[%c0_6, %c0_7, %c0_8], %16 {strides = array<i32>} : memref<1x2x128xf32, #tpu.memory_space<vmem>>, vector<1x2x128xf32>,
    %17 = arith.truncf %3 : vector<512x128xf32> to vector<512x128xbf16>
    %c0_9 = arith.constant 0 : index
    %c0_10 = arith.constant 0 : index
    %18 = vector.load %arg3[%c0_9, %c0_10] : memref<512x128xbf16, #tpu.memory_space<vmem>>, vector<512x128xbf16>
    tpu.vector_store %arg3[%c0_9, %c0_10], %17 {strides = array<i32>} : memref<512x128xbf16, #tpu.memory_space<vmem>>, vector<512x128xbf16>,
    return
  }
  func.func @transform_0(%arg0: i32) -> (i32, i32) {
    %c0_i32 = arith.constant 0 : i32
    %c0_i32_0 = arith.constant 0 : i32
    return %arg0, %c0_i32 : i32, i32
  }
  func.func @transform_1(%arg0: i32) -> (i32, i32) {
    %c0_i32 = arith.constant 0 : i32
    %c0_i32_0 = arith.constant 0 : i32
    %c0_i32_1 = arith.constant 0 : i32
    return %c0_i32, %c0_i32_0 : i32, i32
  }
  func.func @transform_2(%arg0: i32) -> (i32, i32) {
    %c0_i32 = arith.constant 0 : i32
    %c0_i32_0 = arith.constant 0 : i32
    return %arg0, %c0_i32 : i32, i32
  }
  func.func @transform_3(%arg0: i32) -> (i32, i32, i32) {
    %c0_i32 = arith.constant 0 : i32
    %c0_i32_0 = arith.constant 0 : i32
    %c0_i32_1 = arith.constant 0 : i32
    return %arg0, %c0_i32, %c0_i32_0 : i32, i32, i32
  }
}

module attributes {stable_mosaic.version = 11 : i64} {
  func.func @_bn1_conv2_kernel(%arg0: i32, %arg1: memref<1x256x128xbf16, #tpu.memory_space<vmem>>, %arg2: memref<1x128xf32, #tpu.memory_space<vmem>>, %arg3: memref<1x128xf32, #tpu.memory_space<vmem>>, %arg4: memref<1152x128xbf16, #tpu.memory_space<vmem>>, %arg5: memref<1x256x128xbf16, #tpu.memory_space<vmem>>, %arg6: memref<1x2x128xf32, #tpu.memory_space<vmem>>, %arg7: memref<18x18x128xf32, #tpu.memory_space<vmem>>) attributes {dimension_semantics = [#tpu.dimension_semantics<parallel>], iteration_bounds = array<i64: 2>, scalar_prefetch = 0 : i64, scratch_operands = 1 : i64, tpu.core_type = #tpu.core_type<tc>, window_params = [{transform_indices = @transform_0, window_bounds = array<i64: 1, 256, 128>}, {pipeline_mode = #tpu.pipeline_mode<synchronous>, transform_indices = @transform_1, window_bounds = array<i64: 1, 128>}, {pipeline_mode = #tpu.pipeline_mode<synchronous>, transform_indices = @transform_2, window_bounds = array<i64: 1, 128>}, {pipeline_mode = #tpu.pipeline_mode<synchronous>, transform_indices = @transform_3, window_bounds = array<i64: 1152, 128>}, {transform_indices = @transform_4, window_bounds = array<i64: 1, 256, 128>}, {transform_indices = @transform_5, window_bounds = array<i64: 1, 2, 128>}]} {
    %c0 = arith.constant 0 : index
    %c0_0 = arith.constant 0 : index
    %c0_1 = arith.constant 0 : index
    %0 = vector.load %arg1[%c0, %c0_0, %c0_1] : memref<1x256x128xbf16, #tpu.memory_space<vmem>>, vector<1x256x128xbf16>
    %1 = vector.shape_cast %0 : vector<1x256x128xbf16> to vector<256x128xbf16>
    %2 = arith.extf %1 : vector<256x128xbf16> to vector<256x128xf32>
    %c0_2 = arith.constant 0 : index
    %c0_3 = arith.constant 0 : index
    %3 = vector.load %arg2[%c0_2, %c0_3] : memref<1x128xf32, #tpu.memory_space<vmem>>, vector<1x128xf32>
    %4 = vector.broadcast %3 : vector<1x128xf32> to vector<256x128xf32>
    %5 = arith.mulf %2, %4 : vector<256x128xf32>
    %c0_4 = arith.constant 0 : index
    %c0_5 = arith.constant 0 : index
    %6 = vector.load %arg3[%c0_4, %c0_5] : memref<1x128xf32, #tpu.memory_space<vmem>>, vector<1x128xf32>
    %7 = vector.broadcast %6 : vector<1x128xf32> to vector<256x128xf32>
    %8 = arith.addf %5, %7 : vector<256x128xf32>
    %cst = arith.constant 0.000000e+00 : f32
    %9 = vector.broadcast %cst : f32 to vector<256x128xf32>
    %10 = arith.maximumf %8, %9 : vector<256x128xf32>
    %cst_6 = arith.constant 0.000000e+00 : f32
    %11 = vector.broadcast %cst_6 : f32 to vector<18x18x128xf32>
    %c0_7 = arith.constant 0 : index
    %c0_8 = arith.constant 0 : index
    %c0_9 = arith.constant 0 : index
    %12 = vector.load %arg7[%c0_7, %c0_8, %c0_9] : memref<18x18x128xf32, #tpu.memory_space<vmem>>, vector<18x18x128xf32>
    tpu.vector_store %arg7[%c0_7, %c0_8, %c0_9], %11 {strides = array<i32>} : memref<18x18x128xf32, #tpu.memory_space<vmem>>, vector<18x18x128xf32>,
    %13 = vector.shape_cast %10 : vector<256x128xf32> to vector<16x16x128xf32>
    %c1 = arith.constant 1 : index
    %c1_10 = arith.constant 1 : index
    %c0_11 = arith.constant 0 : index
    %14 = vector.load %arg7[%c1, %c1_10, %c0_11] : memref<18x18x128xf32, #tpu.memory_space<vmem>>, vector<16x16x128xf32>
    tpu.vector_store %arg7[%c1, %c1_10, %c0_11], %13 {strides = array<i32>} : memref<18x18x128xf32, #tpu.memory_space<vmem>>, vector<16x16x128xf32>,
    %c0_12 = arith.constant 0 : index
    %c0_13 = arith.constant 0 : index
    %c0_14 = arith.constant 0 : index
    %15 = vector.load %arg7[%c0_12, %c0_13, %c0_14] : memref<18x18x128xf32, #tpu.memory_space<vmem>>, vector<16x16x128xf32>
    %16 = vector.shape_cast %15 : vector<16x16x128xf32> to vector<256x128xf32>
    %c0_15 = arith.constant 0 : index
    %c1_16 = arith.constant 1 : index
    %c0_17 = arith.constant 0 : index
    %17 = vector.load %arg7[%c0_15, %c1_16, %c0_17] : memref<18x18x128xf32, #tpu.memory_space<vmem>>, vector<16x16x128xf32>
    %18 = vector.shape_cast %17 : vector<16x16x128xf32> to vector<256x128xf32>
    %c0_18 = arith.constant 0 : index
    %c2 = arith.constant 2 : index
    %c0_19 = arith.constant 0 : index
    %19 = vector.load %arg7[%c0_18, %c2, %c0_19] : memref<18x18x128xf32, #tpu.memory_space<vmem>>, vector<16x16x128xf32>
    %20 = vector.shape_cast %19 : vector<16x16x128xf32> to vector<256x128xf32>
    %c1_20 = arith.constant 1 : index
    %c0_21 = arith.constant 0 : index
    %c0_22 = arith.constant 0 : index
    %21 = vector.load %arg7[%c1_20, %c0_21, %c0_22] : memref<18x18x128xf32, #tpu.memory_space<vmem>>, vector<16x16x128xf32>
    %22 = vector.shape_cast %21 : vector<16x16x128xf32> to vector<256x128xf32>
    %c1_23 = arith.constant 1 : index
    %c1_24 = arith.constant 1 : index
    %c0_25 = arith.constant 0 : index
    %23 = vector.load %arg7[%c1_23, %c1_24, %c0_25] : memref<18x18x128xf32, #tpu.memory_space<vmem>>, vector<16x16x128xf32>
    %24 = vector.shape_cast %23 : vector<16x16x128xf32> to vector<256x128xf32>
    %c1_26 = arith.constant 1 : index
    %c2_27 = arith.constant 2 : index
    %c0_28 = arith.constant 0 : index
    %25 = vector.load %arg7[%c1_26, %c2_27, %c0_28] : memref<18x18x128xf32, #tpu.memory_space<vmem>>, vector<16x16x128xf32>
    %26 = vector.shape_cast %25 : vector<16x16x128xf32> to vector<256x128xf32>
    %c2_29 = arith.constant 2 : index
    %c0_30 = arith.constant 0 : index
    %c0_31 = arith.constant 0 : index
    %27 = vector.load %arg7[%c2_29, %c0_30, %c0_31] : memref<18x18x128xf32, #tpu.memory_space<vmem>>, vector<16x16x128xf32>
    %28 = vector.shape_cast %27 : vector<16x16x128xf32> to vector<256x128xf32>
    %c2_32 = arith.constant 2 : index
    %c1_33 = arith.constant 1 : index
    %c0_34 = arith.constant 0 : index
    %29 = vector.load %arg7[%c2_32, %c1_33, %c0_34] : memref<18x18x128xf32, #tpu.memory_space<vmem>>, vector<16x16x128xf32>
    %30 = vector.shape_cast %29 : vector<16x16x128xf32> to vector<256x128xf32>
    %c2_35 = arith.constant 2 : index
    %c2_36 = arith.constant 2 : index
    %c0_37 = arith.constant 0 : index
    %31 = vector.load %arg7[%c2_35, %c2_36, %c0_37] : memref<18x18x128xf32, #tpu.memory_space<vmem>>, vector<16x16x128xf32>
    %32 = vector.shape_cast %31 : vector<16x16x128xf32> to vector<256x128xf32>
    %33 = tpu.concatenate %16, %18, %20, %22, %24, %26, %28, %30, %32 in 1 : vector<256x128xf32>, vector<256x128xf32>, vector<256x128xf32>, vector<256x128xf32>, vector<256x128xf32>, vector<256x128xf32>, vector<256x128xf32>, vector<256x128xf32>, vector<256x128xf32> -> vector<256x1152xf32>
    %34 = arith.truncf %33 : vector<256x1152xf32> to vector<256x1152xbf16>
    %c0_38 = arith.constant 0 : index
    %c0_39 = arith.constant 0 : index
    %35 = vector.load %arg4[%c0_38, %c0_39] : memref<1152x128xbf16, #tpu.memory_space<vmem>>, vector<1152x128xbf16>
    %cst_40 = arith.constant dense<0.000000e+00> : vector<256x128xf32>
    %36 = tpu.matmul %34, %35, %cst_40 {dimension_numbers = #tpu.dot_dimension_numbers<[1], [0], [0], [1], [0, 0, 1, 1], [], []>} : vector<256x1152xbf16>, vector<1152x128xbf16>, vector<256x128xf32> -> vector<256x128xf32>
    %cst_41 = arith.constant dense<0.000000e+00> : vector<128xf32>
    %37 = vector.multi_reduction <add>, %36, %cst_41 [0] : vector<256x128xf32> to vector<128xf32>
    %38 = vector.shape_cast %37 : vector<128xf32> to vector<1x128xf32>
    %cst_42 = arith.constant 2.560000e+02 : f32
    %39 = vector.broadcast %cst_42 : f32 to vector<1x128xf32>
    %40 = arith.divf %38, %39 : vector<1x128xf32>
    %41 = vector.broadcast %40 : vector<1x128xf32> to vector<256x128xf32>
    %42 = arith.subf %36, %41 : vector<256x128xf32>
    %43 = arith.mulf %42, %42 : vector<256x128xf32>
    %cst_43 = arith.constant dense<0.000000e+00> : vector<128xf32>
    %44 = vector.multi_reduction <add>, %43, %cst_43 [0] : vector<256x128xf32> to vector<128xf32>
    %45 = vector.shape_cast %44 : vector<128xf32> to vector<1x128xf32>
    %46 = tpu.concatenate %40, %45 in 0 : vector<1x128xf32>, vector<1x128xf32> -> vector<2x128xf32>
    %c0_44 = arith.constant 0 : index
    %c0_45 = arith.constant 0 : index
    %c0_46 = arith.constant 0 : index
    %47 = vector.load %arg6[%c0_44, %c0_45, %c0_46] : memref<1x2x128xf32, #tpu.memory_space<vmem>>, vector<1x2x128xf32>
    %48 = vector.shape_cast %47 : vector<1x2x128xf32> to vector<2x128xf32>
    %49 = vector.shape_cast %46 : vector<2x128xf32> to vector<1x2x128xf32>
    tpu.vector_store %arg6[%c0_44, %c0_45, %c0_46], %49 {strides = array<i32>} : memref<1x2x128xf32, #tpu.memory_space<vmem>>, vector<1x2x128xf32>,
    %50 = arith.truncf %36 : vector<256x128xf32> to vector<256x128xbf16>
    %c0_47 = arith.constant 0 : index
    %c0_48 = arith.constant 0 : index
    %c0_49 = arith.constant 0 : index
    %51 = vector.load %arg5[%c0_47, %c0_48, %c0_49] : memref<1x256x128xbf16, #tpu.memory_space<vmem>>, vector<1x256x128xbf16>
    %52 = vector.shape_cast %51 : vector<1x256x128xbf16> to vector<256x128xbf16>
    %53 = vector.shape_cast %50 : vector<256x128xbf16> to vector<1x256x128xbf16>
    tpu.vector_store %arg5[%c0_47, %c0_48, %c0_49], %53 {strides = array<i32>} : memref<1x256x128xbf16, #tpu.memory_space<vmem>>, vector<1x256x128xbf16>,
    return
  }
  func.func @transform_0(%arg0: i32) -> (i32, i32, i32) {
    %c0_i32 = arith.constant 0 : i32
    %c0_i32_0 = arith.constant 0 : i32
    %c0_i32_1 = arith.constant 0 : i32
    return %arg0, %c0_i32, %c0_i32_0 : i32, i32, i32
  }
  func.func @transform_1(%arg0: i32) -> (i32, i32) {
    %c0_i32 = arith.constant 0 : i32
    %c0_i32_0 = arith.constant 0 : i32
    %c0_i32_1 = arith.constant 0 : i32
    return %c0_i32, %c0_i32_0 : i32, i32
  }
  func.func @transform_2(%arg0: i32) -> (i32, i32) {
    %c0_i32 = arith.constant 0 : i32
    %c0_i32_0 = arith.constant 0 : i32
    %c0_i32_1 = arith.constant 0 : i32
    return %c0_i32, %c0_i32_0 : i32, i32
  }
  func.func @transform_3(%arg0: i32) -> (i32, i32) {
    %c0_i32 = arith.constant 0 : i32
    %c0_i32_0 = arith.constant 0 : i32
    %c0_i32_1 = arith.constant 0 : i32
    return %c0_i32, %c0_i32_0 : i32, i32
  }
  func.func @transform_4(%arg0: i32) -> (i32, i32, i32) {
    %c0_i32 = arith.constant 0 : i32
    %c0_i32_0 = arith.constant 0 : i32
    %c0_i32_1 = arith.constant 0 : i32
    return %arg0, %c0_i32, %c0_i32_0 : i32, i32, i32
  }
  func.func @transform_5(%arg0: i32) -> (i32, i32, i32) {
    %c0_i32 = arith.constant 0 : i32
    %c0_i32_0 = arith.constant 0 : i32
    %c0_i32_1 = arith.constant 0 : i32
    return %arg0, %c0_i32, %c0_i32_0 : i32, i32, i32
  }
}

module attributes {stable_mosaic.version = 11 : i64} {
  func.func @_bn_conv1x1_kernel(%arg0: i32, %arg1: memref<512x128xbf16, #tpu.memory_space<vmem>>, %arg2: memref<1x128xf32, #tpu.memory_space<vmem>>, %arg3: memref<1x128xf32, #tpu.memory_space<vmem>>, %arg4: memref<128x128xbf16, #tpu.memory_space<vmem>>, %arg5: memref<512x128xbf16, #tpu.memory_space<vmem>>, %arg6: memref<1x2x128xf32, #tpu.memory_space<vmem>>) attributes {dimension_semantics = [#tpu.dimension_semantics<parallel>], iteration_bounds = array<i64: 1>, scalar_prefetch = 0 : i64, scratch_operands = 0 : i64, tpu.core_type = #tpu.core_type<tc>, window_params = [{transform_indices = @transform_0, window_bounds = array<i64: 512, 128>}, {pipeline_mode = #tpu.pipeline_mode<synchronous>, transform_indices = @transform_1, window_bounds = array<i64: 1, 128>}, {pipeline_mode = #tpu.pipeline_mode<synchronous>, transform_indices = @transform_2, window_bounds = array<i64: 1, 128>}, {pipeline_mode = #tpu.pipeline_mode<synchronous>, transform_indices = @transform_3, window_bounds = array<i64: 128, 128>}, {transform_indices = @transform_4, window_bounds = array<i64: 512, 128>}, {transform_indices = @transform_5, window_bounds = array<i64: 1, 2, 128>}]} {
    %c0 = arith.constant 0 : index
    %c0_0 = arith.constant 0 : index
    %0 = vector.load %arg1[%c0, %c0_0] : memref<512x128xbf16, #tpu.memory_space<vmem>>, vector<512x128xbf16>
    %1 = arith.extf %0 : vector<512x128xbf16> to vector<512x128xf32>
    %c0_1 = arith.constant 0 : index
    %c0_2 = arith.constant 0 : index
    %2 = vector.load %arg2[%c0_1, %c0_2] : memref<1x128xf32, #tpu.memory_space<vmem>>, vector<1x128xf32>
    %3 = vector.broadcast %2 : vector<1x128xf32> to vector<512x128xf32>
    %4 = arith.mulf %1, %3 : vector<512x128xf32>
    %c0_3 = arith.constant 0 : index
    %c0_4 = arith.constant 0 : index
    %5 = vector.load %arg3[%c0_3, %c0_4] : memref<1x128xf32, #tpu.memory_space<vmem>>, vector<1x128xf32>
    %6 = vector.broadcast %5 : vector<1x128xf32> to vector<512x128xf32>
    %7 = arith.addf %4, %6 : vector<512x128xf32>
    %cst = arith.constant 0.000000e+00 : f32
    %8 = vector.broadcast %cst : f32 to vector<512x128xf32>
    %9 = arith.maximumf %7, %8 : vector<512x128xf32>
    %10 = arith.truncf %9 : vector<512x128xf32> to vector<512x128xbf16>
    %c0_5 = arith.constant 0 : index
    %c0_6 = arith.constant 0 : index
    %11 = vector.load %arg4[%c0_5, %c0_6] : memref<128x128xbf16, #tpu.memory_space<vmem>>, vector<128x128xbf16>
    %cst_7 = arith.constant dense<0.000000e+00> : vector<512x128xf32>
    %12 = tpu.matmul %10, %11, %cst_7 {dimension_numbers = #tpu.dot_dimension_numbers<[1], [0], [0], [1], [0, 0, 1, 1], [], []>} : vector<512x128xbf16>, vector<128x128xbf16>, vector<512x128xf32> -> vector<512x128xf32>
    %cst_8 = arith.constant dense<0.000000e+00> : vector<128xf32>
    %13 = vector.multi_reduction <add>, %12, %cst_8 [0] : vector<512x128xf32> to vector<128xf32>
    %14 = vector.shape_cast %13 : vector<128xf32> to vector<1x128xf32>
    %cst_9 = arith.constant 5.120000e+02 : f32
    %15 = vector.broadcast %cst_9 : f32 to vector<1x128xf32>
    %16 = arith.divf %14, %15 : vector<1x128xf32>
    %17 = vector.broadcast %16 : vector<1x128xf32> to vector<512x128xf32>
    %18 = arith.subf %12, %17 : vector<512x128xf32>
    %19 = arith.mulf %18, %18 : vector<512x128xf32>
    %cst_10 = arith.constant dense<0.000000e+00> : vector<128xf32>
    %20 = vector.multi_reduction <add>, %19, %cst_10 [0] : vector<512x128xf32> to vector<128xf32>
    %21 = vector.shape_cast %20 : vector<128xf32> to vector<1x128xf32>
    %22 = tpu.concatenate %16, %21 in 0 : vector<1x128xf32>, vector<1x128xf32> -> vector<2x128xf32>
    %c0_11 = arith.constant 0 : index
    %c0_12 = arith.constant 0 : index
    %c0_13 = arith.constant 0 : index
    %23 = vector.load %arg6[%c0_11, %c0_12, %c0_13] : memref<1x2x128xf32, #tpu.memory_space<vmem>>, vector<1x2x128xf32>
    %24 = vector.shape_cast %23 : vector<1x2x128xf32> to vector<2x128xf32>
    %25 = vector.shape_cast %22 : vector<2x128xf32> to vector<1x2x128xf32>
    tpu.vector_store %arg6[%c0_11, %c0_12, %c0_13], %25 {strides = array<i32>} : memref<1x2x128xf32, #tpu.memory_space<vmem>>, vector<1x2x128xf32>,
    %26 = arith.truncf %12 : vector<512x128xf32> to vector<512x128xbf16>
    %c0_14 = arith.constant 0 : index
    %c0_15 = arith.constant 0 : index
    %27 = vector.load %arg5[%c0_14, %c0_15] : memref<512x128xbf16, #tpu.memory_space<vmem>>, vector<512x128xbf16>
    tpu.vector_store %arg5[%c0_14, %c0_15], %26 {strides = array<i32>} : memref<512x128xbf16, #tpu.memory_space<vmem>>, vector<512x128xbf16>,
    return
  }
  func.func @transform_0(%arg0: i32) -> (i32, i32) {
    %c0_i32 = arith.constant 0 : i32
    %c0_i32_0 = arith.constant 0 : i32
    return %arg0, %c0_i32 : i32, i32
  }
  func.func @transform_1(%arg0: i32) -> (i32, i32) {
    %c0_i32 = arith.constant 0 : i32
    %c0_i32_0 = arith.constant 0 : i32
    %c0_i32_1 = arith.constant 0 : i32
    return %c0_i32, %c0_i32_0 : i32, i32
  }
  func.func @transform_2(%arg0: i32) -> (i32, i32) {
    %c0_i32 = arith.constant 0 : i32
    %c0_i32_0 = arith.constant 0 : i32
    %c0_i32_1 = arith.constant 0 : i32
    return %c0_i32, %c0_i32_0 : i32, i32
  }
  func.func @transform_3(%arg0: i32) -> (i32, i32) {
    %c0_i32 = arith.constant 0 : i32
    %c0_i32_0 = arith.constant 0 : i32
    %c0_i32_1 = arith.constant 0 : i32
    return %c0_i32, %c0_i32_0 : i32, i32
  }
  func.func @transform_4(%arg0: i32) -> (i32, i32) {
    %c0_i32 = arith.constant 0 : i32
    %c0_i32_0 = arith.constant 0 : i32
    return %arg0, %c0_i32 : i32, i32
  }
  func.func @transform_5(%arg0: i32) -> (i32, i32, i32) {
    %c0_i32 = arith.constant 0 : i32
    %c0_i32_0 = arith.constant 0 : i32
    %c0_i32_1 = arith.constant 0 : i32
    return %arg0, %c0_i32, %c0_i32_0 : i32, i32, i32
  }
}

module attributes {stable_mosaic.version = 11 : i64} {
  func.func @_bn3_residual_kernel(%arg0: i32, %arg1: memref<512x128xbf16, #tpu.memory_space<vmem>>, %arg2: memref<1x128xf32, #tpu.memory_space<vmem>>, %arg3: memref<1x128xf32, #tpu.memory_space<vmem>>, %arg4: memref<512x128xf32, #tpu.memory_space<vmem>>, %arg5: memref<512x128xf32, #tpu.memory_space<vmem>>) attributes {dimension_semantics = [#tpu.dimension_semantics<parallel>], iteration_bounds = array<i64: 1>, scalar_prefetch = 0 : i64, scratch_operands = 0 : i64, tpu.core_type = #tpu.core_type<tc>, window_params = [{transform_indices = @transform_0, window_bounds = array<i64: 512, 128>}, {pipeline_mode = #tpu.pipeline_mode<synchronous>, transform_indices = @transform_1, window_bounds = array<i64: 1, 128>}, {pipeline_mode = #tpu.pipeline_mode<synchronous>, transform_indices = @transform_2, window_bounds = array<i64: 1, 128>}, {transform_indices = @transform_3, window_bounds = array<i64: 512, 128>}, {transform_indices = @transform_4, window_bounds = array<i64: 512, 128>}]} {
    %c0 = arith.constant 0 : index
    %c0_0 = arith.constant 0 : index
    %0 = vector.load %arg1[%c0, %c0_0] : memref<512x128xbf16, #tpu.memory_space<vmem>>, vector<512x128xbf16>
    %1 = arith.extf %0 : vector<512x128xbf16> to vector<512x128xf32>
    %c0_1 = arith.constant 0 : index
    %c0_2 = arith.constant 0 : index
    %2 = vector.load %arg2[%c0_1, %c0_2] : memref<1x128xf32, #tpu.memory_space<vmem>>, vector<1x128xf32>
    %3 = vector.broadcast %2 : vector<1x128xf32> to vector<512x128xf32>
    %4 = arith.mulf %1, %3 : vector<512x128xf32>
    %c0_3 = arith.constant 0 : index
    %c0_4 = arith.constant 0 : index
    %5 = vector.load %arg3[%c0_3, %c0_4] : memref<1x128xf32, #tpu.memory_space<vmem>>, vector<1x128xf32>
    %6 = vector.broadcast %5 : vector<1x128xf32> to vector<512x128xf32>
    %7 = arith.addf %4, %6 : vector<512x128xf32>
    %c0_5 = arith.constant 0 : index
    %c0_6 = arith.constant 0 : index
    %8 = vector.load %arg4[%c0_5, %c0_6] : memref<512x128xf32, #tpu.memory_space<vmem>>, vector<512x128xf32>
    %9 = arith.addf %7, %8 : vector<512x128xf32>
    %cst = arith.constant 0.000000e+00 : f32
    %10 = vector.broadcast %cst : f32 to vector<512x128xf32>
    %11 = arith.maximumf %9, %10 : vector<512x128xf32>
    %c0_7 = arith.constant 0 : index
    %c0_8 = arith.constant 0 : index
    %12 = vector.load %arg5[%c0_7, %c0_8] : memref<512x128xf32, #tpu.memory_space<vmem>>, vector<512x128xf32>
    tpu.vector_store %arg5[%c0_7, %c0_8], %11 {strides = array<i32>} : memref<512x128xf32, #tpu.memory_space<vmem>>, vector<512x128xf32>,
    return
  }
  func.func @transform_0(%arg0: i32) -> (i32, i32) {
    %c0_i32 = arith.constant 0 : i32
    %c0_i32_0 = arith.constant 0 : i32
    return %arg0, %c0_i32 : i32, i32
  }
  func.func @transform_1(%arg0: i32) -> (i32, i32) {
    %c0_i32 = arith.constant 0 : i32
    %c0_i32_0 = arith.constant 0 : i32
    %c0_i32_1 = arith.constant 0 : i32
    return %c0_i32, %c0_i32_0 : i32, i32
  }
  func.func @transform_2(%arg0: i32) -> (i32, i32) {
    %c0_i32 = arith.constant 0 : i32
    %c0_i32_0 = arith.constant 0 : i32
    %c0_i32_1 = arith.constant 0 : i32
    return %c0_i32, %c0_i32_0 : i32, i32
  }
  func.func @transform_3(%arg0: i32) -> (i32, i32) {
    %c0_i32 = arith.constant 0 : i32
    %c0_i32_0 = arith.constant 0 : i32
    return %arg0, %c0_i32 : i32, i32
  }
  func.func @transform_4(%arg0: i32) -> (i32, i32) {
    %c0_i32 = arith.constant 0 : i32
    %c0_i32_0 = arith.constant 0 : i32
    return %arg0, %c0_i32 : i32, i32
  }
}

</mosaic_0001>

<llo_original>
// kernel: bottleneck_forward.4
$region0: #{bottleneck_forward.4}
  #allocation0 [shape = 'u32[]', space=smem, size = 0x4, offset = 0x4, fixed_abs, tag = 'smem constant byte address 0x4 - core index']
  #allocation1 [shape = 'u32[144,128]{1,0:T(1,128)}', space=vmem, size = 0x12000, scoped, tag = 'internal scratch']
  %s0 = inlined_call_operand.vmem [shape: f32[512,128], index: 0, kind: input, shape index: {}]
  %s1 = inlined_call_operand.vmem [shape: bf16[128,128], index: 1, kind: input, shape index: {}]
  %s2 = inlined_call_operand.vmem [shape: bf16[512,128], index: 2, kind: output, shape index: {0}]
  %s3 = inlined_call_operand.vmem [shape: f32[1,2,128], index: 3, kind: output, shape index: {1}]
  %4 = xla_tuple %s2, %s3
  %s5 = sld [smem:[#allocation0]]
  $region26: #{bottleneck_forward.4} parent=0
    _
  %s7 = ssub.s32 1, %s5
  %s8 = scalar_select 0, %s7, %s5
  // Predicated region
  $region2: #{bottleneck_forward.4} parent=0 // pred_check
    _
  $region3: #{bottleneck_forward.4} parent=0 // pred_check_branch
    %10 = sbr.rel (0) target = $region5
  $region4: #{bottleneck_forward.4} parent=0 // pred_region
    _
  $region5: #{bottleneck_forward.4} parent=0 // pred_fallthru
    _
  // Predicated region
  $region6: #{bottleneck_forward.4} parent=0 // pred_check
    _
  $region7: #{bottleneck_forward.4} parent=0 // pred_check_branch
    %12 = sbr.rel (0) target = $region9
  $region8: #{bottleneck_forward.4} parent=0 // pred_region
    _
  $region9: #{bottleneck_forward.4} parent=0 // pred_fallthru
    _
  %v14 = vld [vmem:[%s0] sm:$0xff]
  %v15 = vld [vmem:[%s0 + $0x8] sm:$0xff]
  %v16 = vld [vmem:[%s0 + $0x10] sm:$0xff]
  %v17 = vld [vmem:[%s0 + $0x18] sm:$0xff]
  %v18 = vld [vmem:[%s0 + $0x20] sm:$0xff]
  %v19 = vld [vmem:[%s0 + $0x28] sm:$0xff]
  %v20 = vld [vmem:[%s0 + $0x30] sm:$0xff]
  %v21 = vld [vmem:[%s0 + $0x38] sm:$0xff]
  %v22 = vld [vmem:[%s0 + $0x40] sm:$0xff]
  %v23 = vld [vmem:[%s0 + $0x48] sm:$0xff]
  %v24 = vld [vmem:[%s0 + $0x50] sm:$0xff]
  %v25 = vld [vmem:[%s0 + $0x58] sm:$0xff]
  %v26 = vld [vmem:[%s0 + $0x60] sm:$0xff]
  %v27 = vld [vmem:[%s0 + $0x68] sm:$0xff]
  %v28 = vld [vmem:[%s0 + $0x70] sm:$0xff]
  %v29 = vld [vmem:[%s0 + $0x78] sm:$0xff]
  %v30 = vld [vmem:[%s0 + $0x80] sm:$0xff]
  %v31 = vld [vmem:[%s0 + $0x88] sm:$0xff]
  %v32 = vld [vmem:[%s0 + $0x90] sm:$0xff]
  %v33 = vld [vmem:[%s0 + $0x98] sm:$0xff]
  %v34 = vld [vmem:[%s0 + $0xa0] sm:$0xff]
  %v35 = vld [vmem:[%s0 + $0xa8] sm:$0xff]
  %v36 = vld [vmem:[%s0 + $0xb0] sm:$0xff]
  %v37 = vld [vmem:[%s0 + $0xb8] sm:$0xff]
  %v38 = vld [vmem:[%s0 + $0xc0] sm:$0xff]
  %v39 = vld [vmem:[%s0 + $0xc8] sm:$0xff]
  %v40 = vld [vmem:[%s0 + $0xd0] sm:$0xff]
  %v41 = vld [vmem:[%s0 + $0xd8] sm:$0xff]
  %v42 = vld [vmem:[%s0 + $0xe0] sm:$0xff]
  %v43 = vld [vmem:[%s0 + $0xe8] sm:$0xff]
  %v44 = vld [vmem:[%s0 + $0xf0] sm:$0xff]
  %v45 = vld [vmem:[%s0 + $0xf8] sm:$0xff]
  %v46 = vld [vmem:[%s0 + $0x100] sm:$0xff]
  %v47 = vld [vmem:[%s0 + $0x108] sm:$0xff]
  %v48 = vld [vmem:[%s0 + $0x110] sm:$0xff]
  %v49 = vld [vmem:[%s0 + $0x118] sm:$0xff]
  %v50 = vld [vmem:[%s0 + $0x120] sm:$0xff]
  %v51 = vld [vmem:[%s0 + $0x128] sm:$0xff]
  %v52 = vld [vmem:[%s0 + $0x130] sm:$0xff]
  %v53 = vld [vmem:[%s0 + $0x138] sm:$0xff]
  %v54 = vld [vmem:[%s0 + $0x140] sm:$0xff]
  %v55 = vld [vmem:[%s0 + $0x148] sm:$0xff]
  %v56 = vld [vmem:[%s0 + $0x150] sm:$0xff]
  %v57 = vld [vmem:[%s0 + $0x158] sm:$0xff]
  %v58 = vld [vmem:[%s0 + $0x160] sm:$0xff]
  %v59 = vld [vmem:[%s0 + $0x168] sm:$0xff]
  %v60 = vld [vmem:[%s0 + $0x170] sm:$0xff]
  %v61 = vld [vmem:[%s0 + $0x178] sm:$0xff]
  %v62 = vld [vmem:[%s0 + $0x180] sm:$0xff]
  %v63 = vld [vmem:[%s0 + $0x188] sm:$0xff]
  %v64 = vld [vmem:[%s0 + $0x190] sm:$0xff]
  %v65 = vld [vmem:[%s0 + $0x198] sm:$0xff]
  %v66 = vld [vmem:[%s0 + $0x1a0] sm:$0xff]
  %v67 = vld [vmem:[%s0 + $0x1a8] sm:$0xff]
  %v68 = vld [vmem:[%s0 + $0x1b0] sm:$0xff]
  %v69 = vld [vmem:[%s0 + $0x1b8] sm:$0xff]
  %v70 = vld [vmem:[%s0 + $0x1c0] sm:$0xff]
  %v71 = vld [vmem:[%s0 + $0x1c8] sm:$0xff]
  %v72 = vld [vmem:[%s0 + $0x1d0] sm:$0xff]
  %v73 = vld [vmem:[%s0 + $0x1d8] sm:$0xff]
  %v74 = vld [vmem:[%s0 + $0x1e0] sm:$0xff]
  %v75 = vld [vmem:[%s0 + $0x1e8] sm:$0xff]
  %v76 = vld [vmem:[%s0 + $0x1f0] sm:$0xff]
  %v77 = vld [vmem:[%s0 + $0x1f8] sm:$0xff]
  %v78 = vpack.c.bf16 %v15, %v14
  %v79 = vpack.c.bf16 %v17, %v16
  %v80 = vpack.c.bf16 %v19, %v18
  %v81 = vpack.c.bf16 %v21, %v20
  %v82 = vpack.c.bf16 %v23, %v22
  %v83 = vpack.c.bf16 %v25, %v24
  %v84 = vpack.c.bf16 %v27, %v26
  %v85 = vpack.c.bf16 %v29, %v28
  %v86 = vpack.c.bf16 %v31, %v30
  %v87 = vpack.c.bf16 %v33, %v32
  %v88 = vpack.c.bf16 %v35, %v34
  %v89 = vpack.c.bf16 %v37, %v36
  %v90 = vpack.c.bf16 %v39, %v38
  %v91 = vpack.c.bf16 %v41, %v40
  %v92 = vpack.c.bf16 %v43, %v42
  %v93 = vpack.c.bf16 %v45, %v44
  %v94 = vpack.c.bf16 %v47, %v46
  %v95 = vpack.c.bf16 %v49, %v48
  %v96 = vpack.c.bf16 %v51, %v50
  %v97 = vpack.c.bf16 %v53, %v52
  %v98 = vpack.c.bf16 %v55, %v54
  %v99 = vpack.c.bf16 %v57, %v56
  %v100 = vpack.c.bf16 %v59, %v58
  %v101 = vpack.c.bf16 %v61, %v60
  %v102 = vpack.c.bf16 %v63, %v62
  %v103 = vpack.c.bf16 %v65, %v64
  %v104 = vpack.c.bf16 %v67, %v66
  %v105 = vpack.c.bf16 %v69, %v68
  %v106 = vpack.c.bf16 %v71, %v70
  %v107 = vpack.c.bf16 %v73, %v72
  %v108 = vpack.c.bf16 %v75, %v74
  %v109 = vpack.c.bf16 %v77, %v76
  %v110 = vld [vmem:[%s1] sm:$0xf]
  %v111 = vld [vmem:[%s1 + $0x4] sm:$0xf]
  %v112 = vld [vmem:[%s1 + $0x8] sm:$0xf]
  %v113 = vld [vmem:[%s1 + $0xc] sm:$0xf]
  %v114 = vld [vmem:[%s1 + $0x10] sm:$0xf]
  %v115 = vld [vmem:[%s1 + $0x14] sm:$0xf]
  %v116 = vld [vmem:[%s1 + $0x18] sm:$0xf]
  %v117 = vld [vmem:[%s1 + $0x1c] sm:$0xf]
  %v118 = vld [vmem:[%s1 + $0x20] sm:$0xf]
  %v119 = vld [vmem:[%s1 + $0x24] sm:$0xf]
  %v120 = vld [vmem:[%s1 + $0x28] sm:$0xf]
  %v121 = vld [vmem:[%s1 + $0x2c] sm:$0xf]
  %v122 = vld [vmem:[%s1 + $0x30] sm:$0xf]
  %v123 = vld [vmem:[%s1 + $0x34] sm:$0xf]
  %v124 = vld [vmem:[%s1 + $0x38] sm:$0xf]
  %v125 = vld [vmem:[%s1 + $0x3c] sm:$0xf]
  %v142 = vunpack.c.l.b16 %v110
  %v143 = vunpack.c.l.b16 %v111
  %v144 = vunpack.c.l.b16 %v112
  %v145 = vunpack.c.l.b16 %v113
  %v146 = vunpack.c.l.b16 %v114
  %v147 = vunpack.c.l.b16 %v115
  %v148 = vunpack.c.l.b16 %v116
  %v149 = vunpack.c.l.b16 %v117
  %v150 = vunpack.c.l.b16 %v118
  %v151 = vunpack.c.l.b16 %v119
  %v152 = vunpack.c.l.b16 %v120
  %v153 = vunpack.c.l.b16 %v121
  %v154 = vunpack.c.l.b16 %v122
  %v155 = vunpack.c.l.b16 %v123
  %v156 = vunpack.c.l.b16 %v124
  %v157 = vunpack.c.l.b16 %v125
  %v158 = vpack.c.b16 %v143, %v142
  %v159 = vpack.c.b16 %v145, %v144
  %v160 = vpack.c.b16 %v147, %v146
  %v161 = vpack.c.b16 %v149, %v148
  %v162 = vpack.c.b16 %v151, %v150
  %v163 = vpack.c.b16 %v153, %v152
  %v164 = vpack.c.b16 %v155, %v154
  %v165 = vpack.c.b16 %v157, %v156
  %174 = vmatprep.subr.bf16.mxu0 0
  %175 = vmatpush1.bf16.msra.mxu0 %v158
  %176 = vmatprep.subr.bf16.mxu0 0
  %177 = vmatpush1.bf16.msra.mxu0 %v159
  %178 = vmatprep.subr.bf16.mxu0 0
  %179 = vmatpush1.bf16.msra.mxu0 %v160
  %180 = vmatprep.subr.bf16.mxu0 0
  %181 = vmatpush1.bf16.msra.mxu0 %v161
  %182 = vmatprep.subr.bf16.mxu0 0
  %183 = vmatpush1.bf16.msra.mxu0 %v162
  %184 = vmatprep.subr.bf16.mxu0 0
  %185 = vmatpush1.bf16.msra.mxu0 %v163
  %186 = vmatprep.subr.bf16.mxu0 0
  %187 = vmatpush1.bf16.msra.mxu0 %v164
  %188 = vmatprep.subr.bf16.mxu0 0
  %189 = vmatpush1.bf16.msra.mxu0 %v165
  %190 = vmatprep.subr.bf16.mxu0 0
  %191 = vmatpush1.bf16.msra.mxu0 0
  %192 = vmatprep.subr.bf16.mxu0 0
  %193 = vmatpush1.bf16.msra.mxu0 0
  %194 = vmatprep.subr.bf16.mxu0 0
  %195 = vmatpush1.bf16.msra.mxu0 0
  %196 = vmatprep.subr.bf16.mxu0 0
  %197 = vmatpush1.bf16.msra.mxu0 0
  %198 = vmatprep.subr.bf16.mxu0 0
  %199 = vmatpush1.bf16.msra.mxu0 0
  %200 = vmatprep.subr.bf16.mxu0 0
  %201 = vmatpush1.bf16.msra.mxu0 0
  %202 = vmatprep.subr.bf16.mxu0 0
  %203 = vmatpush1.bf16.msra.mxu0 0
  %204 = vmatprep.subr.bf16.mxu0 0
  %205 = vmatpush1.bf16.msra.mxu0 0
  %206 = vmatprep.mubr.bf16.mxu0 0
  %207 = vmatmul.mubr.bf16.gmra.mrb[0].mxu0 %v78
  %v208 = vpop.f32.mrb[0].mxu0
  %v209 = vadd.f32 0.0, %v208
  %v210 = vpop.f32.mrb[0].mxu0
  %v211 = vpop.f32.mrb[0].mxu0
  %v212 = vadd.f32 0.0, %v211
  %v213 = vpop.f32.mrb[0].mxu0
  %214 = vmatprep.mubr.bf16.mxu0 0
  %215 = vmatmul.mubr.bf16.gmra.mrb[0].mxu0 %v79
  %v216 = vpop.f32.mrb[0].mxu0
  %v217 = vadd.f32 0.0, %v216
  %v218 = vpop.f32.mrb[0].mxu0
  %v219 = vpop.f32.mrb[0].mxu0
  %v220 = vadd.f32 0.0, %v219
  %v221 = vpop.f32.mrb[0].mxu0
  %222 = vmatprep.mubr.bf16.mxu0 0
  %223 = vmatmul.mubr.bf16.gmra.mrb[0].mxu0 %v80
  %v224 = vpop.f32.mrb[0].mxu0
  %v225 = vadd.f32 0.0, %v224
  %v226 = vpop.f32.mrb[0].mxu0
  %v227 = vpop.f32.mrb[0].mxu0
  %v228 = vadd.f32 0.0, %v227
  %v229 = vpop.f32.mrb[0].mxu0
  %230 = vmatprep.mubr.bf16.mxu0 0
  %231 = vmatmul.mubr.bf16.gmra.mrb[0].mxu0 %v81
  %v232 = vpop.f32.mrb[0].mxu0
  %v233 = vadd.f32 0.0, %v232
  %v234 = vpop.f32.mrb[0].mxu0
  %v235 = vpop.f32.mrb[0].mxu0
  %v236 = vadd.f32 0.0, %v235
  %v237 = vpop.f32.mrb[0].mxu0
  %238 = vmatprep.mubr.bf16.mxu0 0
  %239 = vmatmul.mubr.bf16.gmra.mrb[0].mxu0 %v82
  %v240 = vpop.f32.mrb[0].mxu0
  %v241 = vadd.f32 0.0, %v240
  %v242 = vpop.f32.mrb[0].mxu0
  %v243 = vpop.f32.mrb[0].mxu0
  %v244 = vadd.f32 0.0, %v243
  %v245 = vpop.f32.mrb[0].mxu0
  %246 = vmatprep.mubr.bf16.mxu0 0
  %247 = vmatmul.mubr.bf16.gmra.mrb[0].mxu0 %v83
  %v248 = vpop.f32.mrb[0].mxu0
  %v249 = vadd.f32 0.0, %v248
  %v250 = vpop.f32.mrb[0].mxu0
  %v251 = vpop.f32.mrb[0].mxu0
  %v252 = vadd.f32 0.0, %v251
  %v253 = vpop.f32.mrb[0].mxu0
  %254 = vmatprep.mubr.bf16.mxu0 0
  %255 = vmatmul.mubr.bf16.gmra.mrb[0].mxu0 %v84
  %v256 = vpop.f32.mrb[0].mxu0
  %v257 = vadd.f32 0.0, %v256
  %v258 = vpop.f32.mrb[0].mxu0
  %v259 = vpop.f32.mrb[0].mxu0
  %v260 = vadd.f32 0.0, %v259
  %v261 = vpop.f32.mrb[0].mxu0
  %262 = vmatprep.mubr.bf16.mxu0 0
  %263 = vmatmul.mubr.bf16.gmra.mrb[0].mxu0 %v85
  %v264 = vpop.f32.mrb[0].mxu0
  %v265 = vadd.f32 0.0, %v264
  %v266 = vpop.f32.mrb[0].mxu0
  %v267 = vpop.f32.mrb[0].mxu0
  %v268 = vadd.f32 0.0, %v267
  %v269 = vpop.f32.mrb[0].mxu0
  %270 = vmatprep.mubr.bf16.mxu0 0
  %271 = vmatmul.mubr.bf16.gmra.mrb[0].mxu0 %v86
  %v272 = vpop.f32.mrb[0].mxu0
  %v273 = vadd.f32 0.0, %v272
  %v274 = vpop.f32.mrb[0].mxu0
  %v275 = vpop.f32.mrb[0].mxu0
  %v276 = vadd.f32 0.0, %v275
  %v277 = vpop.f32.mrb[0].mxu0
  %278 = vmatprep.mubr.bf16.mxu0 0
  %279 = vmatmul.mubr.bf16.gmra.mrb[0].mxu0 %v87
  %v280 = vpop.f32.mrb[0].mxu0
  %v281 = vadd.f32 0.0, %v280
  %v282 = vpop.f32.mrb[0].mxu0
  %v283 = vpop.f32.mrb[0].mxu0
  %v284 = vadd.f32 0.0, %v283
  %v285 = vpop.f32.mrb[0].mxu0
  %286 = vmatprep.mubr.bf16.mxu0 0
  %287 = vmatmul.mubr.bf16.gmra.mrb[0].mxu0 %v88
  %v288 = vpop.f32.mrb[0].mxu0
  %v289 = vadd.f32 0.0, %v288
  %v290 = vpop.f32.mrb[0].mxu0
  %v291 = vpop.f32.mrb[0].mxu0
  %v292 = vadd.f32 0.0, %v291
  %v293 = vpop.f32.mrb[0].mxu0
  %294 = vmatprep.mubr.bf16.mxu0 0
  %295 = vmatmul.mubr.bf16.gmra.mrb[0].mxu0 %v89
  %v296 = vpop.f32.mrb[0].mxu0
  %v297 = vadd.f32 0.0, %v296
  %v298 = vpop.f32.mrb[0].mxu0
  %v299 = vpop.f32.mrb[0].mxu0
  %v300 = vadd.f32 0.0, %v299
  %v301 = vpop.f32.mrb[0].mxu0
  %302 = vmatprep.mubr.bf16.mxu0 0
  %303 = vmatmul.mubr.bf16.gmra.mrb[0].mxu0 %v90
  %v304 = vpop.f32.mrb[0].mxu0
  %v305 = vadd.f32 0.0, %v304
  %v306 = vpop.f32.mrb[0].mxu0
  %v307 = vpop.f32.mrb[0].mxu0
  %v308 = vadd.f32 0.0, %v307
  %v309 = vpop.f32.mrb[0].mxu0
  %310 = vmatprep.mubr.bf16.mxu0 0
  %311 = vmatmul.mubr.bf16.gmra.mrb[0].mxu0 %v91
  %v312 = vpop.f32.mrb[0].mxu0
  %v313 = vadd.f32 0.0, %v312
  %v314 = vpop.f32.mrb[0].mxu0
  %v315 = vpop.f32.mrb[0].mxu0
  %v316 = vadd.f32 0.0, %v315
  %v317 = vpop.f32.mrb[0].mxu0
  %318 = vmatprep.mubr.bf16.mxu0 0
  %319 = vmatmul.mubr.bf16.gmra.mrb[0].mxu0 %v92
  %v320 = vpop.f32.mrb[0].mxu0
  %v321 = vadd.f32 0.0, %v320
  %v322 = vpop.f32.mrb[0].mxu0
  %v323 = vpop.f32.mrb[0].mxu0
  %v324 = vadd.f32 0.0, %v323
  %v325 = vpop.f32.mrb[0].mxu0
  %326 = vmatprep.mubr.bf16.mxu0 0
  %327 = vmatmul.mubr.bf16.gmra.mrb[0].mxu0 %v93
  %v328 = vpop.f32.mrb[0].mxu0
  %v329 = vadd.f32 0.0, %v328
  %v330 = vpop.f32.mrb[0].mxu0
  %v331 = vpop.f32.mrb[0].mxu0
  %v332 = vadd.f32 0.0, %v331
  %v333 = vpop.f32.mrb[0].mxu0
  %334 = vmatprep.mubr.bf16.mxu0 0
  %335 = vmatmul.mubr.bf16.gmra.mrb[0].mxu0 %v94
  %v336 = vpop.f32.mrb[0].mxu0
  %v337 = vadd.f32 0.0, %v336
  %v338 = vpop.f32.mrb[0].mxu0
  %v339 = vpop.f32.mrb[0].mxu0
  %v340 = vadd.f32 0.0, %v339
  %v341 = vpop.f32.mrb[0].mxu0
  %342 = vmatprep.mubr.bf16.mxu0 0
  %343 = vmatmul.mubr.bf16.gmra.mrb[0].mxu0 %v95
  %v344 = vpop.f32.mrb[0].mxu0
  %v345 = vadd.f32 0.0, %v344
  %v346 = vpop.f32.mrb[0].mxu0
  %v347 = vpop.f32.mrb[0].mxu0
  %v348 = vadd.f32 0.0, %v347
  %v349 = vpop.f32.mrb[0].mxu0
  %350 = vmatprep.mubr.bf16.mxu0 0
  %351 = vmatmul.mubr.bf16.gmra.mrb[0].mxu0 %v96
  %v352 = vpop.f32.mrb[0].mxu0
  %v353 = vadd.f32 0.0, %v352
  %v354 = vpop.f32.mrb[0].mxu0
  %v355 = vpop.f32.mrb[0].mxu0
  %v356 = vadd.f32 0.0, %v355
  %v357 = vpop.f32.mrb[0].mxu0
  %358 = vmatprep.mubr.bf16.mxu0 0
  %359 = vmatmul.mubr.bf16.gmra.mrb[0].mxu0 %v97
  %v360 = vpop.f32.mrb[0].mxu0
  %v361 = vadd.f32 0.0, %v360
  %v362 = vpop.f32.mrb[0].mxu0
  %v363 = vpop.f32.mrb[0].mxu0
  %v364 = vadd.f32 0.0, %v363
  %v365 = vpop.f32.mrb[0].mxu0
  %366 = vmatprep.mubr.bf16.mxu0 0
  %367 = vmatmul.mubr.bf16.gmra.mrb[0].mxu0 %v98
  %v368 = vpop.f32.mrb[0].mxu0
  %v369 = vadd.f32 0.0, %v368
  %v370 = vpop.f32.mrb[0].mxu0
  %v371 = vpop.f32.mrb[0].mxu0
  %v372 = vadd.f32 0.0, %v371
  %v373 = vpop.f32.mrb[0].mxu0
  %374 = vmatprep.mubr.bf16.mxu0 0
  %375 = vmatmul.mubr.bf16.gmra.mrb[0].mxu0 %v99
  %v376 = vpop.f32.mrb[0].mxu0
  %v377 = vadd.f32 0.0, %v376
  %v378 = vpop.f32.mrb[0].mxu0
  %v379 = vpop.f32.mrb[0].mxu0
  %v380 = vadd.f32 0.0, %v379
  %v381 = vpop.f32.mrb[0].mxu0
  %382 = vmatprep.mubr.bf16.mxu0 0
  %383 = vmatmul.mubr.bf16.gmra.mrb[0].mxu0 %v100
  %v384 = vpop.f32.mrb[0].mxu0
  %v385 = vadd.f32 0.0, %v384
  %v386 = vpop.f32.mrb[0].mxu0
  %v387 = vpop.f32.mrb[0].mxu0
  %v388 = vadd.f32 0.0, %v387
  %v389 = vpop.f32.mrb[0].mxu0
  %390 = vmatprep.mubr.bf16.mxu0 0
  %391 = vmatmul.mubr.bf16.gmra.mrb[0].mxu0 %v101
  %v392 = vpop.f32.mrb[0].mxu0
  %v393 = vadd.f32 0.0, %v392
  %v394 = vpop.f32.mrb[0].mxu0
  %v395 = vpop.f32.mrb[0].mxu0
  %v396 = vadd.f32 0.0, %v395
  %v397 = vpop.f32.mrb[0].mxu0
  %398 = vmatprep.mubr.bf16.mxu0 0
  %399 = vmatmul.mubr.bf16.gmra.mrb[0].mxu0 %v102
  %v400 = vpop.f32.mrb[0].mxu0
  %v401 = vadd.f32 0.0, %v400
  %v402 = vpop.f32.mrb[0].mxu0
  %v403 = vpop.f32.mrb[0].mxu0
  %v404 = vadd.f32 0.0, %v403
  %v405 = vpop.f32.mrb[0].mxu0
  %406 = vmatprep.mubr.bf16.mxu0 0
  %407 = vmatmul.mubr.bf16.gmra.mrb[0].mxu0 %v103
  %v408 = vpop.f32.mrb[0].mxu0
  %v409 = vadd.f32 0.0, %v408
  %v410 = vpop.f32.mrb[0].mxu0
  %v411 = vpop.f32.mrb[0].mxu0
  %v412 = vadd.f32 0.0, %v411
  %v413 = vpop.f32.mrb[0].mxu0
  %414 = vmatprep.mubr.bf16.mxu0 0
  %415 = vmatmul.mubr.bf16.gmra.mrb[0].mxu0 %v104
  %v416 = vpop.f32.mrb[0].mxu0
  %v417 = vadd.f32 0.0, %v416
  %v418 = vpop.f32.mrb[0].mxu0
  %v419 = vpop.f32.mrb[0].mxu0
  %v420 = vadd.f32 0.0, %v419
  %v421 = vpop.f32.mrb[0].mxu0
  %422 = vmatprep.mubr.bf16.mxu0 0
  %423 = vmatmul.mubr.bf16.gmra.mrb[0].mxu0 %v105
  %v424 = vpop.f32.mrb[0].mxu0
  %v425 = vadd.f32 0.0, %v424
  %v426 = vpop.f32.mrb[0].mxu0
  %v427 = vpop.f32.mrb[0].mxu0
  %v428 = vadd.f32 0.0, %v427
  %v429 = vpop.f32.mrb[0].mxu0
  %430 = vmatprep.mubr.bf16.mxu0 0
  %431 = vmatmul.mubr.bf16.gmra.mrb[0].mxu0 %v106
  %v432 = vpop.f32.mrb[0].mxu0
  %v433 = vadd.f32 0.0, %v432
  %v434 = vpop.f32.mrb[0].mxu0
  %v435 = vpop.f32.mrb[0].mxu0
  %v436 = vadd.f32 0.0, %v435
  %v437 = vpop.f32.mrb[0].mxu0
  %438 = vmatprep.mubr.bf16.mxu0 0
  %439 = vmatmul.mubr.bf16.gmra.mrb[0].mxu0 %v107
  %v440 = vpop.f32.mrb[0].mxu0
  %v441 = vadd.f32 0.0, %v440
  %v442 = vpop.f32.mrb[0].mxu0
  %v443 = vpop.f32.mrb[0].mxu0
  %v444 = vadd.f32 0.0, %v443
  %v445 = vpop.f32.mrb[0].mxu0
  %446 = vmatprep.mubr.bf16.mxu0 0
  %447 = vmatmul.mubr.bf16.gmra.mrb[0].mxu0 %v108
  %v448 = vpop.f32.mrb[0].mxu0
  %v449 = vadd.f32 0.0, %v448
  %v450 = vpop.f32.mrb[0].mxu0
  %v451 = vpop.f32.mrb[0].mxu0
  %v452 = vadd.f32 0.0, %v451
  %v453 = vpop.f32.mrb[0].mxu0
  %454 = vmatprep.mubr.bf16.mxu0 0
  %455 = vmatmul.mubr.bf16.gmra.mrb[0].mxu0 %v109
  %v456 = vpop.f32.mrb[0].mxu0
  %v457 = vadd.f32 0.0, %v456
  %v458 = vpop.f32.mrb[0].mxu0
  %v459 = vpop.f32.mrb[0].mxu0
  %v460 = vadd.f32 0.0, %v459
  %v461 = vpop.f32.mrb[0].mxu0
  %462 = vdwg.mxu0
  %v463 = vadd.f32 %v209, %v212
  %v464 = vadd.f32 %v463, %v217
  %v465 = vadd.f32 %v464, %v220
  %v466 = vadd.f32 %v465, %v225
  %v467 = vadd.f32 %v466, %v228
  %v468 = vadd.f32 %v467, %v233
  %v469 = vadd.f32 %v468, %v236
  %v470 = vadd.f32 %v469, %v241
  %v471 = vadd.f32 %v470, %v244
  %v472 = vadd.f32 %v471, %v249
  %v473 = vadd.f32 %v472, %v252
  %v474 = vadd.f32 %v473, %v257
  %v475 = vadd.f32 %v474, %v260
  %v476 = vadd.f32 %v475, %v265
  %v477 = vadd.f32 %v476, %v268
  %v478 = vadd.f32 %v477, %v273
  %v479 = vadd.f32 %v478, %v276
  %v480 = vadd.f32 %v479, %v281
  %v481 = vadd.f32 %v480, %v284
  %v482 = vadd.f32 %v481, %v289
  %v483 = vadd.f32 %v482, %v292
  %v484 = vadd.f32 %v483, %v297
  %v485 = vadd.f32 %v484, %v300
  %v486 = vadd.f32 %v485, %v305
  %v487 = vadd.f32 %v486, %v308
  %v488 = vadd.f32 %v487, %v313
  %v489 = vadd.f32 %v488, %v316
  %v490 = vadd.f32 %v489, %v321
  %v491 = vadd.f32 %v490, %v324
  %v492 = vadd.f32 %v491, %v329
  %v493 = vadd.f32 %v492, %v332
  %v494 = vadd.f32 %v493, %v337
  %v495 = vadd.f32 %v494, %v340
  %v496 = vadd.f32 %v495, %v345
  %v497 = vadd.f32 %v496, %v348
  %v498 = vadd.f32 %v497, %v353
  %v499 = vadd.f32 %v498, %v356
  %v500 = vadd.f32 %v499, %v361
  %v501 = vadd.f32 %v500, %v364
  %v502 = vadd.f32 %v501, %v369
  %v503 = vadd.f32 %v502, %v372
  %v504 = vadd.f32 %v503, %v377
  %v505 = vadd.f32 %v504, %v380
  %v506 = vadd.f32 %v505, %v385
  %v507 = vadd.f32 %v506, %v388
  %v508 = vadd.f32 %v507, %v393
  %v509 = vadd.f32 %v508, %v396
  %v510 = vadd.f32 %v509, %v401
  %v511 = vadd.f32 %v510, %v404
  %v512 = vadd.f32 %v511, %v409
  %v513 = vadd.f32 %v512, %v412
  %v514 = vadd.f32 %v513, %v417
  %v515 = vadd.f32 %v514, %v420
  %v516 = vadd.f32 %v515, %v425
  %v517 = vadd.f32 %v516, %v428
  %v518 = vadd.f32 %v517, %v433
  %v519 = vadd.f32 %v518, %v436
  %v520 = vadd.f32 %v519, %v441
  %v521 = vadd.f32 %v520, %v444
  %v522 = vadd.f32 %v521, %v449
  %v523 = vadd.f32 %v522, %v452
  %v524 = vadd.f32 %v523, %v457
  %v525 = vadd.f32 %v524, %v460
  %v526 = vrot.slane %v525, 4
  %v527 = vadd.f32 %v525, %v526
  %v528 = vrot.slane %v527, 2
  %v529 = vadd.f32 %v527, %v528
  %v530 = vrot.slane %v529, 1
  %v531 = vadd.f32 %v529, %v530
  %v532 = vrcp.pop 512.0
  %v533 = vmul.f32 %v531, %v532
  %v534 = vsub.f32 %v209, %v533
  %v535 = vsub.f32 %v212, %v533
  %v536 = vsub.f32 %v217, %v533
  %v537 = vsub.f32 %v220, %v533
  %v538 = vsub.f32 %v225, %v533
  %v539 = vsub.f32 %v228, %v533
  %v540 = vsub.f32 %v233, %v533
  %v541 = vsub.f32 %v236, %v533
  %v542 = vsub.f32 %v241, %v533
  %v543 = vsub.f32 %v244, %v533
  %v544 = vsub.f32 %v249, %v533
  %v545 = vsub.f32 %v252, %v533
  %v546 = vsub.f32 %v257, %v533
  %v547 = vsub.f32 %v260, %v533
  %v548 = vsub.f32 %v265, %v533
  %v549 = vsub.f32 %v268, %v533
  %v550 = vsub.f32 %v273, %v533
  %v551 = vsub.f32 %v276, %v533
  %v552 = vsub.f32 %v281, %v533
  %v553 = vsub.f32 %v284, %v533
  %v554 = vsub.f32 %v289, %v533
  %v555 = vsub.f32 %v292, %v533
  %v556 = vsub.f32 %v297, %v533
  %v557 = vsub.f32 %v300, %v533
  %v558 = vsub.f32 %v305, %v533
  %v559 = vsub.f32 %v308, %v533
  %v560 = vsub.f32 %v313, %v533
  %v561 = vsub.f32 %v316, %v533
  %v562 = vsub.f32 %v321, %v533
  %v563 = vsub.f32 %v324, %v533
  %v564 = vsub.f32 %v329, %v533
  %v565 = vsub.f32 %v332, %v533
  %v566 = vsub.f32 %v337, %v533
  %v567 = vsub.f32 %v340, %v533
  %v568 = vsub.f32 %v345, %v533
  %v569 = vsub.f32 %v348, %v533
  %v570 = vsub.f32 %v353, %v533
  %v571 = vsub.f32 %v356, %v533
  %v572 = vsub.f32 %v361, %v533
  %v573 = vsub.f32 %v364, %v533
  %v574 = vsub.f32 %v369, %v533
  %v575 = vsub.f32 %v372, %v533
  %v576 = vsub.f32 %v377, %v533
  %v577 = vsub.f32 %v380, %v533
  %v578 = vsub.f32 %v385, %v533
  %v579 = vsub.f32 %v388, %v533
  %v580 = vsub.f32 %v393, %v533
  %v581 = vsub.f32 %v396, %v533
  %v582 = vsub.f32 %v401, %v533
  %v583 = vsub.f32 %v404, %v533
  %v584 = vsub.f32 %v409, %v533
  %v585 = vsub.f32 %v412, %v533
  %v586 = vsub.f32 %v417, %v533
  %v587 = vsub.f32 %v420, %v533
  %v588 = vsub.f32 %v425, %v533
  %v589 = vsub.f32 %v428, %v533
  %v590 = vsub.f32 %v433, %v533
  %v591 = vsub.f32 %v436, %v533
  %v592 = vsub.f32 %v441, %v533
  %v593 = vsub.f32 %v444, %v533
  %v594 = vsub.f32 %v449, %v533
  %v595 = vsub.f32 %v452, %v533
  %v596 = vsub.f32 %v457, %v533
  %v597 = vsub.f32 %v460, %v533
  %v598 = vmul.f32 %v534, %v534
  %v599 = vmul.f32 %v535, %v535
  %v600 = vmul.f32 %v536, %v536
  %v601 = vmul.f32 %v537, %v537
  %v602 = vmul.f32 %v538, %v538
  %v603 = vmul.f32 %v539, %v539
  %v604 = vmul.f32 %v540, %v540
  %v605 = vmul.f32 %v541, %v541
  %v606 = vmul.f32 %v542, %v542
  %v607 = vmul.f32 %v543, %v543
  %v608 = vmul.f32 %v544, %v544
  %v609 = vmul.f32 %v545, %v545
  %v610 = vmul.f32 %v546, %v546
  %v611 = vmul.f32 %v547, %v547
  %v612 = vmul.f32 %v548, %v548
  %v613 = vmul.f32 %v549, %v549
  %v614 = vmul.f32 %v550, %v550
  %v615 = vmul.f32 %v551, %v551
  %v616 = vmul.f32 %v552, %v552
  %v617 = vmul.f32 %v553, %v553
  %v618 = vmul.f32 %v554, %v554
  %v619 = vmul.f32 %v555, %v555
  %v620 = vmul.f32 %v556, %v556
  %v621 = vmul.f32 %v557, %v557
  %v622 = vmul.f32 %v558, %v558
  %v623 = vmul.f32 %v559, %v559
  %v624 = vmul.f32 %v560, %v560
  %v625 = vmul.f32 %v561, %v561
  %v626 = vmul.f32 %v562, %v562
  %v627 = vmul.f32 %v563, %v563
  %v628 = vmul.f32 %v564, %v564
  %v629 = vmul.f32 %v565, %v565
  %v630 = vmul.f32 %v566, %v566
  %v631 = vmul.f32 %v567, %v567
  %v632 = vmul.f32 %v568, %v568
  %v633 = vmul.f32 %v569, %v569
  %v634 = vmul.f32 %v570, %v570
  %v635 = vmul.f32 %v571, %v571
  %v636 = vmul.f32 %v572, %v572
  %v637 = vmul.f32 %v573, %v573
  %v638 = vmul.f32 %v574, %v574
  %v639 = vmul.f32 %v575, %v575
  %v640 = vmul.f32 %v576, %v576
  %v641 = vmul.f32 %v577, %v577
  %v642 = vmul.f32 %v578, %v578
  %v643 = vmul.f32 %v579, %v579
  %v644 = vmul.f32 %v580, %v580
  %v645 = vmul.f32 %v581, %v581
  %v646 = vmul.f32 %v582, %v582
  %v647 = vmul.f32 %v583, %v583
  %v648 = vmul.f32 %v584, %v584
  %v649 = vmul.f32 %v585, %v585
  %v650 = vmul.f32 %v586, %v586
  %v651 = vmul.f32 %v587, %v587
  %v652 = vmul.f32 %v588, %v588
  %v653 = vmul.f32 %v589, %v589
  %v654 = vmul.f32 %v590, %v590
  %v655 = vmul.f32 %v591, %v591
  %v656 = vmul.f32 %v592, %v592
  %v657 = vmul.f32 %v593, %v593
  %v658 = vmul.f32 %v594, %v594
  %v659 = vmul.f32 %v595, %v595
  %v660 = vmul.f32 %v596, %v596
  %v661 = vmul.f32 %v597, %v597
  %v662 = vadd.f32 %v598, %v599
  %v663 = vadd.f32 %v662, %v600
  %v664 = vadd.f32 %v663, %v601
  %v665 = vadd.f32 %v664, %v602
  %v666 = vadd.f32 %v665, %v603
  %v667 = vadd.f32 %v666, %v604
  %v668 = vadd.f32 %v667, %v605
  %v669 = vadd.f32 %v668, %v606
  %v670 = vadd.f32 %v669, %v607
  %v671 = vadd.f32 %v670, %v608
  %v672 = vadd.f32 %v671, %v609
  %v673 = vadd.f32 %v672, %v610
  %v674 = vadd.f32 %v673, %v611
  %v675 = vadd.f32 %v674, %v612
  %v676 = vadd.f32 %v675, %v613
  %v677 = vadd.f32 %v676, %v614
  %v678 = vadd.f32 %v677, %v615
  %v679 = vadd.f32 %v678, %v616
  %v680 = vadd.f32 %v679, %v617
  %v681 = vadd.f32 %v680, %v618
  %v682 = vadd.f32 %v681, %v619
  %v683 = vadd.f32 %v682, %v620
  %v684 = vadd.f32 %v683, %v621
  %v685 = vadd.f32 %v684, %v622
  %v686 = vadd.f32 %v685, %v623
  %v687 = vadd.f32 %v686, %v624
  %v688 = vadd.f32 %v687, %v625
  %v689 = vadd.f32 %v688, %v626
  %v690 = vadd.f32 %v689, %v627
  %v691 = vadd.f32 %v690, %v628
  %v692 = vadd.f32 %v691, %v629
  %v693 = vadd.f32 %v692, %v630
  %v694 = vadd.f32 %v693, %v631
  %v695 = vadd.f32 %v694, %v632
  %v696 = vadd.f32 %v695, %v633
  %v697 = vadd.f32 %v696, %v634
  %v698 = vadd.f32 %v697, %v635
  %v699 = vadd.f32 %v698, %v636
  %v700 = vadd.f32 %v699, %v637
  %v701 = vadd.f32 %v700, %v638
  %v702 = vadd.f32 %v701, %v639
  %v703 = vadd.f32 %v702, %v640
  %v704 = vadd.f32 %v703, %v641
  %v705 = vadd.f32 %v704, %v642
  %v706 = vadd.f32 %v705, %v643
  %v707 = vadd.f32 %v706, %v644
  %v708 = vadd.f32 %v707, %v645
  %v709 = vadd.f32 %v708, %v646
  %v710 = vadd.f32 %v709, %v647
  %v711 = vadd.f32 %v710, %v648
  %v712 = vadd.f32 %v711, %v649
  %v713 = vadd.f32 %v712, %v650
  %v714 = vadd.f32 %v713, %v651
  %v715 = vadd.f32 %v714, %v652
  %v716 = vadd.f32 %v715, %v653
  %v717 = vadd.f32 %v716, %v654
  %v718 = vadd.f32 %v717, %v655
  %v719 = vadd.f32 %v718, %v656
  %v720 = vadd.f32 %v719, %v657
  %v721 = vadd.f32 %v720, %v658
  %v722 = vadd.f32 %v721, %v659
  %v723 = vadd.f32 %v722, %v660
  %v724 = vadd.f32 %v723, %v661
  %v725 = vrot.slane %v724, 4
  %v726 = vadd.f32 %v724, %v725
  %v727 = vrot.slane %v726, 2
  %v728 = vadd.f32 %v726, %v727
  %v729 = vrot.slane %v728, 1
  %v730 = vadd.f32 %v728, %v729
  %vm731 = vcmask 1040384
  %v732 = vsel %vm731, %v533, %v730
  %733 = vst [vmem:[%s3] sm:$0x3] %v732
  %v734 = vpack.c.bf16 %v212, %v209
  %v735 = vpack.c.bf16 %v220, %v217
  %v736 = vpack.c.bf16 %v228, %v225
  %v737 = vpack.c.bf16 %v236, %v233
  %v738 = vpack.c.bf16 %v244, %v241
  %v739 = vpack.c.bf16 %v252, %v249
  %v740 = vpack.c.bf16 %v260, %v257
  %v741 = vpack.c.bf16 %v268, %v265
  %v742 = vpack.c.bf16 %v276, %v273
  %v743 = vpack.c.bf16 %v284, %v281
  %v744 = vpack.c.bf16 %v292, %v289
  %v745 = vpack.c.bf16 %v300, %v297
  %v746 = vpack.c.bf16 %v308, %v305
  %v747 = vpack.c.bf16 %v316, %v313
  %v748 = vpack.c.bf16 %v324, %v321
  %v749 = vpack.c.bf16 %v332, %v329
  %v750 = vpack.c.bf16 %v340, %v337
  %v751 = vpack.c.bf16 %v348, %v345
  %v752 = vpack.c.bf16 %v356, %v353
  %v753 = vpack.c.bf16 %v364, %v361
  %v754 = vpack.c.bf16 %v372, %v369
  %v755 = vpack.c.bf16 %v380, %v377
  %v756 = vpack.c.bf16 %v388, %v385
  %v757 = vpack.c.bf16 %v396, %v393
  %v758 = vpack.c.bf16 %v404, %v401
  %v759 = vpack.c.bf16 %v412, %v409
  %v760 = vpack.c.bf16 %v420, %v417
  %v761 = vpack.c.bf16 %v428, %v425
  %v762 = vpack.c.bf16 %v436, %v433
  %v763 = vpack.c.bf16 %v444, %v441
  %v764 = vpack.c.bf16 %v452, %v449
  %v765 = vpack.c.bf16 %v460, %v457
  %v798 = vunpack.c.l.b16 %v734
  %v799 = vunpack.c.h.b16 %v734
  %v800 = vunpack.c.l.b16 %v735
  %v801 = vunpack.c.h.b16 %v735
  %v802 = vunpack.c.l.b16 %v736
  %v803 = vunpack.c.h.b16 %v736
  %v804 = vunpack.c.l.b16 %v737
  %v805 = vunpack.c.h.b16 %v737
  %v806 = vunpack.c.l.b16 %v738
  %v807 = vunpack.c.h.b16 %v738
  %v808 = vunpack.c.l.b16 %v739
  %v809 = vunpack.c.h.b16 %v739
  %v810 = vunpack.c.l.b16 %v740
  %v811 = vunpack.c.h.b16 %v740
  %v812 = vunpack.c.l.b16 %v741
  %v813 = vunpack.c.h.b16 %v741
  %v814 = vunpack.c.l.b16 %v742
  %v815 = vunpack.c.h.b16 %v742
  %v816 = vunpack.c.l.b16 %v743
  %v817 = vunpack.c.h.b16 %v743
  %v818 = vunpack.c.l.b16 %v744
  %v819 = vunpack.c.h.b16 %v744
  %v820 = vunpack.c.l.b16 %v745
  %v821 = vunpack.c.h.b16 %v745
  %v822 = vunpack.c.l.b16 %v746
  %v823 = vunpack.c.h.b16 %v746
  %v824 = vunpack.c.l.b16 %v747
  %v825 = vunpack.c.h.b16 %v747
  %v826 = vunpack.c.l.b16 %v748
  %v827 = vunpack.c.h.b16 %v748
  %v828 = vunpack.c.l.b16 %v749
  %v829 = vunpack.c.h.b16 %v749
  %v830 = vunpack.c.l.b16 %v750
  %v831 = vunpack.c.h.b16 %v750
  %v832 = vunpack.c.l.b16 %v751
  %v833 = vunpack.c.h.b16 %v751
  %v834 = vunpack.c.l.b16 %v752
  %v835 = vunpack.c.h.b16 %v752
  %v836 = vunpack.c.l.b16 %v753
  %v837 = vunpack.c.h.b16 %v753
  %v838 = vunpack.c.l.b16 %v754
  %v839 = vunpack.c.h.b16 %v754
  %v840 = vunpack.c.l.b16 %v755
  %v841 = vunpack.c.h.b16 %v755
  %v842 = vunpack.c.l.b16 %v756
  %v843 = vunpack.c.h.b16 %v756
  %v844 = vunpack.c.l.b16 %v757
  %v845 = vunpack.c.h.b16 %v757
  %v846 = vunpack.c.l.b16 %v758
  %v847 = vunpack.c.h.b16 %v758
  %v848 = vunpack.c.l.b16 %v759
  %v849 = vunpack.c.h.b16 %v759
  %v850 = vunpack.c.l.b16 %v760
  %v851 = vunpack.c.h.b16 %v760
  %v852 = vunpack.c.l.b16 %v761
  %v853 = vunpack.c.h.b16 %v761
  %v854 = vunpack.c.l.b16 %v762
  %v855 = vunpack.c.h.b16 %v762
  %v856 = vunpack.c.l.b16 %v763
  %v857 = vunpack.c.h.b16 %v763
  %v858 = vunpack.c.l.b16 %v764
  %v859 = vunpack.c.h.b16 %v764
  %v860 = vunpack.c.l.b16 %v765
  %v861 = vunpack.c.h.b16 %v765
  %v862 = vpack.c.b16 %v798, %v798
  %v863 = vpack.c.b16 %v799, %v799
  %v864 = vpack.c.b16 %v800, %v800
  %v865 = vpack.c.b16 %v801, %v801
  %v866 = vpack.c.b16 %v802, %v802
  %v867 = vpack.c.b16 %v803, %v803
  %v868 = vpack.c.b16 %v804, %v804
  %v869 = vpack.c.b16 %v805, %v805
  %v870 = vpack.c.b16 %v806, %v806
  %v871 = vpack.c.b16 %v807, %v807
  %v872 = vpack.c.b16 %v808, %v808
  %v873 = vpack.c.b16 %v809, %v809
  %v874 = vpack.c.b16 %v810, %v810
  %v875 = vpack.c.b16 %v811, %v811
  %v876 = vpack.c.b16 %v812, %v812
  %v877 = vpack.c.b16 %v813, %v813
  %v878 = vpack.c.b16 %v814, %v814
  %v879 = vpack.c.b16 %v815, %v815
  %v880 = vpack.c.b16 %v816, %v816
  %v881 = vpack.c.b16 %v817, %v817
  %v882 = vpack.c.b16 %v818, %v818
  %v883 = vpack.c.b16 %v819, %v819
  %v884 = vpack.c.b16 %v820, %v820
  %v885 = vpack.c.b16 %v821, %v821
  %v886 = vpack.c.b16 %v822, %v822
  %v887 = vpack.c.b16 %v823, %v823
  %v888 = vpack.c.b16 %v824, %v824
  %v889 = vpack.c.b16 %v825, %v825
  %v890 = vpack.c.b16 %v826, %v826
  %v891 = vpack.c.b16 %v827, %v827
  %v892 = vpack.c.b16 %v828, %v828
  %v893 = vpack.c.b16 %v829, %v829
  %v894 = vpack.c.b16 %v830, %v830
  %v895 = vpack.c.b16 %v831, %v831
  %v896 = vpack.c.b16 %v832, %v832
  %v897 = vpack.c.b16 %v833, %v833
  %v898 = vpack.c.b16 %v834, %v834
  %v899 = vpack.c.b16 %v835, %v835
  %v900 = vpack.c.b16 %v836, %v836
  %v901 = vpack.c.b16 %v837, %v837
  %v902 = vpack.c.b16 %v838, %v838
  %v903 = vpack.c.b16 %v839, %v839
  %v904 = vpack.c.b16 %v840, %v840
  %v905 = vpack.c.b16 %v841, %v841
  %v906 = vpack.c.b16 %v842, %v842
  %v907 = vpack.c.b16 %v843, %v843
  %v908 = vpack.c.b16 %v844, %v844
  %v909 = vpack.c.b16 %v845, %v845
  %v910 = vpack.c.b16 %v846, %v846
  %v911 = vpack.c.b16 %v847, %v847
  %v912 = vpack.c.b16 %v848, %v848
  %v913 = vpack.c.b16 %v849, %v849
  %v914 = vpack.c.b16 %v850, %v850
  %v915 = vpack.c.b16 %v851, %v851
  %v916 = vpack.c.b16 %v852, %v852
  %v917 = vpack.c.b16 %v853, %v853
  %v918 = vpack.c.b16 %v854, %v854
  %v919 = vpack.c.b16 %v855, %v855
  %v920 = vpack.c.b16 %v856, %v856
  %v921 = vpack.c.b16 %v857, %v857
  %v922 = vpack.c.b16 %v858, %v858
  %v923 = vpack.c.b16 %v859, %v859
  %v924 = vpack.c.b16 %v860, %v860
  %v925 = vpack.c.b16 %v861, %v861
  %990 = vst [vmem:[%s2] sm:$0xf] %v862
  %991 = vst [vmem:[%s2 + $0x4] sm:$0xf] %v863
  %992 = vst [vmem:[%s2 + $0x8] sm:$0xf] %v864
  %993 = vst [vmem:[%s2 + $0xc] sm:$0xf] %v865
  %994 = vst [vmem:[%s2 + $0x10] sm:$0xf] %v866
  %995 = vst [vmem:[%s2 + $0x14] sm:$0xf] %v867
  %996 = vst [vmem:[%s2 + $0x18] sm:$0xf] %v868
  %997 = vst [vmem:[%s2 + $0x1c] sm:$0xf] %v869
  %998 = vst [vmem:[%s2 + $0x20] sm:$0xf] %v870
  %999 = vst [vmem:[%s2 + $0x24] sm:$0xf] %v871
  %1000 = vst [vmem:[%s2 + $0x28] sm:$0xf] %v872
  %1001 = vst [vmem:[%s2 + $0x2c] sm:$0xf] %v873
  %1002 = vst [vmem:[%s2 + $0x30] sm:$0xf] %v874
  %1003 = vst [vmem:[%s2 + $0x34] sm:$0xf] %v875
  %1004 = vst [vmem:[%s2 + $0x38] sm:$0xf] %v876
  %1005 = vst [vmem:[%s2 + $0x3c] sm:$0xf] %v877
  %1006 = vst [vmem:[%s2 + $0x40] sm:$0xf] %v878
  %1007 = vst [vmem:[%s2 + $0x44] sm:$0xf] %v879
  %1008 = vst [vmem:[%s2 + $0x48] sm:$0xf] %v880
  %1009 = vst [vmem:[%s2 + $0x4c] sm:$0xf] %v881
  %1010 = vst [vmem:[%s2 + $0x50] sm:$0xf] %v882
  %1011 = vst [vmem:[%s2 + $0x54] sm:$0xf] %v883
  %1012 = vst [vmem:[%s2 + $0x58] sm:$0xf] %v884
  %1013 = vst [vmem:[%s2 + $0x5c] sm:$0xf] %v885
  %1014 = vst [vmem:[%s2 + $0x60] sm:$0xf] %v886
  %1015 = vst [vmem:[%s2 + $0x64] sm:$0xf] %v887
  %1016 = vst [vmem:[%s2 + $0x68] sm:$0xf] %v888
  %1017 = vst [vmem:[%s2 + $0x6c] sm:$0xf] %v889
  %1018 = vst [vmem:[%s2 + $0x70] sm:$0xf] %v890
  %1019 = vst [vmem:[%s2 + $0x74] sm:$0xf] %v891
  %1020 = vst [vmem:[%s2 + $0x78] sm:$0xf] %v892
  %1021 = vst [vmem:[%s2 + $0x7c] sm:$0xf] %v893
  %1022 = vst [vmem:[%s2 + $0x80] sm:$0xf] %v894
  %1023 = vst [vmem:[%s2 + $0x84] sm:$0xf] %v895
  %1024 = vst [vmem:[%s2 + $0x88] sm:$0xf] %v896
  %1025 = vst [vmem:[%s2 + $0x8c] sm:$0xf] %v897
  %1026 = vst [vmem:[%s2 + $0x90] sm:$0xf] %v898
  %1027 = vst [vmem:[%s2 + $0x94] sm:$0xf] %v899
  %1028 = vst [vmem:[%s2 + $0x98] sm:$0xf] %v900
  %1029 = vst [vmem:[%s2 + $0x9c] sm:$0xf] %v901
  %1030 = vst [vmem:[%s2 + $0xa0] sm:$0xf] %v902
  %1031 = vst [vmem:[%s2 + $0xa4] sm:$0xf] %v903
  %1032 = vst [vmem:[%s2 + $0xa8] sm:$0xf] %v904
  %1033 = vst [vmem:[%s2 + $0xac] sm:$0xf] %v905
  %1034 = vst [vmem:[%s2 + $0xb0] sm:$0xf] %v906
  %1035 = vst [vmem:[%s2 + $0xb4] sm:$0xf] %v907
  %1036 = vst [vmem:[%s2 + $0xb8] sm:$0xf] %v908
  %1037 = vst [vmem:[%s2 + $0xbc] sm:$0xf] %v909
  %1038 = vst [vmem:[%s2 + $0xc0] sm:$0xf] %v910
  %1039 = vst [vmem:[%s2 + $0xc4] sm:$0xf] %v911
  %1040 = vst [vmem:[%s2 + $0xc8] sm:$0xf] %v912
  %1041 = vst [vmem:[%s2 + $0xcc] sm:$0xf] %v913
  %1042 = vst [vmem:[%s2 + $0xd0] sm:$0xf] %v914
  %1043 = vst [vmem:[%s2 + $0xd4] sm:$0xf] %v915
  %1044 = vst [vmem:[%s2 + $0xd8] sm:$0xf] %v916
  %1045 = vst [vmem:[%s2 + $0xdc] sm:$0xf] %v917
  %1046 = vst [vmem:[%s2 + $0xe0] sm:$0xf] %v918
  %1047 = vst [vmem:[%s2 + $0xe4] sm:$0xf] %v919
  %1048 = vst [vmem:[%s2 + $0xe8] sm:$0xf] %v920
  %1049 = vst [vmem:[%s2 + $0xec] sm:$0xf] %v921
  %1050 = vst [vmem:[%s2 + $0xf0] sm:$0xf] %v922
  %1051 = vst [vmem:[%s2 + $0xf4] sm:$0xf] %v923
  %1052 = vst [vmem:[%s2 + $0xf8] sm:$0xf] %v924
  %1053 = vst [vmem:[%s2 + $0xfc] sm:$0xf] %v925
  // Predicated region
  $region10: #{bottleneck_forward.4} parent=0 // pred_check
    _
  $region11: #{bottleneck_forward.4} parent=0 // pred_check_branch
    %1055 = sbr.rel (0) target = $region13
  $region12: #{bottleneck_forward.4} parent=0 // pred_region
    _
  $region13: #{bottleneck_forward.4} parent=0 // pred_fallthru
    _
  // Predicated region
  $region14: #{bottleneck_forward.4} parent=0 // pred_check
    _
  $region15: #{bottleneck_forward.4} parent=0 // pred_check_branch
    %1057 = sbr.rel (0) target = $region17
  $region16: #{bottleneck_forward.4} parent=0 // pred_region
    _
  $region17: #{bottleneck_forward.4} parent=0 // pred_fallthru
    _
  // Predicated region
  $region18: #{bottleneck_forward.4} parent=0 // pred_check
    _
  $region19: #{bottleneck_forward.4} parent=0 // pred_check_branch
    %1059 = sbr.rel (0) target = $region21
  $region20: #{bottleneck_forward.4} parent=0 // pred_region
    _
  $region21: #{bottleneck_forward.4} parent=0 // pred_fallthru
    _
  // Predicated region
  $region22: #{bottleneck_forward.4} parent=0 // pred_check
    _
  $region23: #{bottleneck_forward.4} parent=0 // pred_check_branch
    %1061 = sbr.rel (0) target = $region25
  $region24: #{bottleneck_forward.4} parent=0 // pred_region
    _
  $region25: #{bottleneck_forward.4} parent=0 // pred_fallthru
    _

// kernel: bottleneck_forward.7
$region0: #{bottleneck_forward.7}
  #allocation0 [shape = 'u32[]', space=smem, size = 0x4, offset = 0x4, fixed_abs, tag = 'smem constant byte address 0x4 - core index']
  #allocation1 [shape = 'u32[144,128]{1,0:T(1,128)}', space=vmem, size = 0x12000, scoped, tag = 'internal scratch']
  %s0 = inlined_call_operand.vmem [shape: bf16[512,128], index: 0, kind: input, shape index: {}]
  %s1 = inlined_call_operand.vmem [shape: f32[1,128], index: 1, kind: input, shape index: {}]
  %s2 = inlined_call_operand.vmem [shape: f32[1,128], index: 2, kind: input, shape index: {}]
  %s3 = inlined_call_operand.vmem [shape: f32[512,128], index: 3, kind: input, shape index: {}, may-alias: {3,4}]
  %s4 = inlined_call_operand.vmem [shape: f32[512,128], index: 4, kind: output, shape index: {}, may-alias: {3,4}]
  %s5 = sld [smem:[#allocation0]]
  $region26: #{bottleneck_forward.7} parent=0
    _
  %s7 = ssub.s32 1, %s5
  %s8 = scalar_select 0, %s7, %s5
  // Predicated region
  $region2: #{bottleneck_forward.7} parent=0 // pred_check
    _
  $region3: #{bottleneck_forward.7} parent=0 // pred_check_branch
    %10 = sbr.rel (0) target = $region5
  $region4: #{bottleneck_forward.7} parent=0 // pred_region
    _
  $region5: #{bottleneck_forward.7} parent=0 // pred_fallthru
    _
  // Predicated region
  $region6: #{bottleneck_forward.7} parent=0 // pred_check
    _
  $region7: #{bottleneck_forward.7} parent=0 // pred_check_branch
    %12 = sbr.rel (0) target = $region9
  $region8: #{bottleneck_forward.7} parent=0 // pred_region
    _
  $region9: #{bottleneck_forward.7} parent=0 // pred_fallthru
    _
  // Predicated region
  $region10: #{bottleneck_forward.7} parent=0 // pred_check
    _
  $region11: #{bottleneck_forward.7} parent=0 // pred_check_branch
    %14 = sbr.rel (0) target = $region13
  $region12: #{bottleneck_forward.7} parent=0 // pred_region
    _
  $region13: #{bottleneck_forward.7} parent=0 // pred_fallthru
    _
  // Predicated region
  $region14: #{bottleneck_forward.7} parent=0 // pred_check
    _
  $region15: #{bottleneck_forward.7} parent=0 // pred_check_branch
    %16 = sbr.rel (0) target = $region17
  $region16: #{bottleneck_forward.7} parent=0 // pred_region
    _
  $region17: #{bottleneck_forward.7} parent=0 // pred_fallthru
    _
  %v17 = vld [vmem:[%s0] sm:$0xf]
  %v18 = vld [vmem:[%s0 + $0x4] sm:$0xf]
  %v19 = vld [vmem:[%s0 + $0x8] sm:$0xf]
  %v20 = vld [vmem:[%s0 + $0xc] sm:$0xf]
  %v21 = vld [vmem:[%s0 + $0x10] sm:$0xf]
  %v22 = vld [vmem:[%s0 + $0x14] sm:$0xf]
  %v23 = vld [vmem:[%s0 + $0x18] sm:$0xf]
  %v24 = vld [vmem:[%s0 + $0x1c] sm:$0xf]
  %v25 = vld [vmem:[%s0 + $0x20] sm:$0xf]
  %v26 = vld [vmem:[%s0 + $0x24] sm:$0xf]
  %v27 = vld [vmem:[%s0 + $0x28] sm:$0xf]
  %v28 = vld [vmem:[%s0 + $0x2c] sm:$0xf]
  %v29 = vld [vmem:[%s0 + $0x30] sm:$0xf]
  %v30 = vld [vmem:[%s0 + $0x34] sm:$0xf]
  %v31 = vld [vmem:[%s0 + $0x38] sm:$0xf]
  %v32 = vld [vmem:[%s0 + $0x3c] sm:$0xf]
  %v33 = vld [vmem:[%s0 + $0x40] sm:$0xf]
  %v34 = vld [vmem:[%s0 + $0x44] sm:$0xf]
  %v35 = vld [vmem:[%s0 + $0x48] sm:$0xf]
  %v36 = vld [vmem:[%s0 + $0x4c] sm:$0xf]
  %v37 = vld [vmem:[%s0 + $0x50] sm:$0xf]
  %v38 = vld [vmem:[%s0 + $0x54] sm:$0xf]
  %v39 = vld [vmem:[%s0 + $0x58] sm:$0xf]
  %v40 = vld [vmem:[%s0 + $0x5c] sm:$0xf]
  %v41 = vld [vmem:[%s0 + $0x60] sm:$0xf]
  %v42 = vld [vmem:[%s0 + $0x64] sm:$0xf]
  %v43 = vld [vmem:[%s0 + $0x68] sm:$0xf]
  %v44 = vld [vmem:[%s0 + $0x6c] sm:$0xf]
  %v45 = vld [vmem:[%s0 + $0x70] sm:$0xf]
  %v46 = vld [vmem:[%s0 + $0x74] sm:$0xf]
  %v47 = vld [vmem:[%s0 + $0x78] sm:$0xf]
  %v48 = vld [vmem:[%s0 + $0x7c] sm:$0xf]
  %v49 = vld [vmem:[%s0 + $0x80] sm:$0xf]
  %v50 = vld [vmem:[%s0 + $0x84] sm:$0xf]
  %v51 = vld [vmem:[%s0 + $0x88] sm:$0xf]
  %v52 = vld [vmem:[%s0 + $0x8c] sm:$0xf]
  %v53 = vld [vmem:[%s0 + $0x90] sm:$0xf]
  %v54 = vld [vmem:[%s0 + $0x94] sm:$0xf]
  %v55 = vld [vmem:[%s0 + $0x98] sm:$0xf]
  %v56 = vld [vmem:[%s0 + $0x9c] sm:$0xf]
  %v57 = vld [vmem:[%s0 + $0xa0] sm:$0xf]
  %v58 = vld [vmem:[%s0 + $0xa4] sm:$0xf]
  %v59 = vld [vmem:[%s0 + $0xa8] sm:$0xf]
  %v60 = vld [vmem:[%s0 + $0xac] sm:$0xf]
  %v61 = vld [vmem:[%s0 + $0xb0] sm:$0xf]
  %v62 = vld [vmem:[%s0 + $0xb4] sm:$0xf]
  %v63 = vld [vmem:[%s0 + $0xb8] sm:$0xf]
  %v64 = vld [vmem:[%s0 + $0xbc] sm:$0xf]
  %v65 = vld [vmem:[%s0 + $0xc0] sm:$0xf]
  %v66 = vld [vmem:[%s0 + $0xc4] sm:$0xf]
  %v67 = vld [vmem:[%s0 + $0xc8] sm:$0xf]
  %v68 = vld [vmem:[%s0 + $0xcc] sm:$0xf]
  %v69 = vld [vmem:[%s0 + $0xd0] sm:$0xf]
  %v70 = vld [vmem:[%s0 + $0xd4] sm:$0xf]
  %v71 = vld [vmem:[%s0 + $0xd8] sm:$0xf]
  %v72 = vld [vmem:[%s0 + $0xdc] sm:$0xf]
  %v73 = vld [vmem:[%s0 + $0xe0] sm:$0xf]
  %v74 = vld [vmem:[%s0 + $0xe4] sm:$0xf]
  %v75 = vld [vmem:[%s0 + $0xe8] sm:$0xf]
  %v76 = vld [vmem:[%s0 + $0xec] sm:$0xf]
  %v77 = vld [vmem:[%s0 + $0xf0] sm:$0xf]
  %v78 = vld [vmem:[%s0 + $0xf4] sm:$0xf]
  %v79 = vld [vmem:[%s0 + $0xf8] sm:$0xf]
  %v80 = vld [vmem:[%s0 + $0xfc] sm:$0xf]
  %v81 = vunpack.c.l.bf16 %v17
  %v82 = vunpack.c.l.bf16 %v18
  %v83 = vunpack.c.l.bf16 %v19
  %v84 = vunpack.c.l.bf16 %v20
  %v85 = vunpack.c.l.bf16 %v21
  %v86 = vunpack.c.l.bf16 %v22
  %v87 = vunpack.c.l.bf16 %v23
  %v88 = vunpack.c.l.bf16 %v24
  %v89 = vunpack.c.l.bf16 %v25
  %v90 = vunpack.c.l.bf16 %v26
  %v91 = vunpack.c.l.bf16 %v27
  %v92 = vunpack.c.l.bf16 %v28
  %v93 = vunpack.c.l.bf16 %v29
  %v94 = vunpack.c.l.bf16 %v30
  %v95 = vunpack.c.l.bf16 %v31
  %v96 = vunpack.c.l.bf16 %v32
  %v97 = vunpack.c.l.bf16 %v33
  %v98 = vunpack.c.l.bf16 %v34
  %v99 = vunpack.c.l.bf16 %v35
  %v100 = vunpack.c.l.bf16 %v36
  %v101 = vunpack.c.l.bf16 %v37
  %v102 = vunpack.c.l.bf16 %v38
  %v103 = vunpack.c.l.bf16 %v39
  %v104 = vunpack.c.l.bf16 %v40
  %v105 = vunpack.c.l.bf16 %v41
  %v106 = vunpack.c.l.bf16 %v42
  %v107 = vunpack.c.l.bf16 %v43
  %v108 = vunpack.c.l.bf16 %v44
  %v109 = vunpack.c.l.bf16 %v45
  %v110 = vunpack.c.l.bf16 %v46
  %v111 = vunpack.c.l.bf16 %v47
  %v112 = vunpack.c.l.bf16 %v48
  %v113 = vunpack.c.l.bf16 %v49
  %v114 = vunpack.c.l.bf16 %v50
  %v115 = vunpack.c.l.bf16 %v51
  %v116 = vunpack.c.l.bf16 %v52
  %v117 = vunpack.c.l.bf16 %v53
  %v118 = vunpack.c.l.bf16 %v54
  %v119 = vunpack.c.l.bf16 %v55
  %v120 = vunpack.c.l.bf16 %v56
  %v121 = vunpack.c.l.bf16 %v57
  %v122 = vunpack.c.l.bf16 %v58
  %v123 = vunpack.c.l.bf16 %v59
  %v124 = vunpack.c.l.bf16 %v60
  %v125 = vunpack.c.l.bf16 %v61
  %v126 = vunpack.c.l.bf16 %v62
  %v127 = vunpack.c.l.bf16 %v63
  %v128 = vunpack.c.l.bf16 %v64
  %v129 = vunpack.c.l.bf16 %v65
  %v130 = vunpack.c.l.bf16 %v66
  %v131 = vunpack.c.l.bf16 %v67
  %v132 = vunpack.c.l.bf16 %v68
  %v133 = vunpack.c.l.bf16 %v69
  %v134 = vunpack.c.l.bf16 %v70
  %v135 = vunpack.c.l.bf16 %v71
  %v136 = vunpack.c.l.bf16 %v72
  %v137 = vunpack.c.l.bf16 %v73
  %v138 = vunpack.c.l.bf16 %v74
  %v139 = vunpack.c.l.bf16 %v75
  %v140 = vunpack.c.l.bf16 %v76
  %v141 = vunpack.c.l.bf16 %v77
  %v142 = vunpack.c.l.bf16 %v78
  %v143 = vunpack.c.l.bf16 %v79
  %v144 = vunpack.c.l.bf16 %v80
  %v145 = vld [vmem:[%s1] sm:$0x1]
  %v147 = vlaneseq
  %v148 = vshrl.u32 %v147, 7
  %v149 = vsub.s32 0, %v148
  %v150 = vrot.slane %v145, %v149
  %v152 = vmul.f32 %v81, %v150
  %v153 = vmul.f32 %v82, %v150
  %v154 = vmul.f32 %v83, %v150
  %v155 = vmul.f32 %v84, %v150
  %v156 = vmul.f32 %v85, %v150
  %v157 = vmul.f32 %v86, %v150
  %v158 = vmul.f32 %v87, %v150
  %v159 = vmul.f32 %v88, %v150
  %v160 = vmul.f32 %v89, %v150
  %v161 = vmul.f32 %v90, %v150
  %v162 = vmul.f32 %v91, %v150
  %v163 = vmul.f32 %v92, %v150
  %v164 = vmul.f32 %v93, %v150
  %v165 = vmul.f32 %v94, %v150
  %v166 = vmul.f32 %v95, %v150
  %v167 = vmul.f32 %v96, %v150
  %v168 = vmul.f32 %v97, %v150
  %v169 = vmul.f32 %v98, %v150
  %v170 = vmul.f32 %v99, %v150
  %v171 = vmul.f32 %v100, %v150
  %v172 = vmul.f32 %v101, %v150
  %v173 = vmul.f32 %v102, %v150
  %v174 = vmul.f32 %v103, %v150
  %v175 = vmul.f32 %v104, %v150
  %v176 = vmul.f32 %v105, %v150
  %v177 = vmul.f32 %v106, %v150
  %v178 = vmul.f32 %v107, %v150
  %v179 = vmul.f32 %v108, %v150
  %v180 = vmul.f32 %v109, %v150
  %v181 = vmul.f32 %v110, %v150
  %v182 = vmul.f32 %v111, %v150
  %v183 = vmul.f32 %v112, %v150
  %v184 = vmul.f32 %v113, %v150
  %v185 = vmul.f32 %v114, %v150
  %v186 = vmul.f32 %v115, %v150
  %v187 = vmul.f32 %v116, %v150
  %v188 = vmul.f32 %v117, %v150
  %v189 = vmul.f32 %v118, %v150
  %v190 = vmul.f32 %v119, %v150
  %v191 = vmul.f32 %v120, %v150
  %v192 = vmul.f32 %v121, %v150
  %v193 = vmul.f32 %v122, %v150
  %v194 = vmul.f32 %v123, %v150
  %v195 = vmul.f32 %v124, %v150
  %v196 = vmul.f32 %v125, %v150
  %v197 = vmul.f32 %v126, %v150
  %v198 = vmul.f32 %v127, %v150
  %v199 = vmul.f32 %v128, %v150
  %v200 = vmul.f32 %v129, %v150
  %v201 = vmul.f32 %v130, %v150
  %v202 = vmul.f32 %v131, %v150
  %v203 = vmul.f32 %v132, %v150
  %v204 = vmul.f32 %v133, %v150
  %v205 = vmul.f32 %v134, %v150
  %v206 = vmul.f32 %v135, %v150
  %v207 = vmul.f32 %v136, %v150
  %v208 = vmul.f32 %v137, %v150
  %v209 = vmul.f32 %v138, %v150
  %v210 = vmul.f32 %v139, %v150
  %v211 = vmul.f32 %v140, %v150
  %v212 = vmul.f32 %v141, %v150
  %v213 = vmul.f32 %v142, %v150
  %v214 = vmul.f32 %v143, %v150
  %v215 = vmul.f32 %v144, %v150
  %v216 = vld [vmem:[%s2] sm:$0x1]
  %v218 = vlaneseq
  %v219 = vshrl.u32 %v218, 7
  %v220 = vsub.s32 0, %v219
  %v221 = vrot.slane %v216, %v220
  %v223 = vadd.f32 %v152, %v221
  %v224 = vadd.f32 %v153, %v221
  %v225 = vadd.f32 %v154, %v221
  %v226 = vadd.f32 %v155, %v221
  %v227 = vadd.f32 %v156, %v221
  %v228 = vadd.f32 %v157, %v221
  %v229 = vadd.f32 %v158, %v221
  %v230 = vadd.f32 %v159, %v221
  %v231 = vadd.f32 %v160, %v221
  %v232 = vadd.f32 %v161, %v221
  %v233 = vadd.f32 %v162, %v221
  %v234 = vadd.f32 %v163, %v221
  %v235 = vadd.f32 %v164, %v221
  %v236 = vadd.f32 %v165, %v221
  %v237 = vadd.f32 %v166, %v221
  %v238 = vadd.f32 %v167, %v221
  %v239 = vadd.f32 %v168, %v221
  %v240 = vadd.f32 %v169, %v221
  %v241 = vadd.f32 %v170, %v221
  %v242 = vadd.f32 %v171, %v221
  %v243 = vadd.f32 %v172, %v221
  %v244 = vadd.f32 %v173, %v221
  %v245 = vadd.f32 %v174, %v221
  %v246 = vadd.f32 %v175, %v221
  %v247 = vadd.f32 %v176, %v221
  %v248 = vadd.f32 %v177, %v221
  %v249 = vadd.f32 %v178, %v221
  %v250 = vadd.f32 %v179, %v221
  %v251 = vadd.f32 %v180, %v221
  %v252 = vadd.f32 %v181, %v221
  %v253 = vadd.f32 %v182, %v221
  %v254 = vadd.f32 %v183, %v221
  %v255 = vadd.f32 %v184, %v221
  %v256 = vadd.f32 %v185, %v221
  %v257 = vadd.f32 %v186, %v221
  %v258 = vadd.f32 %v187, %v221
  %v259 = vadd.f32 %v188, %v221
  %v260 = vadd.f32 %v189, %v221
  %v261 = vadd.f32 %v190, %v221
  %v262 = vadd.f32 %v191, %v221
  %v263 = vadd.f32 %v192, %v221
  %v264 = vadd.f32 %v193, %v221
  %v265 = vadd.f32 %v194, %v221
  %v266 = vadd.f32 %v195, %v221
  %v267 = vadd.f32 %v196, %v221
  %v268 = vadd.f32 %v197, %v221
  %v269 = vadd.f32 %v198, %v221
  %v270 = vadd.f32 %v199, %v221
  %v271 = vadd.f32 %v200, %v221
  %v272 = vadd.f32 %v201, %v221
  %v273 = vadd.f32 %v202, %v221
  %v274 = vadd.f32 %v203, %v221
  %v275 = vadd.f32 %v204, %v221
  %v276 = vadd.f32 %v205, %v221
  %v277 = vadd.f32 %v206, %v221
  %v278 = vadd.f32 %v207, %v221
  %v279 = vadd.f32 %v208, %v221
  %v280 = vadd.f32 %v209, %v221
  %v281 = vadd.f32 %v210, %v221
  %v282 = vadd.f32 %v211, %v221
  %v283 = vadd.f32 %v212, %v221
  %v284 = vadd.f32 %v213, %v221
  %v285 = vadd.f32 %v214, %v221
  %v286 = vadd.f32 %v215, %v221
  %v287 = vld [vmem:[%s3] sm:$0xff]
  %v288 = vld [vmem:[%s3 + $0x8] sm:$0xff]
  %v289 = vld [vmem:[%s3 + $0x10] sm:$0xff]
  %v290 = vld [vmem:[%s3 + $0x18] sm:$0xff]
  %v291 = vld [vmem:[%s3 + $0x20] sm:$0xff]
  %v292 = vld [vmem:[%s3 + $0x28] sm:$0xff]
  %v293 = vld [vmem:[%s3 + $0x30] sm:$0xff]
  %v294 = vld [vmem:[%s3 + $0x38] sm:$0xff]
  %v295 = vld [vmem:[%s3 + $0x40] sm:$0xff]
  %v296 = vld [vmem:[%s3 + $0x48] sm:$0xff]
  %v297 = vld [vmem:[%s3 + $0x50] sm:$0xff]
  %v298 = vld [vmem:[%s3 + $0x58] sm:$0xff]
  %v299 = vld [vmem:[%s3 + $0x60] sm:$0xff]
  %v300 = vld [vmem:[%s3 + $0x68] sm:$0xff]
  %v301 = vld [vmem:[%s3 + $0x70] sm:$0xff]
  %v302 = vld [vmem:[%s3 + $0x78] sm:$0xff]
  %v303 = vld [vmem:[%s3 + $0x80] sm:$0xff]
  %v304 = vld [vmem:[%s3 + $0x88] sm:$0xff]
  %v305 = vld [vmem:[%s3 + $0x90] sm:$0xff]
  %v306 = vld [vmem:[%s3 + $0x98] sm:$0xff]
  %v307 = vld [vmem:[%s3 + $0xa0] sm:$0xff]
  %v308 = vld [vmem:[%s3 + $0xa8] sm:$0xff]
  %v309 = vld [vmem:[%s3 + $0xb0] sm:$0xff]
  %v310 = vld [vmem:[%s3 + $0xb8] sm:$0xff]
  %v311 = vld [vmem:[%s3 + $0xc0] sm:$0xff]
  %v312 = vld [vmem:[%s3 + $0xc8] sm:$0xff]
  %v313 = vld [vmem:[%s3 + $0xd0] sm:$0xff]
  %v314 = vld [vmem:[%s3 + $0xd8] sm:$0xff]
  %v315 = vld [vmem:[%s3 + $0xe0] sm:$0xff]
  %v316 = vld [vmem:[%s3 + $0xe8] sm:$0xff]
  %v317 = vld [vmem:[%s3 + $0xf0] sm:$0xff]
  %v318 = vld [vmem:[%s3 + $0xf8] sm:$0xff]
  %v319 = vld [vmem:[%s3 + $0x100] sm:$0xff]
  %v320 = vld [vmem:[%s3 + $0x108] sm:$0xff]
  %v321 = vld [vmem:[%s3 + $0x110] sm:$0xff]
  %v322 = vld [vmem:[%s3 + $0x118] sm:$0xff]
  %v323 = vld [vmem:[%s3 + $0x120] sm:$0xff]
  %v324 = vld [vmem:[%s3 + $0x128] sm:$0xff]
  %v325 = vld [vmem:[%s3 + $0x130] sm:$0xff]
  %v326 = vld [vmem:[%s3 + $0x138] sm:$0xff]
  %v327 = vld [vmem:[%s3 + $0x140] sm:$0xff]
  %v328 = vld [vmem:[%s3 + $0x148] sm:$0xff]
  %v329 = vld [vmem:[%s3 + $0x150] sm:$0xff]
  %v330 = vld [vmem:[%s3 + $0x158] sm:$0xff]
  %v331 = vld [vmem:[%s3 + $0x160] sm:$0xff]
  %v332 = vld [vmem:[%s3 + $0x168] sm:$0xff]
  %v333 = vld [vmem:[%s3 + $0x170] sm:$0xff]
  %v334 = vld [vmem:[%s3 + $0x178] sm:$0xff]
  %v335 = vld [vmem:[%s3 + $0x180] sm:$0xff]
  %v336 = vld [vmem:[%s3 + $0x188] sm:$0xff]
  %v337 = vld [vmem:[%s3 + $0x190] sm:$0xff]
  %v338 = vld [vmem:[%s3 + $0x198] sm:$0xff]
  %v339 = vld [vmem:[%s3 + $0x1a0] sm:$0xff]
  %v340 = vld [vmem:[%s3 + $0x1a8] sm:$0xff]
  %v341 = vld [vmem:[%s3 + $0x1b0] sm:$0xff]
  %v342 = vld [vmem:[%s3 + $0x1b8] sm:$0xff]
  %v343 = vld [vmem:[%s3 + $0x1c0] sm:$0xff]
  %v344 = vld [vmem:[%s3 + $0x1c8] sm:$0xff]
  %v345 = vld [vmem:[%s3 + $0x1d0] sm:$0xff]
  %v346 = vld [vmem:[%s3 + $0x1d8] sm:$0xff]
  %v347 = vld [vmem:[%s3 + $0x1e0] sm:$0xff]
  %v348 = vld [vmem:[%s3 + $0x1e8] sm:$0xff]
  %v349 = vld [vmem:[%s3 + $0x1f0] sm:$0xff]
  %v350 = vld [vmem:[%s3 + $0x1f8] sm:$0xff]
  %v351 = vadd.f32 %v223, %v287
  %v352 = vadd.f32 %v224, %v288
  %v353 = vadd.f32 %v225, %v289
  %v354 = vadd.f32 %v226, %v290
  %v355 = vadd.f32 %v227, %v291
  %v356 = vadd.f32 %v228, %v292
  %v357 = vadd.f32 %v229, %v293
  %v358 = vadd.f32 %v230, %v294
  %v359 = vadd.f32 %v231, %v295
  %v360 = vadd.f32 %v232, %v296
  %v361 = vadd.f32 %v233, %v297
  %v362 = vadd.f32 %v234, %v298
  %v363 = vadd.f32 %v235, %v299
  %v364 = vadd.f32 %v236, %v300
  %v365 = vadd.f32 %v237, %v301
  %v366 = vadd.f32 %v238, %v302
  %v367 = vadd.f32 %v239, %v303
  %v368 = vadd.f32 %v240, %v304
  %v369 = vadd.f32 %v241, %v305
  %v370 = vadd.f32 %v242, %v306
  %v371 = vadd.f32 %v243, %v307
  %v372 = vadd.f32 %v244, %v308
  %v373 = vadd.f32 %v245, %v309
  %v374 = vadd.f32 %v246, %v310
  %v375 = vadd.f32 %v247, %v311
  %v376 = vadd.f32 %v248, %v312
  %v377 = vadd.f32 %v249, %v313
  %v378 = vadd.f32 %v250, %v314
  %v379 = vadd.f32 %v251, %v315
  %v380 = vadd.f32 %v252, %v316
  %v381 = vadd.f32 %v253, %v317
  %v382 = vadd.f32 %v254, %v318
  %v383 = vadd.f32 %v255, %v319
  %v384 = vadd.f32 %v256, %v320
  %v385 = vadd.f32 %v257, %v321
  %v386 = vadd.f32 %v258, %v322
  %v387 = vadd.f32 %v259, %v323
  %v388 = vadd.f32 %v260, %v324
  %v389 = vadd.f32 %v261, %v325
  %v390 = vadd.f32 %v262, %v326
  %v391 = vadd.f32 %v263, %v327
  %v392 = vadd.f32 %v264, %v328
  %v393 = vadd.f32 %v265, %v329
  %v394 = vadd.f32 %v266, %v330
  %v395 = vadd.f32 %v267, %v331
  %v396 = vadd.f32 %v268, %v332
  %v397 = vadd.f32 %v269, %v333
  %v398 = vadd.f32 %v270, %v334
  %v399 = vadd.f32 %v271, %v335
  %v400 = vadd.f32 %v272, %v336
  %v401 = vadd.f32 %v273, %v337
  %v402 = vadd.f32 %v274, %v338
  %v403 = vadd.f32 %v275, %v339
  %v404 = vadd.f32 %v276, %v340
  %v405 = vadd.f32 %v277, %v341
  %v406 = vadd.f32 %v278, %v342
  %v407 = vadd.f32 %v279, %v343
  %v408 = vadd.f32 %v280, %v344
  %v409 = vadd.f32 %v281, %v345
  %v410 = vadd.f32 %v282, %v346
  %v411 = vadd.f32 %v283, %v347
  %v412 = vadd.f32 %v284, %v348
  %v413 = vadd.f32 %v285, %v349
  %v414 = vadd.f32 %v286, %v350
  %v415 = vmax.f32 %v351, 0.0
  %v416 = vmax.f32 %v352, 0.0
  %v417 = vmax.f32 %v353, 0.0
  %v418 = vmax.f32 %v354, 0.0
  %v419 = vmax.f32 %v355, 0.0
  %v420 = vmax.f32 %v356, 0.0
  %v421 = vmax.f32 %v357, 0.0
  %v422 = vmax.f32 %v358, 0.0
  %v423 = vmax.f32 %v359, 0.0
  %v424 = vmax.f32 %v360, 0.0
  %v425 = vmax.f32 %v361, 0.0
  %v426 = vmax.f32 %v362, 0.0
  %v427 = vmax.f32 %v363, 0.0
  %v428 = vmax.f32 %v364, 0.0
  %v429 = vmax.f32 %v365, 0.0
  %v430 = vmax.f32 %v366, 0.0
  %v431 = vmax.f32 %v367, 0.0
  %v432 = vmax.f32 %v368, 0.0
  %v433 = vmax.f32 %v369, 0.0
  %v434 = vmax.f32 %v370, 0.0
  %v435 = vmax.f32 %v371, 0.0
  %v436 = vmax.f32 %v372, 0.0
  %v437 = vmax.f32 %v373, 0.0
  %v438 = vmax.f32 %v374, 0.0
  %v439 = vmax.f32 %v375, 0.0
  %v440 = vmax.f32 %v376, 0.0
  %v441 = vmax.f32 %v377, 0.0
  %v442 = vmax.f32 %v378, 0.0
  %v443 = vmax.f32 %v379, 0.0
  %v444 = vmax.f32 %v380, 0.0
  %v445 = vmax.f32 %v381, 0.0
  %v446 = vmax.f32 %v382, 0.0
  %v447 = vmax.f32 %v383, 0.0
  %v448 = vmax.f32 %v384, 0.0
  %v449 = vmax.f32 %v385, 0.0
  %v450 = vmax.f32 %v386, 0.0
  %v451 = vmax.f32 %v387, 0.0
  %v452 = vmax.f32 %v388, 0.0
  %v453 = vmax.f32 %v389, 0.0
  %v454 = vmax.f32 %v390, 0.0
  %v455 = vmax.f32 %v391, 0.0
  %v456 = vmax.f32 %v392, 0.0
  %v457 = vmax.f32 %v393, 0.0
  %v458 = vmax.f32 %v394, 0.0
  %v459 = vmax.f32 %v395, 0.0
  %v460 = vmax.f32 %v396, 0.0
  %v461 = vmax.f32 %v397, 0.0
  %v462 = vmax.f32 %v398, 0.0
  %v463 = vmax.f32 %v399, 0.0
  %v464 = vmax.f32 %v400, 0.0
  %v465 = vmax.f32 %v401, 0.0
  %v466 = vmax.f32 %v402, 0.0
  %v467 = vmax.f32 %v403, 0.0
  %v468 = vmax.f32 %v404, 0.0
  %v469 = vmax.f32 %v405, 0.0
  %v470 = vmax.f32 %v406, 0.0
  %v471 = vmax.f32 %v407, 0.0
  %v472 = vmax.f32 %v408, 0.0
  %v473 = vmax.f32 %v409, 0.0
  %v474 = vmax.f32 %v410, 0.0
  %v475 = vmax.f32 %v411, 0.0
  %v476 = vmax.f32 %v412, 0.0
  %v477 = vmax.f32 %v413, 0.0
  %v478 = vmax.f32 %v414, 0.0
  %479 = vst [vmem:[%s4] sm:$0xff] %v415
  %480 = vst [vmem:[%s4 + $0x8] sm:$0xff] %v416
  %481 = vst [vmem:[%s4 + $0x10] sm:$0xff] %v417
  %482 = vst [vmem:[%s4 + $0x18] sm:$0xff] %v418
  %483 = vst [vmem:[%s4 + $0x20] sm:$0xff] %v419
  %484 = vst [vmem:[%s4 + $0x28] sm:$0xff] %v420
  %485 = vst [vmem:[%s4 + $0x30] sm:$0xff] %v421
  %486 = vst [vmem:[%s4 + $0x38] sm:$0xff] %v422
  %487 = vst [vmem:[%s4 + $0x40] sm:$0xff] %v423
  %488 = vst [vmem:[%s4 + $0x48] sm:$0xff] %v424
  %489 = vst [vmem:[%s4 + $0x50] sm:$0xff] %v425
  %490 = vst [vmem:[%s4 + $0x58] sm:$0xff] %v426
  %491 = vst [vmem:[%s4 + $0x60] sm:$0xff] %v427
  %492 = vst [vmem:[%s4 + $0x68] sm:$0xff] %v428
  %493 = vst [vmem:[%s4 + $0x70] sm:$0xff] %v429
  %494 = vst [vmem:[%s4 + $0x78] sm:$0xff] %v430
  %495 = vst [vmem:[%s4 + $0x80] sm:$0xff] %v431
  %496 = vst [vmem:[%s4 + $0x88] sm:$0xff] %v432
  %497 = vst [vmem:[%s4 + $0x90] sm:$0xff] %v433
  %498 = vst [vmem:[%s4 + $0x98] sm:$0xff] %v434
  %499 = vst [vmem:[%s4 + $0xa0] sm:$0xff] %v435
  %500 = vst [vmem:[%s4 + $0xa8] sm:$0xff] %v436
  %501 = vst [vmem:[%s4 + $0xb0] sm:$0xff] %v437
  %502 = vst [vmem:[%s4 + $0xb8] sm:$0xff] %v438
  %503 = vst [vmem:[%s4 + $0xc0] sm:$0xff] %v439
  %504 = vst [vmem:[%s4 + $0xc8] sm:$0xff] %v440
  %505 = vst [vmem:[%s4 + $0xd0] sm:$0xff] %v441
  %506 = vst [vmem:[%s4 + $0xd8] sm:$0xff] %v442
  %507 = vst [vmem:[%s4 + $0xe0] sm:$0xff] %v443
  %508 = vst [vmem:[%s4 + $0xe8] sm:$0xff] %v444
  %509 = vst [vmem:[%s4 + $0xf0] sm:$0xff] %v445
  %510 = vst [vmem:[%s4 + $0xf8] sm:$0xff] %v446
  %511 = vst [vmem:[%s4 + $0x100] sm:$0xff] %v447
  %512 = vst [vmem:[%s4 + $0x108] sm:$0xff] %v448
  %513 = vst [vmem:[%s4 + $0x110] sm:$0xff] %v449
  %514 = vst [vmem:[%s4 + $0x118] sm:$0xff] %v450
  %515 = vst [vmem:[%s4 + $0x120] sm:$0xff] %v451
  %516 = vst [vmem:[%s4 + $0x128] sm:$0xff] %v452
  %517 = vst [vmem:[%s4 + $0x130] sm:$0xff] %v453
  %518 = vst [vmem:[%s4 + $0x138] sm:$0xff] %v454
  %519 = vst [vmem:[%s4 + $0x140] sm:$0xff] %v455
  %520 = vst [vmem:[%s4 + $0x148] sm:$0xff] %v456
  %521 = vst [vmem:[%s4 + $0x150] sm:$0xff] %v457
  %522 = vst [vmem:[%s4 + $0x158] sm:$0xff] %v458
  %523 = vst [vmem:[%s4 + $0x160] sm:$0xff] %v459
  %524 = vst [vmem:[%s4 + $0x168] sm:$0xff] %v460
  %525 = vst [vmem:[%s4 + $0x170] sm:$0xff] %v461
  %526 = vst [vmem:[%s4 + $0x178] sm:$0xff] %v462
  %527 = vst [vmem:[%s4 + $0x180] sm:$0xff] %v463
  %528 = vst [vmem:[%s4 + $0x188] sm:$0xff] %v464
  %529 = vst [vmem:[%s4 + $0x190] sm:$0xff] %v465
  %530 = vst [vmem:[%s4 + $0x198] sm:$0xff] %v466
  %531 = vst [vmem:[%s4 + $0x1a0] sm:$0xff] %v467
  %532 = vst [vmem:[%s4 + $0x1a8] sm:$0xff] %v468
  %533 = vst [vmem:[%s4 + $0x1b0] sm:$0xff] %v469
  %534 = vst [vmem:[%s4 + $0x1b8] sm:$0xff] %v470
  %535 = vst [vmem:[%s4 + $0x1c0] sm:$0xff] %v471
  %536 = vst [vmem:[%s4 + $0x1c8] sm:$0xff] %v472
  %537 = vst [vmem:[%s4 + $0x1d0] sm:$0xff] %v473
  %538 = vst [vmem:[%s4 + $0x1d8] sm:$0xff] %v474
  %539 = vst [vmem:[%s4 + $0x1e0] sm:$0xff] %v475
  %540 = vst [vmem:[%s4 + $0x1e8] sm:$0xff] %v476
  %541 = vst [vmem:[%s4 + $0x1f0] sm:$0xff] %v477
  %542 = vst [vmem:[%s4 + $0x1f8] sm:$0xff] %v478
  // Predicated region
  $region18: #{bottleneck_forward.7} parent=0 // pred_check
    _
  $region19: #{bottleneck_forward.7} parent=0 // pred_check_branch
    %544 = sbr.rel (0) target = $region21
  $region20: #{bottleneck_forward.7} parent=0 // pred_region
    _
  $region21: #{bottleneck_forward.7} parent=0 // pred_fallthru
    _
  // Predicated region
  $region22: #{bottleneck_forward.7} parent=0 // pred_check
    _
  $region23: #{bottleneck_forward.7} parent=0 // pred_check_branch
    %546 = sbr.rel (0) target = $region25
  $region24: #{bottleneck_forward.7} parent=0 // pred_region
    _
  $region25: #{bottleneck_forward.7} parent=0 // pred_fallthru
    _

// kernel: bottleneck_forward.6
$region0: #{bottleneck_forward.6}
  #allocation0 [shape = 'u32[]', space=smem, size = 0x4, offset = 0x4, fixed_abs, tag = 'smem constant byte address 0x4 - core index']
  #allocation1 [shape = 'u32[144,128]{1,0:T(1,128)}', space=vmem, size = 0x12000, scoped, tag = 'internal scratch']
  %s0 = inlined_call_operand.vmem [shape: bf16[512,128], index: 0, kind: input, shape index: {}]
  %s1 = inlined_call_operand.vmem [shape: f32[1,128], index: 1, kind: input, shape index: {}]
  %s2 = inlined_call_operand.vmem [shape: f32[1,128], index: 2, kind: input, shape index: {}]
  %s3 = inlined_call_operand.vmem [shape: bf16[128,128], index: 3, kind: input, shape index: {}]
  %s4 = inlined_call_operand.vmem [shape: bf16[512,128], index: 4, kind: output, shape index: {0}]
  %s5 = inlined_call_operand.vmem [shape: f32[1,2,128], index: 5, kind: output, shape index: {1}]
  %6 = xla_tuple %s4, %s5
  %s7 = sld [smem:[#allocation0]]
  $region34: #{bottleneck_forward.6} parent=0
    _
  %s9 = ssub.s32 1, %s7
  %s10 = scalar_select 0, %s9, %s7
  // Predicated region
  $region2: #{bottleneck_forward.6} parent=0 // pred_check
    _
  $region3: #{bottleneck_forward.6} parent=0 // pred_check_branch
    %12 = sbr.rel (0) target = $region5
  $region4: #{bottleneck_forward.6} parent=0 // pred_region
    _
  $region5: #{bottleneck_forward.6} parent=0 // pred_fallthru
    _
  // Predicated region
  $region6: #{bottleneck_forward.6} parent=0 // pred_check
    _
  $region7: #{bottleneck_forward.6} parent=0 // pred_check_branch
    %14 = sbr.rel (0) target = $region9
  $region8: #{bottleneck_forward.6} parent=0 // pred_region
    _
  $region9: #{bottleneck_forward.6} parent=0 // pred_fallthru
    _
  // Predicated region
  $region10: #{bottleneck_forward.6} parent=0 // pred_check
    _
  $region11: #{bottleneck_forward.6} parent=0 // pred_check_branch
    %16 = sbr.rel (0) target = $region13
  $region12: #{bottleneck_forward.6} parent=0 // pred_region
    _
  $region13: #{bottleneck_forward.6} parent=0 // pred_fallthru
    _
  // Predicated region
  $region14: #{bottleneck_forward.6} parent=0 // pred_check
    _
  $region15: #{bottleneck_forward.6} parent=0 // pred_check_branch
    %18 = sbr.rel (0) target = $region17
  $region16: #{bottleneck_forward.6} parent=0 // pred_region
    _
  $region17: #{bottleneck_forward.6} parent=0 // pred_fallthru
    _
  %v20 = vld [vmem:[%s0] sm:$0xf]
  %v21 = vld [vmem:[%s0 + $0x4] sm:$0xf]
  %v22 = vld [vmem:[%s0 + $0x8] sm:$0xf]
  %v23 = vld [vmem:[%s0 + $0xc] sm:$0xf]
  %v24 = vld [vmem:[%s0 + $0x10] sm:$0xf]
  %v25 = vld [vmem:[%s0 + $0x14] sm:$0xf]
  %v26 = vld [vmem:[%s0 + $0x18] sm:$0xf]
  %v27 = vld [vmem:[%s0 + $0x1c] sm:$0xf]
  %v28 = vld [vmem:[%s0 + $0x20] sm:$0xf]
  %v29 = vld [vmem:[%s0 + $0x24] sm:$0xf]
  %v30 = vld [vmem:[%s0 + $0x28] sm:$0xf]
  %v31 = vld [vmem:[%s0 + $0x2c] sm:$0xf]
  %v32 = vld [vmem:[%s0 + $0x30] sm:$0xf]
  %v33 = vld [vmem:[%s0 + $0x34] sm:$0xf]
  %v34 = vld [vmem:[%s0 + $0x38] sm:$0xf]
  %v35 = vld [vmem:[%s0 + $0x3c] sm:$0xf]
  %v36 = vld [vmem:[%s0 + $0x40] sm:$0xf]
  %v37 = vld [vmem:[%s0 + $0x44] sm:$0xf]
  %v38 = vld [vmem:[%s0 + $0x48] sm:$0xf]
  %v39 = vld [vmem:[%s0 + $0x4c] sm:$0xf]
  %v40 = vld [vmem:[%s0 + $0x50] sm:$0xf]
  %v41 = vld [vmem:[%s0 + $0x54] sm:$0xf]
  %v42 = vld [vmem:[%s0 + $0x58] sm:$0xf]
  %v43 = vld [vmem:[%s0 + $0x5c] sm:$0xf]
  %v44 = vld [vmem:[%s0 + $0x60] sm:$0xf]
  %v45 = vld [vmem:[%s0 + $0x64] sm:$0xf]
  %v46 = vld [vmem:[%s0 + $0x68] sm:$0xf]
  %v47 = vld [vmem:[%s0 + $0x6c] sm:$0xf]
  %v48 = vld [vmem:[%s0 + $0x70] sm:$0xf]
  %v49 = vld [vmem:[%s0 + $0x74] sm:$0xf]
  %v50 = vld [vmem:[%s0 + $0x78] sm:$0xf]
  %v51 = vld [vmem:[%s0 + $0x7c] sm:$0xf]
  %v52 = vld [vmem:[%s0 + $0x80] sm:$0xf]
  %v53 = vld [vmem:[%s0 + $0x84] sm:$0xf]
  %v54 = vld [vmem:[%s0 + $0x88] sm:$0xf]
  %v55 = vld [vmem:[%s0 + $0x8c] sm:$0xf]
  %v56 = vld [vmem:[%s0 + $0x90] sm:$0xf]
  %v57 = vld [vmem:[%s0 + $0x94] sm:$0xf]
  %v58 = vld [vmem:[%s0 + $0x98] sm:$0xf]
  %v59 = vld [vmem:[%s0 + $0x9c] sm:$0xf]
  %v60 = vld [vmem:[%s0 + $0xa0] sm:$0xf]
  %v61 = vld [vmem:[%s0 + $0xa4] sm:$0xf]
  %v62 = vld [vmem:[%s0 + $0xa8] sm:$0xf]
  %v63 = vld [vmem:[%s0 + $0xac] sm:$0xf]
  %v64 = vld [vmem:[%s0 + $0xb0] sm:$0xf]
  %v65 = vld [vmem:[%s0 + $0xb4] sm:$0xf]
  %v66 = vld [vmem:[%s0 + $0xb8] sm:$0xf]
  %v67 = vld [vmem:[%s0 + $0xbc] sm:$0xf]
  %v68 = vld [vmem:[%s0 + $0xc0] sm:$0xf]
  %v69 = vld [vmem:[%s0 + $0xc4] sm:$0xf]
  %v70 = vld [vmem:[%s0 + $0xc8] sm:$0xf]
  %v71 = vld [vmem:[%s0 + $0xcc] sm:$0xf]
  %v72 = vld [vmem:[%s0 + $0xd0] sm:$0xf]
  %v73 = vld [vmem:[%s0 + $0xd4] sm:$0xf]
  %v74 = vld [vmem:[%s0 + $0xd8] sm:$0xf]
  %v75 = vld [vmem:[%s0 + $0xdc] sm:$0xf]
  %v76 = vld [vmem:[%s0 + $0xe0] sm:$0xf]
  %v77 = vld [vmem:[%s0 + $0xe4] sm:$0xf]
  %v78 = vld [vmem:[%s0 + $0xe8] sm:$0xf]
  %v79 = vld [vmem:[%s0 + $0xec] sm:$0xf]
  %v80 = vld [vmem:[%s0 + $0xf0] sm:$0xf]
  %v81 = vld [vmem:[%s0 + $0xf4] sm:$0xf]
  %v82 = vld [vmem:[%s0 + $0xf8] sm:$0xf]
  %v83 = vld [vmem:[%s0 + $0xfc] sm:$0xf]
  %v84 = vunpack.c.l.bf16 %v20
  %v85 = vunpack.c.l.bf16 %v21
  %v86 = vunpack.c.l.bf16 %v22
  %v87 = vunpack.c.l.bf16 %v23
  %v88 = vunpack.c.l.bf16 %v24
  %v89 = vunpack.c.l.bf16 %v25
  %v90 = vunpack.c.l.bf16 %v26
  %v91 = vunpack.c.l.bf16 %v27
  %v92 = vunpack.c.l.bf16 %v28
  %v93 = vunpack.c.l.bf16 %v29
  %v94 = vunpack.c.l.bf16 %v30
  %v95 = vunpack.c.l.bf16 %v31
  %v96 = vunpack.c.l.bf16 %v32
  %v97 = vunpack.c.l.bf16 %v33
  %v98 = vunpack.c.l.bf16 %v34
  %v99 = vunpack.c.l.bf16 %v35
  %v100 = vunpack.c.l.bf16 %v36
  %v101 = vunpack.c.l.bf16 %v37
  %v102 = vunpack.c.l.bf16 %v38
  %v103 = vunpack.c.l.bf16 %v39
  %v104 = vunpack.c.l.bf16 %v40
  %v105 = vunpack.c.l.bf16 %v41
  %v106 = vunpack.c.l.bf16 %v42
  %v107 = vunpack.c.l.bf16 %v43
  %v108 = vunpack.c.l.bf16 %v44
  %v109 = vunpack.c.l.bf16 %v45
  %v110 = vunpack.c.l.bf16 %v46
  %v111 = vunpack.c.l.bf16 %v47
  %v112 = vunpack.c.l.bf16 %v48
  %v113 = vunpack.c.l.bf16 %v49
  %v114 = vunpack.c.l.bf16 %v50
  %v115 = vunpack.c.l.bf16 %v51
  %v116 = vunpack.c.l.bf16 %v52
  %v117 = vunpack.c.l.bf16 %v53
  %v118 = vunpack.c.l.bf16 %v54
  %v119 = vunpack.c.l.bf16 %v55
  %v120 = vunpack.c.l.bf16 %v56
  %v121 = vunpack.c.l.bf16 %v57
  %v122 = vunpack.c.l.bf16 %v58
  %v123 = vunpack.c.l.bf16 %v59
  %v124 = vunpack.c.l.bf16 %v60
  %v125 = vunpack.c.l.bf16 %v61
  %v126 = vunpack.c.l.bf16 %v62
  %v127 = vunpack.c.l.bf16 %v63
  %v128 = vunpack.c.l.bf16 %v64
  %v129 = vunpack.c.l.bf16 %v65
  %v130 = vunpack.c.l.bf16 %v66
  %v131 = vunpack.c.l.bf16 %v67
  %v132 = vunpack.c.l.bf16 %v68
  %v133 = vunpack.c.l.bf16 %v69
  %v134 = vunpack.c.l.bf16 %v70
  %v135 = vunpack.c.l.bf16 %v71
  %v136 = vunpack.c.l.bf16 %v72
  %v137 = vunpack.c.l.bf16 %v73
  %v138 = vunpack.c.l.bf16 %v74
  %v139 = vunpack.c.l.bf16 %v75
  %v140 = vunpack.c.l.bf16 %v76
  %v141 = vunpack.c.l.bf16 %v77
  %v142 = vunpack.c.l.bf16 %v78
  %v143 = vunpack.c.l.bf16 %v79
  %v144 = vunpack.c.l.bf16 %v80
  %v145 = vunpack.c.l.bf16 %v81
  %v146 = vunpack.c.l.bf16 %v82
  %v147 = vunpack.c.l.bf16 %v83
  %v148 = vld [vmem:[%s1] sm:$0x1]
  %v150 = vlaneseq
  %v151 = vshrl.u32 %v150, 7
  %v152 = vsub.s32 0, %v151
  %v153 = vrot.slane %v148, %v152
  %v155 = vmul.f32 %v84, %v153
  %v156 = vmul.f32 %v85, %v153
  %v157 = vmul.f32 %v86, %v153
  %v158 = vmul.f32 %v87, %v153
  %v159 = vmul.f32 %v88, %v153
  %v160 = vmul.f32 %v89, %v153
  %v161 = vmul.f32 %v90, %v153
  %v162 = vmul.f32 %v91, %v153
  %v163 = vmul.f32 %v92, %v153
  %v164 = vmul.f32 %v93, %v153
  %v165 = vmul.f32 %v94, %v153
  %v166 = vmul.f32 %v95, %v153
  %v167 = vmul.f32 %v96, %v153
  %v168 = vmul.f32 %v97, %v153
  %v169 = vmul.f32 %v98, %v153
  %v170 = vmul.f32 %v99, %v153
  %v171 = vmul.f32 %v100, %v153
  %v172 = vmul.f32 %v101, %v153
  %v173 = vmul.f32 %v102, %v153
  %v174 = vmul.f32 %v103, %v153
  %v175 = vmul.f32 %v104, %v153
  %v176 = vmul.f32 %v105, %v153
  %v177 = vmul.f32 %v106, %v153
  %v178 = vmul.f32 %v107, %v153
  %v179 = vmul.f32 %v108, %v153
  %v180 = vmul.f32 %v109, %v153
  %v181 = vmul.f32 %v110, %v153
  %v182 = vmul.f32 %v111, %v153
  %v183 = vmul.f32 %v112, %v153
  %v184 = vmul.f32 %v113, %v153
  %v185 = vmul.f32 %v114, %v153
  %v186 = vmul.f32 %v115, %v153
  %v187 = vmul.f32 %v116, %v153
  %v188 = vmul.f32 %v117, %v153
  %v189 = vmul.f32 %v118, %v153
  %v190 = vmul.f32 %v119, %v153
  %v191 = vmul.f32 %v120, %v153
  %v192 = vmul.f32 %v121, %v153
  %v193 = vmul.f32 %v122, %v153
  %v194 = vmul.f32 %v123, %v153
  %v195 = vmul.f32 %v124, %v153
  %v196 = vmul.f32 %v125, %v153
  %v197 = vmul.f32 %v126, %v153
  %v198 = vmul.f32 %v127, %v153
  %v199 = vmul.f32 %v128, %v153
  %v200 = vmul.f32 %v129, %v153
  %v201 = vmul.f32 %v130, %v153
  %v202 = vmul.f32 %v131, %v153
  %v203 = vmul.f32 %v132, %v153
  %v204 = vmul.f32 %v133, %v153
  %v205 = vmul.f32 %v134, %v153
  %v206 = vmul.f32 %v135, %v153
  %v207 = vmul.f32 %v136, %v153
  %v208 = vmul.f32 %v137, %v153
  %v209 = vmul.f32 %v138, %v153
  %v210 = vmul.f32 %v139, %v153
  %v211 = vmul.f32 %v140, %v153
  %v212 = vmul.f32 %v141, %v153
  %v213 = vmul.f32 %v142, %v153
  %v214 = vmul.f32 %v143, %v153
  %v215 = vmul.f32 %v144, %v153
  %v216 = vmul.f32 %v145, %v153
  %v217 = vmul.f32 %v146, %v153
  %v218 = vmul.f32 %v147, %v153
  %v219 = vld [vmem:[%s2] sm:$0x1]
  %v221 = vlaneseq
  %v222 = vshrl.u32 %v221, 7
  %v223 = vsub.s32 0, %v222
  %v224 = vrot.slane %v219, %v223
  %v226 = vadd.f32 %v155, %v224
  %v227 = vadd.f32 %v156, %v224
  %v228 = vadd.f32 %v157, %v224
  %v229 = vadd.f32 %v158, %v224
  %v230 = vadd.f32 %v159, %v224
  %v231 = vadd.f32 %v160, %v224
  %v232 = vadd.f32 %v161, %v224
  %v233 = vadd.f32 %v162, %v224
  %v234 = vadd.f32 %v163, %v224
  %v235 = vadd.f32 %v164, %v224
  %v236 = vadd.f32 %v165, %v224
  %v237 = vadd.f32 %v166, %v224
  %v238 = vadd.f32 %v167, %v224
  %v239 = vadd.f32 %v168, %v224
  %v240 = vadd.f32 %v169, %v224
  %v241 = vadd.f32 %v170, %v224
  %v242 = vadd.f32 %v171, %v224
  %v243 = vadd.f32 %v172, %v224
  %v244 = vadd.f32 %v173, %v224
  %v245 = vadd.f32 %v174, %v224
  %v246 = vadd.f32 %v175, %v224
  %v247 = vadd.f32 %v176, %v224
  %v248 = vadd.f32 %v177, %v224
  %v249 = vadd.f32 %v178, %v224
  %v250 = vadd.f32 %v179, %v224
  %v251 = vadd.f32 %v180, %v224
  %v252 = vadd.f32 %v181, %v224
  %v253 = vadd.f32 %v182, %v224
  %v254 = vadd.f32 %v183, %v224
  %v255 = vadd.f32 %v184, %v224
  %v256 = vadd.f32 %v185, %v224
  %v257 = vadd.f32 %v186, %v224
  %v258 = vadd.f32 %v187, %v224
  %v259 = vadd.f32 %v188, %v224
  %v260 = vadd.f32 %v189, %v224
  %v261 = vadd.f32 %v190, %v224
  %v262 = vadd.f32 %v191, %v224
  %v263 = vadd.f32 %v192, %v224
  %v264 = vadd.f32 %v193, %v224
  %v265 = vadd.f32 %v194, %v224
  %v266 = vadd.f32 %v195, %v224
  %v267 = vadd.f32 %v196, %v224
  %v268 = vadd.f32 %v197, %v224
  %v269 = vadd.f32 %v198, %v224
  %v270 = vadd.f32 %v199, %v224
  %v271 = vadd.f32 %v200, %v224
  %v272 = vadd.f32 %v201, %v224
  %v273 = vadd.f32 %v202, %v224
  %v274 = vadd.f32 %v203, %v224
  %v275 = vadd.f32 %v204, %v224
  %v276 = vadd.f32 %v205, %v224
  %v277 = vadd.f32 %v206, %v224
  %v278 = vadd.f32 %v207, %v224
  %v279 = vadd.f32 %v208, %v224
  %v280 = vadd.f32 %v209, %v224
  %v281 = vadd.f32 %v210, %v224
  %v282 = vadd.f32 %v211, %v224
  %v283 = vadd.f32 %v212, %v224
  %v284 = vadd.f32 %v213, %v224
  %v285 = vadd.f32 %v214, %v224
  %v286 = vadd.f32 %v215, %v224
  %v287 = vadd.f32 %v216, %v224
  %v288 = vadd.f32 %v217, %v224
  %v289 = vadd.f32 %v218, %v224
  %v290 = vmax.f32 %v226, 0.0
  %v291 = vmax.f32 %v227, 0.0
  %v292 = vmax.f32 %v228, 0.0
  %v293 = vmax.f32 %v229, 0.0
  %v294 = vmax.f32 %v230, 0.0
  %v295 = vmax.f32 %v231, 0.0
  %v296 = vmax.f32 %v232, 0.0
  %v297 = vmax.f32 %v233, 0.0
  %v298 = vmax.f32 %v234, 0.0
  %v299 = vmax.f32 %v235, 0.0
  %v300 = vmax.f32 %v236, 0.0
  %v301 = vmax.f32 %v237, 0.0
  %v302 = vmax.f32 %v238, 0.0
  %v303 = vmax.f32 %v239, 0.0
  %v304 = vmax.f32 %v240, 0.0
  %v305 = vmax.f32 %v241, 0.0
  %v306 = vmax.f32 %v242, 0.0
  %v307 = vmax.f32 %v243, 0.0
  %v308 = vmax.f32 %v244, 0.0
  %v309 = vmax.f32 %v245, 0.0
  %v310 = vmax.f32 %v246, 0.0
  %v311 = vmax.f32 %v247, 0.0
  %v312 = vmax.f32 %v248, 0.0
  %v313 = vmax.f32 %v249, 0.0
  %v314 = vmax.f32 %v250, 0.0
  %v315 = vmax.f32 %v251, 0.0
  %v316 = vmax.f32 %v252, 0.0
  %v317 = vmax.f32 %v253, 0.0
  %v318 = vmax.f32 %v254, 0.0
  %v319 = vmax.f32 %v255, 0.0
  %v320 = vmax.f32 %v256, 0.0
  %v321 = vmax.f32 %v257, 0.0
  %v322 = vmax.f32 %v258, 0.0
  %v323 = vmax.f32 %v259, 0.0
  %v324 = vmax.f32 %v260, 0.0
  %v325 = vmax.f32 %v261, 0.0
  %v326 = vmax.f32 %v262, 0.0
  %v327 = vmax.f32 %v263, 0.0
  %v328 = vmax.f32 %v264, 0.0
  %v329 = vmax.f32 %v265, 0.0
  %v330 = vmax.f32 %v266, 0.0
  %v331 = vmax.f32 %v267, 0.0
  %v332 = vmax.f32 %v268, 0.0
  %v333 = vmax.f32 %v269, 0.0
  %v334 = vmax.f32 %v270, 0.0
  %v335 = vmax.f32 %v271, 0.0
  %v336 = vmax.f32 %v272, 0.0
  %v337 = vmax.f32 %v273, 0.0
  %v338 = vmax.f32 %v274, 0.0
  %v339 = vmax.f32 %v275, 0.0
  %v340 = vmax.f32 %v276, 0.0
  %v341 = vmax.f32 %v277, 0.0
  %v342 = vmax.f32 %v278, 0.0
  %v343 = vmax.f32 %v279, 0.0
  %v344 = vmax.f32 %v280, 0.0
  %v345 = vmax.f32 %v281, 0.0
  %v346 = vmax.f32 %v282, 0.0
  %v347 = vmax.f32 %v283, 0.0
  %v348 = vmax.f32 %v284, 0.0
  %v349 = vmax.f32 %v285, 0.0
  %v350 = vmax.f32 %v286, 0.0
  %v351 = vmax.f32 %v287, 0.0
  %v352 = vmax.f32 %v288, 0.0
  %v353 = vmax.f32 %v289, 0.0
  %v354 = vpack.c.bf16 %v291, %v290
  %v355 = vpack.c.bf16 %v293, %v292
  %v356 = vpack.c.bf16 %v295, %v294
  %v357 = vpack.c.bf16 %v297, %v296
  %v358 = vpack.c.bf16 %v299, %v298
  %v359 = vpack.c.bf16 %v301, %v300
  %v360 = vpack.c.bf16 %v303, %v302
  %v361 = vpack.c.bf16 %v305, %v304
  %v362 = vpack.c.bf16 %v307, %v306
  %v363 = vpack.c.bf16 %v309, %v308
  %v364 = vpack.c.bf16 %v311, %v310
  %v365 = vpack.c.bf16 %v313, %v312
  %v366 = vpack.c.bf16 %v315, %v314
  %v367 = vpack.c.bf16 %v317, %v316
  %v368 = vpack.c.bf16 %v319, %v318
  %v369 = vpack.c.bf16 %v321, %v320
  %v370 = vpack.c.bf16 %v323, %v322
  %v371 = vpack.c.bf16 %v325, %v324
  %v372 = vpack.c.bf16 %v327, %v326
  %v373 = vpack.c.bf16 %v329, %v328
  %v374 = vpack.c.bf16 %v331, %v330
  %v375 = vpack.c.bf16 %v333, %v332
  %v376 = vpack.c.bf16 %v335, %v334
  %v377 = vpack.c.bf16 %v337, %v336
  %v378 = vpack.c.bf16 %v339, %v338
  %v379 = vpack.c.bf16 %v341, %v340
  %v380 = vpack.c.bf16 %v343, %v342
  %v381 = vpack.c.bf16 %v345, %v344
  %v382 = vpack.c.bf16 %v347, %v346
  %v383 = vpack.c.bf16 %v349, %v348
  %v384 = vpack.c.bf16 %v351, %v350
  %v385 = vpack.c.bf16 %v353, %v352
  %v386 = vld [vmem:[%s3] sm:$0xf]
  %v387 = vld [vmem:[%s3 + $0x4] sm:$0xf]
  %v388 = vld [vmem:[%s3 + $0x8] sm:$0xf]
  %v389 = vld [vmem:[%s3 + $0xc] sm:$0xf]
  %v390 = vld [vmem:[%s3 + $0x10] sm:$0xf]
  %v391 = vld [vmem:[%s3 + $0x14] sm:$0xf]
  %v392 = vld [vmem:[%s3 + $0x18] sm:$0xf]
  %v393 = vld [vmem:[%s3 + $0x1c] sm:$0xf]
  %v394 = vld [vmem:[%s3 + $0x20] sm:$0xf]
  %v395 = vld [vmem:[%s3 + $0x24] sm:$0xf]
  %v396 = vld [vmem:[%s3 + $0x28] sm:$0xf]
  %v397 = vld [vmem:[%s3 + $0x2c] sm:$0xf]
  %v398 = vld [vmem:[%s3 + $0x30] sm:$0xf]
  %v399 = vld [vmem:[%s3 + $0x34] sm:$0xf]
  %v400 = vld [vmem:[%s3 + $0x38] sm:$0xf]
  %v401 = vld [vmem:[%s3 + $0x3c] sm:$0xf]
  %v418 = vunpack.c.l.b16 %v386
  %v419 = vunpack.c.l.b16 %v387
  %v420 = vunpack.c.l.b16 %v388
  %v421 = vunpack.c.l.b16 %v389
  %v422 = vunpack.c.l.b16 %v390
  %v423 = vunpack.c.l.b16 %v391
  %v424 = vunpack.c.l.b16 %v392
  %v425 = vunpack.c.l.b16 %v393
  %v426 = vunpack.c.l.b16 %v394
  %v427 = vunpack.c.l.b16 %v395
  %v428 = vunpack.c.l.b16 %v396
  %v429 = vunpack.c.l.b16 %v397
  %v430 = vunpack.c.l.b16 %v398
  %v431 = vunpack.c.l.b16 %v399
  %v432 = vunpack.c.l.b16 %v400
  %v433 = vunpack.c.l.b16 %v401
  %v434 = vpack.c.b16 %v419, %v418
  %v435 = vpack.c.b16 %v421, %v420
  %v436 = vpack.c.b16 %v423, %v422
  %v437 = vpack.c.b16 %v425, %v424
  %v438 = vpack.c.b16 %v427, %v426
  %v439 = vpack.c.b16 %v429, %v428
  %v440 = vpack.c.b16 %v431, %v430
  %v441 = vpack.c.b16 %v433, %v432
  %450 = vmatprep.subr.bf16.mxu0 0
  %451 = vmatpush1.bf16.msra.mxu0 %v434
  %452 = vmatprep.subr.bf16.mxu0 0
  %453 = vmatpush1.bf16.msra.mxu0 %v435
  %454 = vmatprep.subr.bf16.mxu0 0
  %455 = vmatpush1.bf16.msra.mxu0 %v436
  %456 = vmatprep.subr.bf16.mxu0 0
  %457 = vmatpush1.bf16.msra.mxu0 %v437
  %458 = vmatprep.subr.bf16.mxu0 0
  %459 = vmatpush1.bf16.msra.mxu0 %v438
  %460 = vmatprep.subr.bf16.mxu0 0
  %461 = vmatpush1.bf16.msra.mxu0 %v439
  %462 = vmatprep.subr.bf16.mxu0 0
  %463 = vmatpush1.bf16.msra.mxu0 %v440
  %464 = vmatprep.subr.bf16.mxu0 0
  %465 = vmatpush1.bf16.msra.mxu0 %v441
  %466 = vmatprep.subr.bf16.mxu0 0
  %467 = vmatpush1.bf16.msra.mxu0 0
  %468 = vmatprep.subr.bf16.mxu0 0
  %469 = vmatpush1.bf16.msra.mxu0 0
  %470 = vmatprep.subr.bf16.mxu0 0
  %471 = vmatpush1.bf16.msra.mxu0 0
  %472 = vmatprep.subr.bf16.mxu0 0
  %473 = vmatpush1.bf16.msra.mxu0 0
  %474 = vmatprep.subr.bf16.mxu0 0
  %475 = vmatpush1.bf16.msra.mxu0 0
  %476 = vmatprep.subr.bf16.mxu0 0
  %477 = vmatpush1.bf16.msra.mxu0 0
  %478 = vmatprep.subr.bf16.mxu0 0
  %479 = vmatpush1.bf16.msra.mxu0 0
  %480 = vmatprep.subr.bf16.mxu0 0
  %481 = vmatpush1.bf16.msra.mxu0 0
  %482 = vmatprep.mubr.bf16.mxu0 0
  %483 = vmatmul.mubr.bf16.gmra.mrb[0].mxu0 %v354
  %v484 = vpop.f32.mrb[0].mxu0
  %v485 = vadd.f32 0.0, %v484
  %v486 = vpop.f32.mrb[0].mxu0
  %v487 = vpop.f32.mrb[0].mxu0
  %v488 = vadd.f32 0.0, %v487
  %v489 = vpop.f32.mrb[0].mxu0
  %490 = vmatprep.mubr.bf16.mxu0 0
  %491 = vmatmul.mubr.bf16.gmra.mrb[0].mxu0 %v355
  %v492 = vpop.f32.mrb[0].mxu0
  %v493 = vadd.f32 0.0, %v492
  %v494 = vpop.f32.mrb[0].mxu0
  %v495 = vpop.f32.mrb[0].mxu0
  %v496 = vadd.f32 0.0, %v495
  %v497 = vpop.f32.mrb[0].mxu0
  %498 = vmatprep.mubr.bf16.mxu0 0
  %499 = vmatmul.mubr.bf16.gmra.mrb[0].mxu0 %v356
  %v500 = vpop.f32.mrb[0].mxu0
  %v501 = vadd.f32 0.0, %v500
  %v502 = vpop.f32.mrb[0].mxu0
  %v503 = vpop.f32.mrb[0].mxu0
  %v504 = vadd.f32 0.0, %v503
  %v505 = vpop.f32.mrb[0].mxu0
  %506 = vmatprep.mubr.bf16.mxu0 0
  %507 = vmatmul.mubr.bf16.gmra.mrb[0].mxu0 %v357
  %v508 = vpop.f32.mrb[0].mxu0
  %v509 = vadd.f32 0.0, %v508
  %v510 = vpop.f32.mrb[0].mxu0
  %v511 = vpop.f32.mrb[0].mxu0
  %v512 = vadd.f32 0.0, %v511
  %v513 = vpop.f32.mrb[0].mxu0
  %514 = vmatprep.mubr.bf16.mxu0 0
  %515 = vmatmul.mubr.bf16.gmra.mrb[0].mxu0 %v358
  %v516 = vpop.f32.mrb[0].mxu0
  %v517 = vadd.f32 0.0, %v516
  %v518 = vpop.f32.mrb[0].mxu0
  %v519 = vpop.f32.mrb[0].mxu0
  %v520 = vadd.f32 0.0, %v519
  %v521 = vpop.f32.mrb[0].mxu0
  %522 = vmatprep.mubr.bf16.mxu0 0
  %523 = vmatmul.mubr.bf16.gmra.mrb[0].mxu0 %v359
  %v524 = vpop.f32.mrb[0].mxu0
  %v525 = vadd.f32 0.0, %v524
  %v526 = vpop.f32.mrb[0].mxu0
  %v527 = vpop.f32.mrb[0].mxu0
  %v528 = vadd.f32 0.0, %v527
  %v529 = vpop.f32.mrb[0].mxu0
  %530 = vmatprep.mubr.bf16.mxu0 0
  %531 = vmatmul.mubr.bf16.gmra.mrb[0].mxu0 %v360
  %v532 = vpop.f32.mrb[0].mxu0
  %v533 = vadd.f32 0.0, %v532
  %v534 = vpop.f32.mrb[0].mxu0
  %v535 = vpop.f32.mrb[0].mxu0
  %v536 = vadd.f32 0.0, %v535
  %v537 = vpop.f32.mrb[0].mxu0
  %538 = vmatprep.mubr.bf16.mxu0 0
  %539 = vmatmul.mubr.bf16.gmra.mrb[0].mxu0 %v361
  %v540 = vpop.f32.mrb[0].mxu0
  %v541 = vadd.f32 0.0, %v540
  %v542 = vpop.f32.mrb[0].mxu0
  %v543 = vpop.f32.mrb[0].mxu0
  %v544 = vadd.f32 0.0, %v543
  %v545 = vpop.f32.mrb[0].mxu0
  %546 = vmatprep.mubr.bf16.mxu0 0
  %547 = vmatmul.mubr.bf16.gmra.mrb[0].mxu0 %v362
  %v548 = vpop.f32.mrb[0].mxu0
  %v549 = vadd.f32 0.0, %v548
  %v550 = vpop.f32.mrb[0].mxu0
  %v551 = vpop.f32.mrb[0].mxu0
  %v552 = vadd.f32 0.0, %v551
  %v553 = vpop.f32.mrb[0].mxu0
  %554 = vmatprep.mubr.bf16.mxu0 0
  %555 = vmatmul.mubr.bf16.gmra.mrb[0].mxu0 %v363
  %v556 = vpop.f32.mrb[0].mxu0
  %v557 = vadd.f32 0.0, %v556
  %v558 = vpop.f32.mrb[0].mxu0
  %v559 = vpop.f32.mrb[0].mxu0
  %v560 = vadd.f32 0.0, %v559
  %v561 = vpop.f32.mrb[0].mxu0
  %562 = vmatprep.mubr.bf16.mxu0 0
  %563 = vmatmul.mubr.bf16.gmra.mrb[0].mxu0 %v364
  %v564 = vpop.f32.mrb[0].mxu0
  %v565 = vadd.f32 0.0, %v564
  %v566 = vpop.f32.mrb[0].mxu0
  %v567 = vpop.f32.mrb[0].mxu0
  %v568 = vadd.f32 0.0, %v567
  %v569 = vpop.f32.mrb[0].mxu0
  %570 = vmatprep.mubr.bf16.mxu0 0
  %571 = vmatmul.mubr.bf16.gmra.mrb[0].mxu0 %v365
  %v572 = vpop.f32.mrb[0].mxu0
  %v573 = vadd.f32 0.0, %v572
  %v574 = vpop.f32.mrb[0].mxu0
  %v575 = vpop.f32.mrb[0].mxu0
  %v576 = vadd.f32 0.0, %v575
  %v577 = vpop.f32.mrb[0].mxu0
  %578 = vmatprep.mubr.bf16.mxu0 0
  %579 = vmatmul.mubr.bf16.gmra.mrb[0].mxu0 %v366
  %v580 = vpop.f32.mrb[0].mxu0
  %v581 = vadd.f32 0.0, %v580
  %v582 = vpop.f32.mrb[0].mxu0
  %v583 = vpop.f32.mrb[0].mxu0
  %v584 = vadd.f32 0.0, %v583
  %v585 = vpop.f32.mrb[0].mxu0
  %586 = vmatprep.mubr.bf16.mxu0 0
  %587 = vmatmul.mubr.bf16.gmra.mrb[0].mxu0 %v367
  %v588 = vpop.f32.mrb[0].mxu0
  %v589 = vadd.f32 0.0, %v588
  %v590 = vpop.f32.mrb[0].mxu0
  %v591 = vpop.f32.mrb[0].mxu0
  %v592 = vadd.f32 0.0, %v591
  %v593 = vpop.f32.mrb[0].mxu0
  %594 = vmatprep.mubr.bf16.mxu0 0
  %595 = vmatmul.mubr.bf16.gmra.mrb[0].mxu0 %v368
  %v596 = vpop.f32.mrb[0].mxu0
  %v597 = vadd.f32 0.0, %v596
  %v598 = vpop.f32.mrb[0].mxu0
  %v599 = vpop.f32.mrb[0].mxu0
  %v600 = vadd.f32 0.0, %v599
  %v601 = vpop.f32.mrb[0].mxu0
  %602 = vmatprep.mubr.bf16.mxu0 0
  %603 = vmatmul.mubr.bf16.gmra.mrb[0].mxu0 %v369
  %v604 = vpop.f32.mrb[0].mxu0
  %v605 = vadd.f32 0.0, %v604
  %v606 = vpop.f32.mrb[0].mxu0
  %v607 = vpop.f32.mrb[0].mxu0
  %v608 = vadd.f32 0.0, %v607
  %v609 = vpop.f32.mrb[0].mxu0
  %610 = vmatprep.mubr.bf16.mxu0 0
  %611 = vmatmul.mubr.bf16.gmra.mrb[0].mxu0 %v370
  %v612 = vpop.f32.mrb[0].mxu0
  %v613 = vadd.f32 0.0, %v612
  %v614 = vpop.f32.mrb[0].mxu0
  %v615 = vpop.f32.mrb[0].mxu0
  %v616 = vadd.f32 0.0, %v615
  %v617 = vpop.f32.mrb[0].mxu0
  %618 = vmatprep.mubr.bf16.mxu0 0
  %619 = vmatmul.mubr.bf16.gmra.mrb[0].mxu0 %v371
  %v620 = vpop.f32.mrb[0].mxu0
  %v621 = vadd.f32 0.0, %v620
  %v622 = vpop.f32.mrb[0].mxu0
  %v623 = vpop.f32.mrb[0].mxu0
  %v624 = vadd.f32 0.0, %v623
  %v625 = vpop.f32.mrb[0].mxu0
  %626 = vmatprep.mubr.bf16.mxu0 0
  %627 = vmatmul.mubr.bf16.gmra.mrb[0].mxu0 %v372
  %v628 = vpop.f32.mrb[0].mxu0
  %v629 = vadd.f32 0.0, %v628
  %v630 = vpop.f32.mrb[0].mxu0
  %v631 = vpop.f32.mrb[0].mxu0
  %v632 = vadd.f32 0.0, %v631
  %v633 = vpop.f32.mrb[0].mxu0
  %634 = vmatprep.mubr.bf16.mxu0 0
  %635 = vmatmul.mubr.bf16.gmra.mrb[0].mxu0 %v373
  %v636 = vpop.f32.mrb[0].mxu0
  %v637 = vadd.f32 0.0, %v636
  %v638 = vpop.f32.mrb[0].mxu0
  %v639 = vpop.f32.mrb[0].mxu0
  %v640 = vadd.f32 0.0, %v639
  %v641 = vpop.f32.mrb[0].mxu0
  %642 = vmatprep.mubr.bf16.mxu0 0
  %643 = vmatmul.mubr.bf16.gmra.mrb[0].mxu0 %v374
  %v644 = vpop.f32.mrb[0].mxu0
  %v645 = vadd.f32 0.0, %v644
  %v646 = vpop.f32.mrb[0].mxu0
  %v647 = vpop.f32.mrb[0].mxu0
  %v648 = vadd.f32 0.0, %v647
  %v649 = vpop.f32.mrb[0].mxu0
  %650 = vmatprep.mubr.bf16.mxu0 0
  %651 = vmatmul.mubr.bf16.gmra.mrb[0].mxu0 %v375
  %v652 = vpop.f32.mrb[0].mxu0
  %v653 = vadd.f32 0.0, %v652
  %v654 = vpop.f32.mrb[0].mxu0
  %v655 = vpop.f32.mrb[0].mxu0
  %v656 = vadd.f32 0.0, %v655
  %v657 = vpop.f32.mrb[0].mxu0
  %658 = vmatprep.mubr.bf16.mxu0 0
  %659 = vmatmul.mubr.bf16.gmra.mrb[0].mxu0 %v376
  %v660 = vpop.f32.mrb[0].mxu0
  %v661 = vadd.f32 0.0, %v660
  %v662 = vpop.f32.mrb[0].mxu0
  %v663 = vpop.f32.mrb[0].mxu0
  %v664 = vadd.f32 0.0, %v663
  %v665 = vpop.f32.mrb[0].mxu0
  %666 = vmatprep.mubr.bf16.mxu0 0
  %667 = vmatmul.mubr.bf16.gmra.mrb[0].mxu0 %v377
  %v668 = vpop.f32.mrb[0].mxu0
  %v669 = vadd.f32 0.0, %v668
  %v670 = vpop.f32.mrb[0].mxu0
  %v671 = vpop.f32.mrb[0].mxu0
  %v672 = vadd.f32 0.0, %v671
  %v673 = vpop.f32.mrb[0].mxu0
  %674 = vmatprep.mubr.bf16.mxu0 0
  %675 = vmatmul.mubr.bf16.gmra.mrb[0].mxu0 %v378
  %v676 = vpop.f32.mrb[0].mxu0
  %v677 = vadd.f32 0.0, %v676
  %v678 = vpop.f32.mrb[0].mxu0
  %v679 = vpop.f32.mrb[0].mxu0
  %v680 = vadd.f32 0.0, %v679
  %v681 = vpop.f32.mrb[0].mxu0
  %682 = vmatprep.mubr.bf16.mxu0 0
  %683 = vmatmul.mubr.bf16.gmra.mrb[0].mxu0 %v379
  %v684 = vpop.f32.mrb[0].mxu0
  %v685 = vadd.f32 0.0, %v684
  %v686 = vpop.f32.mrb[0].mxu0
  %v687 = vpop.f32.mrb[0].mxu0
  %v688 = vadd.f32 0.0, %v687
  %v689 = vpop.f32.mrb[0].mxu0
  %690 = vmatprep.mubr.bf16.mxu0 0
  %691 = vmatmul.mubr.bf16.gmra.mrb[0].mxu0 %v380
  %v692 = vpop.f32.mrb[0].mxu0
  %v693 = vadd.f32 0.0, %v692
  %v694 = vpop.f32.mrb[0].mxu0
  %v695 = vpop.f32.mrb[0].mxu0
  %v696 = vadd.f32 0.0, %v695
  %v697 = vpop.f32.mrb[0].mxu0
  %698 = vmatprep.mubr.bf16.mxu0 0
  %699 = vmatmul.mubr.bf16.gmra.mrb[0].mxu0 %v381
  %v700 = vpop.f32.mrb[0].mxu0
  %v701 = vadd.f32 0.0, %v700
  %v702 = vpop.f32.mrb[0].mxu0
  %v703 = vpop.f32.mrb[0].mxu0
  %v704 = vadd.f32 0.0, %v703
  %v705 = vpop.f32.mrb[0].mxu0
  %706 = vmatprep.mubr.bf16.mxu0 0
  %707 = vmatmul.mubr.bf16.gmra.mrb[0].mxu0 %v382
  %v708 = vpop.f32.mrb[0].mxu0
  %v709 = vadd.f32 0.0, %v708
  %v710 = vpop.f32.mrb[0].mxu0
  %v711 = vpop.f32.mrb[0].mxu0
  %v712 = vadd.f32 0.0, %v711
  %v713 = vpop.f32.mrb[0].mxu0
  %714 = vmatprep.mubr.bf16.mxu0 0
  %715 = vmatmul.mubr.bf16.gmra.mrb[0].mxu0 %v383
  %v716 = vpop.f32.mrb[0].mxu0
  %v717 = vadd.f32 0.0, %v716
  %v718 = vpop.f32.mrb[0].mxu0
  %v719 = vpop.f32.mrb[0].mxu0
  %v720 = vadd.f32 0.0, %v719
  %v721 = vpop.f32.mrb[0].mxu0
  %722 = vmatprep.mubr.bf16.mxu0 0
  %723 = vmatmul.mubr.bf16.gmra.mrb[0].mxu0 %v384
  %v724 = vpop.f32.mrb[0].mxu0
  %v725 = vadd.f32 0.0, %v724
  %v726 = vpop.f32.mrb[0].mxu0
  %v727 = vpop.f32.mrb[0].mxu0
  %v728 = vadd.f32 0.0, %v727
  %v729 = vpop.f32.mrb[0].mxu0
  %730 = vmatprep.mubr.bf16.mxu0 0
  %731 = vmatmul.mubr.bf16.gmra.mrb[0].mxu0 %v385
  %v732 = vpop.f32.mrb[0].mxu0
  %v733 = vadd.f32 0.0, %v732
  %v734 = vpop.f32.mrb[0].mxu0
  %v735 = vpop.f32.mrb[0].mxu0
  %v736 = vadd.f32 0.0, %v735
  %v737 = vpop.f32.mrb[0].mxu0
  %738 = vdwg.mxu0
  %v739 = vadd.f32 %v485, %v488
  %v740 = vadd.f32 %v739, %v493
  %v741 = vadd.f32 %v740, %v496
  %v742 = vadd.f32 %v741, %v501
  %v743 = vadd.f32 %v742, %v504
  %v744 = vadd.f32 %v743, %v509
  %v745 = vadd.f32 %v744, %v512
  %v746 = vadd.f32 %v745, %v517
  %v747 = vadd.f32 %v746, %v520
  %v748 = vadd.f32 %v747, %v525
  %v749 = vadd.f32 %v748, %v528
  %v750 = vadd.f32 %v749, %v533
  %v751 = vadd.f32 %v750, %v536
  %v752 = vadd.f32 %v751, %v541
  %v753 = vadd.f32 %v752, %v544
  %v754 = vadd.f32 %v753, %v549
  %v755 = vadd.f32 %v754, %v552
  %v756 = vadd.f32 %v755, %v557
  %v757 = vadd.f32 %v756, %v560
  %v758 = vadd.f32 %v757, %v565
  %v759 = vadd.f32 %v758, %v568
  %v760 = vadd.f32 %v759, %v573
  %v761 = vadd.f32 %v760, %v576
  %v762 = vadd.f32 %v761, %v581
  %v763 = vadd.f32 %v762, %v584
  %v764 = vadd.f32 %v763, %v589
  %v765 = vadd.f32 %v764, %v592
  %v766 = vadd.f32 %v765, %v597
  %v767 = vadd.f32 %v766, %v600
  %v768 = vadd.f32 %v767, %v605
  %v769 = vadd.f32 %v768, %v608
  %v770 = vadd.f32 %v769, %v613
  %v771 = vadd.f32 %v770, %v616
  %v772 = vadd.f32 %v771, %v621
  %v773 = vadd.f32 %v772, %v624
  %v774 = vadd.f32 %v773, %v629
  %v775 = vadd.f32 %v774, %v632
  %v776 = vadd.f32 %v775, %v637
  %v777 = vadd.f32 %v776, %v640
  %v778 = vadd.f32 %v777, %v645
  %v779 = vadd.f32 %v778, %v648
  %v780 = vadd.f32 %v779, %v653
  %v781 = vadd.f32 %v780, %v656
  %v782 = vadd.f32 %v781, %v661
  %v783 = vadd.f32 %v782, %v664
  %v784 = vadd.f32 %v783, %v669
  %v785 = vadd.f32 %v784, %v672
  %v786 = vadd.f32 %v785, %v677
  %v787 = vadd.f32 %v786, %v680
  %v788 = vadd.f32 %v787, %v685
  %v789 = vadd.f32 %v788, %v688
  %v790 = vadd.f32 %v789, %v693
  %v791 = vadd.f32 %v790, %v696
  %v792 = vadd.f32 %v791, %v701
  %v793 = vadd.f32 %v792, %v704
  %v794 = vadd.f32 %v793, %v709
  %v795 = vadd.f32 %v794, %v712
  %v796 = vadd.f32 %v795, %v717
  %v797 = vadd.f32 %v796, %v720
  %v798 = vadd.f32 %v797, %v725
  %v799 = vadd.f32 %v798, %v728
  %v800 = vadd.f32 %v799, %v733
  %v801 = vadd.f32 %v800, %v736
  %v802 = vrot.slane %v801, 4
  %v803 = vadd.f32 %v801, %v802
  %v804 = vrot.slane %v803, 2
  %v805 = vadd.f32 %v803, %v804
  %v806 = vrot.slane %v805, 1
  %v807 = vadd.f32 %v805, %v806
  %v808 = vrcp.pop 512.0
  %v809 = vmul.f32 %v807, %v808
  %v810 = vsub.f32 %v485, %v809
  %v811 = vsub.f32 %v488, %v809
  %v812 = vsub.f32 %v493, %v809
  %v813 = vsub.f32 %v496, %v809
  %v814 = vsub.f32 %v501, %v809
  %v815 = vsub.f32 %v504, %v809
  %v816 = vsub.f32 %v509, %v809
  %v817 = vsub.f32 %v512, %v809
  %v818 = vsub.f32 %v517, %v809
  %v819 = vsub.f32 %v520, %v809
  %v820 = vsub.f32 %v525, %v809
  %v821 = vsub.f32 %v528, %v809
  %v822 = vsub.f32 %v533, %v809
  %v823 = vsub.f32 %v536, %v809
  %v824 = vsub.f32 %v541, %v809
  %v825 = vsub.f32 %v544, %v809
  %v826 = vsub.f32 %v549, %v809
  %v827 = vsub.f32 %v552, %v809
  %v828 = vsub.f32 %v557, %v809
  %v829 = vsub.f32 %v560, %v809
  %v830 = vsub.f32 %v565, %v809
  %v831 = vsub.f32 %v568, %v809
  %v832 = vsub.f32 %v573, %v809
  %v833 = vsub.f32 %v576, %v809
  %v834 = vsub.f32 %v581, %v809
  %v835 = vsub.f32 %v584, %v809
  %v836 = vsub.f32 %v589, %v809
  %v837 = vsub.f32 %v592, %v809
  %v838 = vsub.f32 %v597, %v809
  %v839 = vsub.f32 %v600, %v809
  %v840 = vsub.f32 %v605, %v809
  %v841 = vsub.f32 %v608, %v809
  %v842 = vsub.f32 %v613, %v809
  %v843 = vsub.f32 %v616, %v809
  %v844 = vsub.f32 %v621, %v809
  %v845 = vsub.f32 %v624, %v809
  %v846 = vsub.f32 %v629, %v809
  %v847 = vsub.f32 %v632, %v809
  %v848 = vsub.f32 %v637, %v809
  %v849 = vsub.f32 %v640, %v809
  %v850 = vsub.f32 %v645, %v809
  %v851 = vsub.f32 %v648, %v809
  %v852 = vsub.f32 %v653, %v809
  %v853 = vsub.f32 %v656, %v809
  %v854 = vsub.f32 %v661, %v809
  %v855 = vsub.f32 %v664, %v809
  %v856 = vsub.f32 %v669, %v809
  %v857 = vsub.f32 %v672, %v809
  %v858 = vsub.f32 %v677, %v809
  %v859 = vsub.f32 %v680, %v809
  %v860 = vsub.f32 %v685, %v809
  %v861 = vsub.f32 %v688, %v809
  %v862 = vsub.f32 %v693, %v809
  %v863 = vsub.f32 %v696, %v809
  %v864 = vsub.f32 %v701, %v809
  %v865 = vsub.f32 %v704, %v809
  %v866 = vsub.f32 %v709, %v809
  %v867 = vsub.f32 %v712, %v809
  %v868 = vsub.f32 %v717, %v809
  %v869 = vsub.f32 %v720, %v809
  %v870 = vsub.f32 %v725, %v809
  %v871 = vsub.f32 %v728, %v809
  %v872 = vsub.f32 %v733, %v809
  %v873 = vsub.f32 %v736, %v809
  %v874 = vmul.f32 %v810, %v810
  %v875 = vmul.f32 %v811, %v811
  %v876 = vmul.f32 %v812, %v812
  %v877 = vmul.f32 %v813, %v813
  %v878 = vmul.f32 %v814, %v814
  %v879 = vmul.f32 %v815, %v815
  %v880 = vmul.f32 %v816, %v816
  %v881 = vmul.f32 %v817, %v817
  %v882 = vmul.f32 %v818, %v818
  %v883 = vmul.f32 %v819, %v819
  %v884 = vmul.f32 %v820, %v820
  %v885 = vmul.f32 %v821, %v821
  %v886 = vmul.f32 %v822, %v822
  %v887 = vmul.f32 %v823, %v823
  %v888 = vmul.f32 %v824, %v824
  %v889 = vmul.f32 %v825, %v825
  %v890 = vmul.f32 %v826, %v826
  %v891 = vmul.f32 %v827, %v827
  %v892 = vmul.f32 %v828, %v828
  %v893 = vmul.f32 %v829, %v829
  %v894 = vmul.f32 %v830, %v830
  %v895 = vmul.f32 %v831, %v831
  %v896 = vmul.f32 %v832, %v832
  %v897 = vmul.f32 %v833, %v833
  %v898 = vmul.f32 %v834, %v834
  %v899 = vmul.f32 %v835, %v835
  %v900 = vmul.f32 %v836, %v836
  %v901 = vmul.f32 %v837, %v837
  %v902 = vmul.f32 %v838, %v838
  %v903 = vmul.f32 %v839, %v839
  %v904 = vmul.f32 %v840, %v840
  %v905 = vmul.f32 %v841, %v841
  %v906 = vmul.f32 %v842, %v842
  %v907 = vmul.f32 %v843, %v843
  %v908 = vmul.f32 %v844, %v844
  %v909 = vmul.f32 %v845, %v845
  %v910 = vmul.f32 %v846, %v846
  %v911 = vmul.f32 %v847, %v847
  %v912 = vmul.f32 %v848, %v848
  %v913 = vmul.f32 %v849, %v849
  %v914 = vmul.f32 %v850, %v850
  %v915 = vmul.f32 %v851, %v851
  %v916 = vmul.f32 %v852, %v852
  %v917 = vmul.f32 %v853, %v853
  %v918 = vmul.f32 %v854, %v854
  %v919 = vmul.f32 %v855, %v855
  %v920 = vmul.f32 %v856, %v856
  %v921 = vmul.f32 %v857, %v857
  %v922 = vmul.f32 %v858, %v858
  %v923 = vmul.f32 %v859, %v859
  %v924 = vmul.f32 %v860, %v860
  %v925 = vmul.f32 %v861, %v861
  %v926 = vmul.f32 %v862, %v862
  %v927 = vmul.f32 %v863, %v863
  %v928 = vmul.f32 %v864, %v864
  %v929 = vmul.f32 %v865, %v865
  %v930 = vmul.f32 %v866, %v866
  %v931 = vmul.f32 %v867, %v867
  %v932 = vmul.f32 %v868, %v868
  %v933 = vmul.f32 %v869, %v869
  %v934 = vmul.f32 %v870, %v870
  %v935 = vmul.f32 %v871, %v871
  %v936 = vmul.f32 %v872, %v872
  %v937 = vmul.f32 %v873, %v873
  %v938 = vadd.f32 %v874, %v875
  %v939 = vadd.f32 %v938, %v876
  %v940 = vadd.f32 %v939, %v877
  %v941 = vadd.f32 %v940, %v878
  %v942 = vadd.f32 %v941, %v879
  %v943 = vadd.f32 %v942, %v880
  %v944 = vadd.f32 %v943, %v881
  %v945 = vadd.f32 %v944, %v882
  %v946 = vadd.f32 %v945, %v883
  %v947 = vadd.f32 %v946, %v884
  %v948 = vadd.f32 %v947, %v885
  %v949 = vadd.f32 %v948, %v886
  %v950 = vadd.f32 %v949, %v887
  %v951 = vadd.f32 %v950, %v888
  %v952 = vadd.f32 %v951, %v889
  %v953 = vadd.f32 %v952, %v890
  %v954 = vadd.f32 %v953, %v891
  %v955 = vadd.f32 %v954, %v892
  %v956 = vadd.f32 %v955, %v893
  %v957 = vadd.f32 %v956, %v894
  %v958 = vadd.f32 %v957, %v895
  %v959 = vadd.f32 %v958, %v896
  %v960 = vadd.f32 %v959, %v897
  %v961 = vadd.f32 %v960, %v898
  %v962 = vadd.f32 %v961, %v899
  %v963 = vadd.f32 %v962, %v900
  %v964 = vadd.f32 %v963, %v901
  %v965 = vadd.f32 %v964, %v902
  %v966 = vadd.f32 %v965, %v903
  %v967 = vadd.f32 %v966, %v904
  %v968 = vadd.f32 %v967, %v905
  %v969 = vadd.f32 %v968, %v906
  %v970 = vadd.f32 %v969, %v907
  %v971 = vadd.f32 %v970, %v908
  %v972 = vadd.f32 %v971, %v909
  %v973 = vadd.f32 %v972, %v910
  %v974 = vadd.f32 %v973, %v911
  %v975 = vadd.f32 %v974, %v912
  %v976 = vadd.f32 %v975, %v913
  %v977 = vadd.f32 %v976, %v914
  %v978 = vadd.f32 %v977, %v915
  %v979 = vadd.f32 %v978, %v916
  %v980 = vadd.f32 %v979, %v917
  %v981 = vadd.f32 %v980, %v918
  %v982 = vadd.f32 %v981, %v919
  %v983 = vadd.f32 %v982, %v920
  %v984 = vadd.f32 %v983, %v921
  %v985 = vadd.f32 %v984, %v922
  %v986 = vadd.f32 %v985, %v923
  %v987 = vadd.f32 %v986, %v924
  %v988 = vadd.f32 %v987, %v925
  %v989 = vadd.f32 %v988, %v926
  %v990 = vadd.f32 %v989, %v927
  %v991 = vadd.f32 %v990, %v928
  %v992 = vadd.f32 %v991, %v929
  %v993 = vadd.f32 %v992, %v930
  %v994 = vadd.f32 %v993, %v931
  %v995 = vadd.f32 %v994, %v932
  %v996 = vadd.f32 %v995, %v933
  %v997 = vadd.f32 %v996, %v934
  %v998 = vadd.f32 %v997, %v935
  %v999 = vadd.f32 %v998, %v936
  %v1000 = vadd.f32 %v999, %v937
  %v1001 = vrot.slane %v1000, 4
  %v1002 = vadd.f32 %v1000, %v1001
  %v1003 = vrot.slane %v1002, 2
  %v1004 = vadd.f32 %v1002, %v1003
  %v1005 = vrot.slane %v1004, 1
  %v1006 = vadd.f32 %v1004, %v1005
  %vm1007 = vcmask 1040384
  %v1008 = vsel %vm1007, %v809, %v1006
  %1009 = vst [vmem:[%s5] sm:$0x3] %v1008
  %v1010 = vpack.c.bf16 %v488, %v485
  %v1011 = vpack.c.bf16 %v496, %v493
  %v1012 = vpack.c.bf16 %v504, %v501
  %v1013 = vpack.c.bf16 %v512, %v509
  %v1014 = vpack.c.bf16 %v520, %v517
  %v1015 = vpack.c.bf16 %v528, %v525
  %v1016 = vpack.c.bf16 %v536, %v533
  %v1017 = vpack.c.bf16 %v544, %v541
  %v1018 = vpack.c.bf16 %v552, %v549
  %v1019 = vpack.c.bf16 %v560, %v557
  %v1020 = vpack.c.bf16 %v568, %v565
  %v1021 = vpack.c.bf16 %v576, %v573
  %v1022 = vpack.c.bf16 %v584, %v581
  %v1023 = vpack.c.bf16 %v592, %v589
  %v1024 = vpack.c.bf16 %v600, %v597
  %v1025 = vpack.c.bf16 %v608, %v605
  %v1026 = vpack.c.bf16 %v616, %v613
  %v1027 = vpack.c.bf16 %v624, %v621
  %v1028 = vpack.c.bf16 %v632, %v629
  %v1029 = vpack.c.bf16 %v640, %v637
  %v1030 = vpack.c.bf16 %v648, %v645
  %v1031 = vpack.c.bf16 %v656, %v653
  %v1032 = vpack.c.bf16 %v664, %v661
  %v1033 = vpack.c.bf16 %v672, %v669
  %v1034 = vpack.c.bf16 %v680, %v677
  %v1035 = vpack.c.bf16 %v688, %v685
  %v1036 = vpack.c.bf16 %v696, %v693
  %v1037 = vpack.c.bf16 %v704, %v701
  %v1038 = vpack.c.bf16 %v712, %v709
  %v1039 = vpack.c.bf16 %v720, %v717
  %v1040 = vpack.c.bf16 %v728, %v725
  %v1041 = vpack.c.bf16 %v736, %v733
  %v1074 = vunpack.c.l.b16 %v1010
  %v1075 = vunpack.c.h.b16 %v1010
  %v1076 = vunpack.c.l.b16 %v1011
  %v1077 = vunpack.c.h.b16 %v1011
  %v1078 = vunpack.c.l.b16 %v1012
  %v1079 = vunpack.c.h.b16 %v1012
  %v1080 = vunpack.c.l.b16 %v1013
  %v1081 = vunpack.c.h.b16 %v1013
  %v1082 = vunpack.c.l.b16 %v1014
  %v1083 = vunpack.c.h.b16 %v1014
  %v1084 = vunpack.c.l.b16 %v1015
  %v1085 = vunpack.c.h.b16 %v1015
  %v1086 = vunpack.c.l.b16 %v1016
  %v1087 = vunpack.c.h.b16 %v1016
  %v1088 = vunpack.c.l.b16 %v1017
  %v1089 = vunpack.c.h.b16 %v1017
  %v1090 = vunpack.c.l.b16 %v1018
  %v1091 = vunpack.c.h.b16 %v1018
  %v1092 = vunpack.c.l.b16 %v1019
  %v1093 = vunpack.c.h.b16 %v1019
  %v1094 = vunpack.c.l.b16 %v1020
  %v1095 = vunpack.c.h.b16 %v1020
  %v1096 = vunpack.c.l.b16 %v1021
  %v1097 = vunpack.c.h.b16 %v1021
  %v1098 = vunpack.c.l.b16 %v1022
  %v1099 = vunpack.c.h.b16 %v1022
  %v1100 = vunpack.c.l.b16 %v1023
  %v1101 = vunpack.c.h.b16 %v1023
  %v1102 = vunpack.c.l.b16 %v1024
  %v1103 = vunpack.c.h.b16 %v1024
  %v1104 = vunpack.c.l.b16 %v1025
  %v1105 = vunpack.c.h.b16 %v1025
  %v1106 = vunpack.c.l.b16 %v1026
  %v1107 = vunpack.c.h.b16 %v1026
  %v1108 = vunpack.c.l.b16 %v1027
  %v1109 = vunpack.c.h.b16 %v1027
  %v1110 = vunpack.c.l.b16 %v1028
  %v1111 = vunpack.c.h.b16 %v1028
  %v1112 = vunpack.c.l.b16 %v1029
  %v1113 = vunpack.c.h.b16 %v1029
  %v1114 = vunpack.c.l.b16 %v1030
  %v1115 = vunpack.c.h.b16 %v1030
  %v1116 = vunpack.c.l.b16 %v1031
  %v1117 = vunpack.c.h.b16 %v1031
  %v1118 = vunpack.c.l.b16 %v1032
  %v1119 = vunpack.c.h.b16 %v1032
  %v1120 = vunpack.c.l.b16 %v1033
  %v1121 = vunpack.c.h.b16 %v1033
  %v1122 = vunpack.c.l.b16 %v1034
  %v1123 = vunpack.c.h.b16 %v1034
  %v1124 = vunpack.c.l.b16 %v1035
  %v1125 = vunpack.c.h.b16 %v1035
  %v1126 = vunpack.c.l.b16 %v1036
  %v1127 = vunpack.c.h.b16 %v1036
  %v1128 = vunpack.c.l.b16 %v1037
  %v1129 = vunpack.c.h.b16 %v1037
  %v1130 = vunpack.c.l.b16 %v1038
  %v1131 = vunpack.c.h.b16 %v1038
  %v1132 = vunpack.c.l.b16 %v1039
  %v1133 = vunpack.c.h.b16 %v1039
  %v1134 = vunpack.c.l.b16 %v1040
  %v1135 = vunpack.c.h.b16 %v1040
  %v1136 = vunpack.c.l.b16 %v1041
  %v1137 = vunpack.c.h.b16 %v1041
  %v1138 = vpack.c.b16 %v1074, %v1074
  %v1139 = vpack.c.b16 %v1075, %v1075
  %v1140 = vpack.c.b16 %v1076, %v1076
  %v1141 = vpack.c.b16 %v1077, %v1077
  %v1142 = vpack.c.b16 %v1078, %v1078
  %v1143 = vpack.c.b16 %v1079, %v1079
  %v1144 = vpack.c.b16 %v1080, %v1080
  %v1145 = vpack.c.b16 %v1081, %v1081
  %v1146 = vpack.c.b16 %v1082, %v1082
  %v1147 = vpack.c.b16 %v1083, %v1083
  %v1148 = vpack.c.b16 %v1084, %v1084
  %v1149 = vpack.c.b16 %v1085, %v1085
  %v1150 = vpack.c.b16 %v1086, %v1086
  %v1151 = vpack.c.b16 %v1087, %v1087
  %v1152 = vpack.c.b16 %v1088, %v1088
  %v1153 = vpack.c.b16 %v1089, %v1089
  %v1154 = vpack.c.b16 %v1090, %v1090
  %v1155 = vpack.c.b16 %v1091, %v1091
  %v1156 = vpack.c.b16 %v1092, %v1092
  %v1157 = vpack.c.b16 %v1093, %v1093
  %v1158 = vpack.c.b16 %v1094, %v1094
  %v1159 = vpack.c.b16 %v1095, %v1095
  %v1160 = vpack.c.b16 %v1096, %v1096
  %v1161 = vpack.c.b16 %v1097, %v1097
  %v1162 = vpack.c.b16 %v1098, %v1098
  %v1163 = vpack.c.b16 %v1099, %v1099
  %v1164 = vpack.c.b16 %v1100, %v1100
  %v1165 = vpack.c.b16 %v1101, %v1101
  %v1166 = vpack.c.b16 %v1102, %v1102
  %v1167 = vpack.c.b16 %v1103, %v1103
  %v1168 = vpack.c.b16 %v1104, %v1104
  %v1169 = vpack.c.b16 %v1105, %v1105
  %v1170 = vpack.c.b16 %v1106, %v1106
  %v1171 = vpack.c.b16 %v1107, %v1107
  %v1172 = vpack.c.b16 %v1108, %v1108
  %v1173 = vpack.c.b16 %v1109, %v1109
  %v1174 = vpack.c.b16 %v1110, %v1110
  %v1175 = vpack.c.b16 %v1111, %v1111
  %v1176 = vpack.c.b16 %v1112, %v1112
  %v1177 = vpack.c.b16 %v1113, %v1113
  %v1178 = vpack.c.b16 %v1114, %v1114
  %v1179 = vpack.c.b16 %v1115, %v1115
  %v1180 = vpack.c.b16 %v1116, %v1116
  %v1181 = vpack.c.b16 %v1117, %v1117
  %v1182 = vpack.c.b16 %v1118, %v1118
  %v1183 = vpack.c.b16 %v1119, %v1119
  %v1184 = vpack.c.b16 %v1120, %v1120
  %v1185 = vpack.c.b16 %v1121, %v1121
  %v1186 = vpack.c.b16 %v1122, %v1122
  %v1187 = vpack.c.b16 %v1123, %v1123
  %v1188 = vpack.c.b16 %v1124, %v1124
  %v1189 = vpack.c.b16 %v1125, %v1125
  %v1190 = vpack.c.b16 %v1126, %v1126
  %v1191 = vpack.c.b16 %v1127, %v1127
  %v1192 = vpack.c.b16 %v1128, %v1128
  %v1193 = vpack.c.b16 %v1129, %v1129
  %v1194 = vpack.c.b16 %v1130, %v1130
  %v1195 = vpack.c.b16 %v1131, %v1131
  %v1196 = vpack.c.b16 %v1132, %v1132
  %v1197 = vpack.c.b16 %v1133, %v1133
  %v1198 = vpack.c.b16 %v1134, %v1134
  %v1199 = vpack.c.b16 %v1135, %v1135
  %v1200 = vpack.c.b16 %v1136, %v1136
  %v1201 = vpack.c.b16 %v1137, %v1137
  %1266 = vst [vmem:[%s4] sm:$0xf] %v1138
  %1267 = vst [vmem:[%s4 + $0x4] sm:$0xf] %v1139
  %1268 = vst [vmem:[%s4 + $0x8] sm:$0xf] %v1140
  %1269 = vst [vmem:[%s4 + $0xc] sm:$0xf] %v1141
  %1270 = vst [vmem:[%s4 + $0x10] sm:$0xf] %v1142
  %1271 = vst [vmem:[%s4 + $0x14] sm:$0xf] %v1143
  %1272 = vst [vmem:[%s4 + $0x18] sm:$0xf] %v1144
  %1273 = vst [vmem:[%s4 + $0x1c] sm:$0xf] %v1145
  %1274 = vst [vmem:[%s4 + $0x20] sm:$0xf] %v1146
  %1275 = vst [vmem:[%s4 + $0x24] sm:$0xf] %v1147
  %1276 = vst [vmem:[%s4 + $0x28] sm:$0xf] %v1148
  %1277 = vst [vmem:[%s4 + $0x2c] sm:$0xf] %v1149
  %1278 = vst [vmem:[%s4 + $0x30] sm:$0xf] %v1150
  %1279 = vst [vmem:[%s4 + $0x34] sm:$0xf] %v1151
  %1280 = vst [vmem:[%s4 + $0x38] sm:$0xf] %v1152
  %1281 = vst [vmem:[%s4 + $0x3c] sm:$0xf] %v1153
  %1282 = vst [vmem:[%s4 + $0x40] sm:$0xf] %v1154
  %1283 = vst [vmem:[%s4 + $0x44] sm:$0xf] %v1155
  %1284 = vst [vmem:[%s4 + $0x48] sm:$0xf] %v1156
  %1285 = vst [vmem:[%s4 + $0x4c] sm:$0xf] %v1157
  %1286 = vst [vmem:[%s4 + $0x50] sm:$0xf] %v1158
  %1287 = vst [vmem:[%s4 + $0x54] sm:$0xf] %v1159
  %1288 = vst [vmem:[%s4 + $0x58] sm:$0xf] %v1160
  %1289 = vst [vmem:[%s4 + $0x5c] sm:$0xf] %v1161
  %1290 = vst [vmem:[%s4 + $0x60] sm:$0xf] %v1162
  %1291 = vst [vmem:[%s4 + $0x64] sm:$0xf] %v1163
  %1292 = vst [vmem:[%s4 + $0x68] sm:$0xf] %v1164
  %1293 = vst [vmem:[%s4 + $0x6c] sm:$0xf] %v1165
  %1294 = vst [vmem:[%s4 + $0x70] sm:$0xf] %v1166
  %1295 = vst [vmem:[%s4 + $0x74] sm:$0xf] %v1167
  %1296 = vst [vmem:[%s4 + $0x78] sm:$0xf] %v1168
  %1297 = vst [vmem:[%s4 + $0x7c] sm:$0xf] %v1169
  %1298 = vst [vmem:[%s4 + $0x80] sm:$0xf] %v1170
  %1299 = vst [vmem:[%s4 + $0x84] sm:$0xf] %v1171
  %1300 = vst [vmem:[%s4 + $0x88] sm:$0xf] %v1172
  %1301 = vst [vmem:[%s4 + $0x8c] sm:$0xf] %v1173
  %1302 = vst [vmem:[%s4 + $0x90] sm:$0xf] %v1174
  %1303 = vst [vmem:[%s4 + $0x94] sm:$0xf] %v1175
  %1304 = vst [vmem:[%s4 + $0x98] sm:$0xf] %v1176
  %1305 = vst [vmem:[%s4 + $0x9c] sm:$0xf] %v1177
  %1306 = vst [vmem:[%s4 + $0xa0] sm:$0xf] %v1178
  %1307 = vst [vmem:[%s4 + $0xa4] sm:$0xf] %v1179
  %1308 = vst [vmem:[%s4 + $0xa8] sm:$0xf] %v1180
  %1309 = vst [vmem:[%s4 + $0xac] sm:$0xf] %v1181
  %1310 = vst [vmem:[%s4 + $0xb0] sm:$0xf] %v1182
  %1311 = vst [vmem:[%s4 + $0xb4] sm:$0xf] %v1183
  %1312 = vst [vmem:[%s4 + $0xb8] sm:$0xf] %v1184
  %1313 = vst [vmem:[%s4 + $0xbc] sm:$0xf] %v1185
  %1314 = vst [vmem:[%s4 + $0xc0] sm:$0xf] %v1186
  %1315 = vst [vmem:[%s4 + $0xc4] sm:$0xf] %v1187
  %1316 = vst [vmem:[%s4 + $0xc8] sm:$0xf] %v1188
  %1317 = vst [vmem:[%s4 + $0xcc] sm:$0xf] %v1189
  %1318 = vst [vmem:[%s4 + $0xd0] sm:$0xf] %v1190
  %1319 = vst [vmem:[%s4 + $0xd4] sm:$0xf] %v1191
  %1320 = vst [vmem:[%s4 + $0xd8] sm:$0xf] %v1192
  %1321 = vst [vmem:[%s4 + $0xdc] sm:$0xf] %v1193
  %1322 = vst [vmem:[%s4 + $0xe0] sm:$0xf] %v1194
  %1323 = vst [vmem:[%s4 + $0xe4] sm:$0xf] %v1195
  %1324 = vst [vmem:[%s4 + $0xe8] sm:$0xf] %v1196
  %1325 = vst [vmem:[%s4 + $0xec] sm:$0xf] %v1197
  %1326 = vst [vmem:[%s4 + $0xf0] sm:$0xf] %v1198
  %1327 = vst [vmem:[%s4 + $0xf4] sm:$0xf] %v1199
  %1328 = vst [vmem:[%s4 + $0xf8] sm:$0xf] %v1200
  %1329 = vst [vmem:[%s4 + $0xfc] sm:$0xf] %v1201
  // Predicated region
  $region18: #{bottleneck_forward.6} parent=0 // pred_check
    _
  $region19: #{bottleneck_forward.6} parent=0 // pred_check_branch
    %1331 = sbr.rel (0) target = $region21
  $region20: #{bottleneck_forward.6} parent=0 // pred_region
    _
  $region21: #{bottleneck_forward.6} parent=0 // pred_fallthru
    _
  // Predicated region
  $region22: #{bottleneck_forward.6} parent=0 // pred_check
    _
  $region23: #{bottleneck_forward.6} parent=0 // pred_check_branch
    %1333 = sbr.rel (0) target = $region25
  $region24: #{bottleneck_forward.6} parent=0 // pred_region
    _
  $region25: #{bottleneck_forward.6} parent=0 // pred_fallthru
    _
  // Predicated region
  $region26: #{bottleneck_forward.6} parent=0 // pred_check
    _
  $region27: #{bottleneck_forward.6} parent=0 // pred_check_branch
    %1335 = sbr.rel (0) target = $region29
  $region28: #{bottleneck_forward.6} parent=0 // pred_region
    _
  $region29: #{bottleneck_forward.6} parent=0 // pred_fallthru
    _
  // Predicated region
  $region30: #{bottleneck_forward.6} parent=0 // pred_check
    _
  $region31: #{bottleneck_forward.6} parent=0 // pred_check_branch
    %1337 = sbr.rel (0) target = $region33
  $region32: #{bottleneck_forward.6} parent=0 // pred_region
    _
  $region33: #{bottleneck_forward.6} parent=0 // pred_fallthru
    _

// kernel: bottleneck_forward.5
$region0: #{bottleneck_forward.5}
  #allocation0 [shape = 'u32[]', space=smem, size = 0x4, offset = 0x4, fixed_abs, tag = 'smem constant byte address 0x4 - core index']
  #allocation1 [shape = 'u32[144,128]{1,0:T(1,128)}', space=vmem, size = 0x12000, scoped, tag = 'internal scratch']
  #allocation2 [shape = 'f32[18,18,128]{2,1,0:T(8,128)}', space=vmem, size = 0x36000, scoped, tag = 'scratch operand']
  %s0 = inlined_call_operand.vmem [shape: bf16[2,256,128], index: 0, kind: input, shape index: {}]
  %s1 = inlined_call_operand.vmem [shape: f32[1,128], index: 1, kind: input, shape index: {}]
  %s2 = inlined_call_operand.vmem [shape: f32[1,128], index: 2, kind: input, shape index: {}]
  %s3 = inlined_call_operand.vmem [shape: bf16[1152,128], index: 3, kind: input, shape index: {}]
  %s4 = inlined_call_operand.vmem [shape: bf16[2,256,128], index: 4, kind: output, shape index: {0}]
  %s5 = inlined_call_operand.vmem [shape: f32[2,2,128], index: 5, kind: output, shape index: {1}]
  %6 = xla_tuple %s4, %s5
  %s7 = sld [smem:[#allocation0]]
  $region57: #{bottleneck_forward.5} parent=0
    _
  %s9 = ssub.s32 1, %s7
  %s10 = scalar_select 0, %s9, %s7
  loop: start=0, step=1, limit=4
  $region2: #{bottleneck_forward.5} parent=0 // loop_pre_header
    _
  $region3: #{bottleneck_forward.5} parent=0 // loop_header
    %s12 = sphi 0, %s16
    %p13 = scmp.ge.s32.totalorder %s12, 4
    %s22 = sphi 0, %s24
    %s25 = sphi 0, %s22
    %s26 = sphi 0, %s25
    %s42 = sphi 0, %s26
    %s46 = sphi 0, %s46
    %s48 = sphi 0, %s46
    %s49 = sphi 0, %s48
    %s63 = sphi 0, %s49
    %s67 = sphi 0, %s67
    %s69 = sphi 0, %s67
    %s70 = sphi 0, %s69
    %s84 = sphi 0, %s70
    %s88 = sphi 0, %s88
    %s90 = sphi 0, %s88
    %s91 = sphi 0, %s90
    %s105 = sphi 0, %s91
    %s111 = sphi 0, %s113
    %s114 = sphi 0, %s111
    %s115 = sphi 0, %s114
    %s131 = sphi 0, %s115
    %s137 = sphi 0, %s139
    %s140 = sphi 0, %s137
    %s141 = sphi 0, %s140
    %s157 = sphi 0, %s141
  $region4: #{bottleneck_forward.5} parent=0 // loop_header_branch
    %15 = sbr.rel (%p13) target = $region8
  $region5: #{bottleneck_forward.5} parent=0 // loop_body
    %s17 = ssub.s32 %s12, 1
    %s18 = ssub.s32 %s12, 2
    %s19 = sadd.s32 %s12, 1
    %s20 = ssub.s32 %s12, %s19
    %p21 = scmp.eq.s32.totalorder %s20, 0
    %s23 = sadd.s32 %s22, 1
    %s24 = scalar_select %p21, %s22, %s23
    %p27 = pneg %p21
    %p28 = scmp.eq.s32.totalorder %s12, 1
    %p29 = por %p27, %p28
    %p30 = scmp.ne.s32.totalorder %s22, %s25
    %p31 = scmp.eq.s32.totalorder %s12, 0
    %p32 = por %p30, %p31
    %p33 = scmp.ne.s32.totalorder %s22, %s25
    %p34 = scmp.eq.s32.totalorder %s17, 1
    %p35 = por %p33, %p34
    %p36 = scmp.ne.s32.totalorder %s25, %s26
    %p37 = scmp.eq.s32.totalorder %s17, 0
    %p38 = por %p36, %p37
    %p39 = scmp.ne.s32.totalorder %s25, %s26
    %p40 = scmp.eq.s32.totalorder %s18, 1
    %p41 = por %p39, %p40
    %p43 = scmp.ne.s32.totalorder %s26, %s42
    %p44 = scmp.eq.s32.totalorder %s18, 0
    %p45 = por %p43, %p44
    %s47 = sadd.s32 %s46, 1
    %p50 = scmp.eq.s32.totalorder %s12, 1
    %p51 = scmp.ne.s32.totalorder %s46, %s48
    %p52 = scmp.eq.s32.totalorder %s12, 0
    %p53 = por %p51, %p52
    %p54 = scmp.ne.s32.totalorder %s46, %s48
    %p55 = scmp.eq.s32.totalorder %s17, 1
    %p56 = por %p54, %p55
    %p57 = scmp.ne.s32.totalorder %s48, %s49
    %p58 = scmp.eq.s32.totalorder %s17, 0
    %p59 = por %p57, %p58
    %p60 = scmp.ne.s32.totalorder %s48, %s49
    %p61 = scmp.eq.s32.totalorder %s18, 1
    %p62 = por %p60, %p61
    %p64 = scmp.ne.s32.totalorder %s49, %s63
    %p65 = scmp.eq.s32.totalorder %s18, 0
    %p66 = por %p64, %p65
    %s68 = sadd.s32 %s67, 1
    %p71 = scmp.eq.s32.totalorder %s12, 1
    %p72 = scmp.ne.s32.totalorder %s67, %s69
    %p73 = scmp.eq.s32.totalorder %s12, 0
    %p74 = por %p72, %p73
    %p75 = scmp.ne.s32.totalorder %s67, %s69
    %p76 = scmp.eq.s32.totalorder %s17, 1
    %p77 = por %p75, %p76
    %p78 = scmp.ne.s32.totalorder %s69, %s70
    %p79 = scmp.eq.s32.totalorder %s17, 0
    %p80 = por %p78, %p79
    %p81 = scmp.ne.s32.totalorder %s69, %s70
    %p82 = scmp.eq.s32.totalorder %s18, 1
    %p83 = por %p81, %p82
    %p85 = scmp.ne.s32.totalorder %s70, %s84
    %p86 = scmp.eq.s32.totalorder %s18, 0
    %p87 = por %p85, %p86
    %s89 = sadd.s32 %s88, 1
    %p92 = scmp.eq.s32.totalorder %s12, 1
    %p93 = scmp.ne.s32.totalorder %s88, %s90
    %p94 = scmp.eq.s32.totalorder %s12, 0
    %p95 = por %p93, %p94
    %p96 = scmp.ne.s32.totalorder %s88, %s90
    %p97 = scmp.eq.s32.totalorder %s17, 1
    %p98 = por %p96, %p97
    %p99 = scmp.ne.s32.totalorder %s90, %s91
    %p100 = scmp.eq.s32.totalorder %s17, 0
    %p101 = por %p99, %p100
    %p102 = scmp.ne.s32.totalorder %s90, %s91
    %p103 = scmp.eq.s32.totalorder %s18, 1
    %p104 = por %p102, %p103
    %p106 = scmp.ne.s32.totalorder %s91, %s105
    %p107 = scmp.eq.s32.totalorder %s18, 0
    %p108 = por %p106, %p107
    %s109 = ssub.s32 %s12, %s19
    %p110 = scmp.eq.s32.totalorder %s109, 0
    %s112 = sadd.s32 %s111, 1
    %s113 = scalar_select %p110, %s111, %s112
    %p116 = pneg %p110
    %p117 = scmp.eq.s32.totalorder %s12, 1
    %p118 = por %p116, %p117
    %p119 = scmp.ne.s32.totalorder %s111, %s114
    %p120 = scmp.eq.s32.totalorder %s12, 0
    %p121 = por %p119, %p120
    %p122 = scmp.ne.s32.totalorder %s111, %s114
    %p123 = scmp.eq.s32.totalorder %s17, 1
    %p124 = por %p122, %p123
    %p125 = scmp.ne.s32.totalorder %s114, %s115
    %p126 = scmp.eq.s32.totalorder %s17, 0
    %p127 = por %p125, %p126
    %p128 = scmp.ne.s32.totalorder %s114, %s115
    %p129 = scmp.eq.s32.totalorder %s18, 1
    %p130 = por %p128, %p129
    %p132 = scmp.ne.s32.totalorder %s115, %s131
    %p133 = scmp.eq.s32.totalorder %s18, 0
    %p134 = por %p132, %p133
    %s135 = ssub.s32 %s12, %s19
    %p136 = scmp.eq.s32.totalorder %s135, 0
    %s138 = sadd.s32 %s137, 1
    %s139 = scalar_select %p136, %s137, %s138
    %p142 = pneg %p136
    %p143 = scmp.eq.s32.totalorder %s12, 1
    %p144 = por %p142, %p143
    %p145 = scmp.ne.s32.totalorder %s137, %s140
    %p146 = scmp.eq.s32.totalorder %s12, 0
    %p147 = por %p145, %p146
    %p148 = scmp.ne.s32.totalorder %s137, %s140
    %p149 = scmp.eq.s32.totalorder %s17, 1
    %p150 = por %p148, %p149
    %p151 = scmp.ne.s32.totalorder %s140, %s141
    %p152 = scmp.eq.s32.totalorder %s17, 0
    %p153 = por %p151, %p152
    %p154 = scmp.ne.s32.totalorder %s140, %s141
    %p155 = scmp.eq.s32.totalorder %s18, 1
    %p156 = por %p154, %p155
    %p158 = scmp.ne.s32.totalorder %s141, %s157
    %p159 = scmp.eq.s32.totalorder %s18, 0
    %p160 = por %p158, %p159
    %p161 = scmp.le.s32.totalorder 1, %s12
    %p162 = scmp.lt.s32.totalorder %s12, 3
    %p163 = pnand %p161, %p162
    %p164 = pneg %p163
    // Predicated region
    $region9: #{bottleneck_forward.5} parent=5 // pred_check
      _
    $region10: #{bottleneck_forward.5} parent=5 // pred_check_branch
      %166 = sbr.rel (%p163) target = $region12
    $region11: #{bottleneck_forward.5} parent=5 // pred_region
      %s167 = ssub.s32 %s12, 1
      // Predicated region
      $region13: #{bottleneck_forward.5} parent=11 // pred_check
        %p168 = pneg %p59
      $region14: #{bottleneck_forward.5} parent=11 // pred_check_branch
        %170 = sbr.rel (%p168) target = $region16
      $region15: #{bottleneck_forward.5} parent=11 // pred_region
        _
      $region16: #{bottleneck_forward.5} parent=11 // pred_fallthru
        _
      // Predicated region
      $region17: #{bottleneck_forward.5} parent=11 // pred_check
        %p171 = pneg %p80
      $region18: #{bottleneck_forward.5} parent=11 // pred_check_branch
        %173 = sbr.rel (%p171) target = $region20
      $region19: #{bottleneck_forward.5} parent=11 // pred_region
        _
      $region20: #{bottleneck_forward.5} parent=11 // pred_fallthru
        _
      // Predicated region
      $region21: #{bottleneck_forward.5} parent=11 // pred_check
        %p174 = pneg %p101
      $region22: #{bottleneck_forward.5} parent=11 // pred_check_branch
        %176 = sbr.rel (%p174) target = $region24
      $region23: #{bottleneck_forward.5} parent=11 // pred_region
        _
      $region24: #{bottleneck_forward.5} parent=11 // pred_fallthru
        _
    $region12: #{bottleneck_forward.5} parent=5 // pred_fallthru
      _
    %p177 = scmp.lt.s32.totalorder %s12, 2
    // Predicated region
    $region25: #{bottleneck_forward.5} parent=5 // pred_check
      %p178 = pneg %p177
    $region26: #{bottleneck_forward.5} parent=5 // pred_check_branch
      %180 = sbr.rel (%p178) target = $region28
    $region27: #{bottleneck_forward.5} parent=5 // pred_region
      // Predicated region
      $region29: #{bottleneck_forward.5} parent=27 // pred_check
        %p181 = pneg %p32
      $region30: #{bottleneck_forward.5} parent=27 // pred_check_branch
        %183 = sbr.rel (%p181) target = $region32
      $region31: #{bottleneck_forward.5} parent=27 // pred_region
        %p184 = scmp.lt.s32.totalorder %s12, 1
        %s185 = scalar_select %p184, %s12, 1
        %s186 = smul.addr %s185, 32
        %s187 = smul.addr %s186, 4
        %s188 = scalar_lea.vmem %s0, %s187
      $region32: #{bottleneck_forward.5} parent=27 // pred_fallthru
        _
    $region28: #{bottleneck_forward.5} parent=5 // pred_fallthru
      _
    %p189 = scmp.le.s32.totalorder 1, %s12
    %p190 = scmp.lt.s32.totalorder %s12, 3
    %p191 = pnand %p189, %p190
    %p192 = pneg %p191
    // Predicated region
    $region33: #{bottleneck_forward.5} parent=5 // pred_check
      _
    $region34: #{bottleneck_forward.5} parent=5 // pred_check_branch
      %194 = sbr.rel (%p191) target = $region36
    $region35: #{bottleneck_forward.5} parent=5 // pred_region
      %s195 = ssub.s32 %s12, 1
      %p196 = scmp.lt.s32.totalorder %s17, 1
      %s197 = scalar_select %p196, %s17, 1
      %s198 = smul.addr %s197, 32
      %s199 = smul.addr %s198, 4
      %s200 = scalar_lea.vmem %s0, %s199
      %p201 = pneg %p38
      %p202 = pneg %p35
      %p203 = pneg %p59
      %p204 = pneg %p56
      %p205 = pneg %p80
      %p206 = pneg %p77
      %p207 = pneg %p101
      %p208 = pneg %p98
      %p209 = pneg %p127
      %p210 = pneg %p124
      %p211 = scmp.lt.s32.totalorder %s17, 1
      %s212 = scalar_select %p211, %s17, 1
      %s213 = smul.addr %s212, 32
      %s214 = smul.addr %s213, 4
      %s215 = scalar_lea.vmem %s4, %s214
      %p216 = pneg %p153
      %p217 = pneg %p150
      %p218 = scmp.lt.s32.totalorder %s17, 1
      %s219 = scalar_select %p218, %s17, 1
      %s220 = smul.addr %s219, 2
      %s221 = scalar_lea.vmem %s5, %s220
      %p222 = scmp.lt.s32.totalorder %s17, 1
      %s223 = scalar_select %p222, %s17, 1
      %s224 = smul.addr %s223, 32
      %s225 = smul.addr %s224, 4
      %s226 = scalar_lea.vmem %s0, %s225
      %p227 = scmp.lt.s32.totalorder %s17, 1
      %s228 = scalar_select %p227, %s17, 1
      %s229 = smul.addr %s228, 32
      %s230 = smul.addr %s229, 4
      %s231 = scalar_lea.vmem %s4, %s230
      %p232 = scmp.lt.s32.totalorder %s17, 1
      %s233 = scalar_select %p232, %s17, 1
      %s234 = smul.addr %s233, 2
      %s235 = scalar_lea.vmem %s5, %s234
      %v237 = vld [vmem:[%s226] sm:$0xf]
      %v238 = vld [vmem:[%s226 + $0x4] sm:$0xf]
      %v239 = vld [vmem:[%s226 + $0x8] sm:$0xf]
      %v240 = vld [vmem:[%s226 + $0xc] sm:$0xf]
      %v241 = vld [vmem:[%s226 + $0x10] sm:$0xf]
      %v242 = vld [vmem:[%s226 + $0x14] sm:$0xf]
      %v243 = vld [vmem:[%s226 + $0x18] sm:$0xf]
      %v244 = vld [vmem:[%s226 + $0x1c] sm:$0xf]
      %v245 = vld [vmem:[%s226 + $0x20] sm:$0xf]
      %v246 = vld [vmem:[%s226 + $0x24] sm:$0xf]
      %v247 = vld [vmem:[%s226 + $0x28] sm:$0xf]
      %v248 = vld [vmem:[%s226 + $0x2c] sm:$0xf]
      %v249 = vld [vmem:[%s226 + $0x30] sm:$0xf]
      %v250 = vld [vmem:[%s226 + $0x34] sm:$0xf]
      %v251 = vld [vmem:[%s226 + $0x38] sm:$0xf]
      %v252 = vld [vmem:[%s226 + $0x3c] sm:$0xf]
      %v253 = vld [vmem:[%s226 + $0x40] sm:$0xf]
      %v254 = vld [vmem:[%s226 + $0x44] sm:$0xf]
      %v255 = vld [vmem:[%s226 + $0x48] sm:$0xf]
      %v256 = vld [vmem:[%s226 + $0x4c] sm:$0xf]
      %v257 = vld [vmem:[%s226 + $0x50] sm:$0xf]
      %v258 = vld [vmem:[%s226 + $0x54] sm:$0xf]
      %v259 = vld [vmem:[%s226 + $0x58] sm:$0xf]
      %v260 = vld [vmem:[%s226 + $0x5c] sm:$0xf]
      %v261 = vld [vmem:[%s226 + $0x60] sm:$0xf]
      %v262 = vld [vmem:[%s226 + $0x64] sm:$0xf]
      %v263 = vld [vmem:[%s226 + $0x68] sm:$0xf]
      %v264 = vld [vmem:[%s226 + $0x6c] sm:$0xf]
      %v265 = vld [vmem:[%s226 + $0x70] sm:$0xf]
      %v266 = vld [vmem:[%s226 + $0x74] sm:$0xf]
      %v267 = vld [vmem:[%s226 + $0x78] sm:$0xf]
      %v268 = vld [vmem:[%s226 + $0x7c] sm:$0xf]
      %v269 = vunpack.c.l.bf16 %v237
      %v270 = vunpack.c.l.bf16 %v238
      %v271 = vunpack.c.l.bf16 %v239
      %v272 = vunpack.c.l.bf16 %v240
      %v273 = vunpack.c.l.bf16 %v241
      %v274 = vunpack.c.l.bf16 %v242
      %v275 = vunpack.c.l.bf16 %v243
      %v276 = vunpack.c.l.bf16 %v244
      %v277 = vunpack.c.l.bf16 %v245
      %v278 = vunpack.c.l.bf16 %v246
      %v279 = vunpack.c.l.bf16 %v247
      %v280 = vunpack.c.l.bf16 %v248
      %v281 = vunpack.c.l.bf16 %v249
      %v282 = vunpack.c.l.bf16 %v250
      %v283 = vunpack.c.l.bf16 %v251
      %v284 = vunpack.c.l.bf16 %v252
      %v285 = vunpack.c.l.bf16 %v253
      %v286 = vunpack.c.l.bf16 %v254
      %v287 = vunpack.c.l.bf16 %v255
      %v288 = vunpack.c.l.bf16 %v256
      %v289 = vunpack.c.l.bf16 %v257
      %v290 = vunpack.c.l.bf16 %v258
      %v291 = vunpack.c.l.bf16 %v259
      %v292 = vunpack.c.l.bf16 %v260
      %v293 = vunpack.c.l.bf16 %v261
      %v294 = vunpack.c.l.bf16 %v262
      %v295 = vunpack.c.l.bf16 %v263
      %v296 = vunpack.c.l.bf16 %v264
      %v297 = vunpack.c.l.bf16 %v265
      %v298 = vunpack.c.l.bf16 %v266
      %v299 = vunpack.c.l.bf16 %v267
      %v300 = vunpack.c.l.bf16 %v268
      %v301 = vld [vmem:[%s1] sm:$0x1]
      %v303 = vlaneseq
      %v304 = vshrl.u32 %v303, 7
      %v305 = vsub.s32 0, %v304
      %v306 = vrot.slane %v301, %v305
      %v308 = vmul.f32 %v269, %v306
      %v309 = vmul.f32 %v270, %v306
      %v310 = vmul.f32 %v271, %v306
      %v311 = vmul.f32 %v272, %v306
      %v312 = vmul.f32 %v273, %v306
      %v313 = vmul.f32 %v274, %v306
      %v314 = vmul.f32 %v275, %v306
      %v315 = vmul.f32 %v276, %v306
      %v316 = vmul.f32 %v277, %v306
      %v317 = vmul.f32 %v278, %v306
      %v318 = vmul.f32 %v279, %v306
      %v319 = vmul.f32 %v280, %v306
      %v320 = vmul.f32 %v281, %v306
      %v321 = vmul.f32 %v282, %v306
      %v322 = vmul.f32 %v283, %v306
      %v323 = vmul.f32 %v284, %v306
      %v324 = vmul.f32 %v285, %v306
      %v325 = vmul.f32 %v286, %v306
      %v326 = vmul.f32 %v287, %v306
      %v327 = vmul.f32 %v288, %v306
      %v328 = vmul.f32 %v289, %v306
      %v329 = vmul.f32 %v290, %v306
      %v330 = vmul.f32 %v291, %v306
      %v331 = vmul.f32 %v292, %v306
      %v332 = vmul.f32 %v293, %v306
      %v333 = vmul.f32 %v294, %v306
      %v334 = vmul.f32 %v295, %v306
      %v335 = vmul.f32 %v296, %v306
      %v336 = vmul.f32 %v297, %v306
      %v337 = vmul.f32 %v298, %v306
      %v338 = vmul.f32 %v299, %v306
      %v339 = vmul.f32 %v300, %v306
      %v340 = vld [vmem:[%s2] sm:$0x1]
      %v342 = vlaneseq
      %v343 = vshrl.u32 %v342, 7
      %v344 = vsub.s32 0, %v343
      %v345 = vrot.slane %v340, %v344
      %v347 = vadd.f32 %v308, %v345
      %v348 = vadd.f32 %v309, %v345
      %v349 = vadd.f32 %v310, %v345
      %v350 = vadd.f32 %v311, %v345
      %v351 = vadd.f32 %v312, %v345
      %v352 = vadd.f32 %v313, %v345
      %v353 = vadd.f32 %v314, %v345
      %v354 = vadd.f32 %v315, %v345
      %v355 = vadd.f32 %v316, %v345
      %v356 = vadd.f32 %v317, %v345
      %v357 = vadd.f32 %v318, %v345
      %v358 = vadd.f32 %v319, %v345
      %v359 = vadd.f32 %v320, %v345
      %v360 = vadd.f32 %v321, %v345
      %v361 = vadd.f32 %v322, %v345
      %v362 = vadd.f32 %v323, %v345
      %v363 = vadd.f32 %v324, %v345
      %v364 = vadd.f32 %v325, %v345
      %v365 = vadd.f32 %v326, %v345
      %v366 = vadd.f32 %v327, %v345
      %v367 = vadd.f32 %v328, %v345
      %v368 = vadd.f32 %v329, %v345
      %v369 = vadd.f32 %v330, %v345
      %v370 = vadd.f32 %v331, %v345
      %v371 = vadd.f32 %v332, %v345
      %v372 = vadd.f32 %v333, %v345
      %v373 = vadd.f32 %v334, %v345
      %v374 = vadd.f32 %v335, %v345
      %v375 = vadd.f32 %v336, %v345
      %v376 = vadd.f32 %v337, %v345
      %v377 = vadd.f32 %v338, %v345
      %v378 = vadd.f32 %v339, %v345
      %v379 = vmax.f32 %v347, 0.0
      %v380 = vmax.f32 %v348, 0.0
      %v381 = vmax.f32 %v349, 0.0
      %v382 = vmax.f32 %v350, 0.0
      %v383 = vmax.f32 %v351, 0.0
      %v384 = vmax.f32 %v352, 0.0
      %v385 = vmax.f32 %v353, 0.0
      %v386 = vmax.f32 %v354, 0.0
      %v387 = vmax.f32 %v355, 0.0
      %v388 = vmax.f32 %v356, 0.0
      %v389 = vmax.f32 %v357, 0.0
      %v390 = vmax.f32 %v358, 0.0
      %v391 = vmax.f32 %v359, 0.0
      %v392 = vmax.f32 %v360, 0.0
      %v393 = vmax.f32 %v361, 0.0
      %v394 = vmax.f32 %v362, 0.0
      %v395 = vmax.f32 %v363, 0.0
      %v396 = vmax.f32 %v364, 0.0
      %v397 = vmax.f32 %v365, 0.0
      %v398 = vmax.f32 %v366, 0.0
      %v399 = vmax.f32 %v367, 0.0
      %v400 = vmax.f32 %v368, 0.0
      %v401 = vmax.f32 %v369, 0.0
      %v402 = vmax.f32 %v370, 0.0
      %v403 = vmax.f32 %v371, 0.0
      %v404 = vmax.f32 %v372, 0.0
      %v405 = vmax.f32 %v373, 0.0
      %v406 = vmax.f32 %v374, 0.0
      %v407 = vmax.f32 %v375, 0.0
      %v408 = vmax.f32 %v376, 0.0
      %v409 = vmax.f32 %v377, 0.0
      %v410 = vmax.f32 %v378, 0.0
      %411 = vst [vmem:[#allocation2] sm:$0xff] 0.0
      %412 = vst [vmem:[#allocation2 + $0x8] sm:$0xff] 0.0
      %413 = vst [vmem:[#allocation2 + $0x10] sm:$0x3] 0.0
      %414 = vst [vmem:[#allocation2 + $0x18] sm:$0xff] 0.0
      %415 = vst [vmem:[#allocation2 + $0x20] sm:$0xff] 0.0
      %416 = vst [vmem:[#allocation2 + $0x28] sm:$0x3] 0.0
      %417 = vst [vmem:[#allocation2 + $0x30] sm:$0xff] 0.0
      %418 = vst [vmem:[#allocation2 + $0x38] sm:$0xff] 0.0
      %419 = vst [vmem:[#allocation2 + $0x40] sm:$0x3] 0.0
      %420 = vst [vmem:[#allocation2 + $0x48] sm:$0xff] 0.0
      %421 = vst [vmem:[#allocation2 + $0x50] sm:$0xff] 0.0
      %422 = vst [vmem:[#allocation2 + $0x58] sm:$0x3] 0.0
      %423 = vst [vmem:[#allocation2 + $0x60] sm:$0xff] 0.0
      %424 = vst [vmem:[#allocation2 + $0x68] sm:$0xff] 0.0
      %425 = vst [vmem:[#allocation2 + $0x70] sm:$0x3] 0.0
      %426 = vst [vmem:[#allocation2 + $0x78] sm:$0xff] 0.0
      %427 = vst [vmem:[#allocation2 + $0x80] sm:$0xff] 0.0
      %428 = vst [vmem:[#allocation2 + $0x88] sm:$0x3] 0.0
      %429 = vst [vmem:[#allocation2 + $0x90] sm:$0xff] 0.0
      %430 = vst [vmem:[#allocation2 + $0x98] sm:$0xff] 0.0
      %431 = vst [vmem:[#allocation2 + $0xa0] sm:$0x3] 0.0
      %432 = vst [vmem:[#allocation2 + $0xa8] sm:$0xff] 0.0
      %433 = vst [vmem:[#allocation2 + $0xb0] sm:$0xff] 0.0
      %434 = vst [vmem:[#allocation2 + $0xb8] sm:$0x3] 0.0
      %435 = vst [vmem:[#allocation2 + $0xc0] sm:$0xff] 0.0
      %436 = vst [vmem:[#allocation2 + $0xc8] sm:$0xff] 0.0
      %437 = vst [vmem:[#allocation2 + $0xd0] sm:$0x3] 0.0
      %438 = vst [vmem:[#allocation2 + $0xd8] sm:$0xff] 0.0
      %439 = vst [vmem:[#allocation2 + $0xe0] sm:$0xff] 0.0
      %440 = vst [vmem:[#allocation2 + $0xe8] sm:$0x3] 0.0
      %441 = vst [vmem:[#allocation2 + $0xf0] sm:$0xff] 0.0
      %442 = vst [vmem:[#allocation2 + $0xf8] sm:$0xff] 0.0
      %443 = vst [vmem:[#allocation2 + $0x100] sm:$0x3] 0.0
      %444 = vst [vmem:[#allocation2 + $0x108] sm:$0xff] 0.0
      %445 = vst [vmem:[#allocation2 + $0x110] sm:$0xff] 0.0
      %446 = vst [vmem:[#allocation2 + $0x118] sm:$0x3] 0.0
      %447 = vst [vmem:[#allocation2 + $0x120] sm:$0xff] 0.0
      %448 = vst [vmem:[#allocation2 + $0x128] sm:$0xff] 0.0
      %449 = vst [vmem:[#allocation2 + $0x130] sm:$0x3] 0.0
      %450 = vst [vmem:[#allocation2 + $0x138] sm:$0xff] 0.0
      %451 = vst [vmem:[#allocation2 + $0x140] sm:$0xff] 0.0
      %452 = vst [vmem:[#allocation2 + $0x148] sm:$0x3] 0.0
      %453 = vst [vmem:[#allocation2 + $0x150] sm:$0xff] 0.0
      %454 = vst [vmem:[#allocation2 + $0x158] sm:$0xff] 0.0
      %455 = vst [vmem:[#allocation2 + $0x160] sm:$0x3] 0.0
      %456 = vst [vmem:[#allocation2 + $0x168] sm:$0xff] 0.0
      %457 = vst [vmem:[#allocation2 + $0x170] sm:$0xff] 0.0
      %458 = vst [vmem:[#allocation2 + $0x178] sm:$0x3] 0.0
      %459 = vst [vmem:[#allocation2 + $0x180] sm:$0xff] 0.0
      %460 = vst [vmem:[#allocation2 + $0x188] sm:$0xff] 0.0
      %461 = vst [vmem:[#allocation2 + $0x190] sm:$0x3] 0.0
      %462 = vst [vmem:[#allocation2 + $0x198] sm:$0xff] 0.0
      %463 = vst [vmem:[#allocation2 + $0x1a0] sm:$0xff] 0.0
      %464 = vst [vmem:[#allocation2 + $0x1a8] sm:$0x3] 0.0
      %s465 = scalar_lea.vmem [#allocation2], 24
      %466 = vst [vmem:[%s465 + $0x1] sm:$0xff] %v379
      %467 = vst [vmem:[%s465 + $0x9] sm:$0xff] %v380
      %468 = vst [vmem:[%s465 + $0x19] sm:$0xff] %v381
      %469 = vst [vmem:[%s465 + $0x21] sm:$0xff] %v382
      %470 = vst [vmem:[%s465 + $0x31] sm:$0xff] %v383
      %471 = vst [vmem:[%s465 + $0x39] sm:$0xff] %v384
      %472 = vst [vmem:[%s465 + $0x49] sm:$0xff] %v385
      %473 = vst [vmem:[%s465 + $0x51] sm:$0xff] %v386
      %474 = vst [vmem:[%s465 + $0x61] sm:$0xff] %v387
      %475 = vst [vmem:[%s465 + $0x69] sm:$0xff] %v388
      %476 = vst [vmem:[%s465 + $0x79] sm:$0xff] %v389
      %477 = vst [vmem:[%s465 + $0x81] sm:$0xff] %v390
      %478 = vst [vmem:[%s465 + $0x91] sm:$0xff] %v391
      %479 = vst [vmem:[%s465 + $0x99] sm:$0xff] %v392
      %480 = vst [vmem:[%s465 + $0xa9] sm:$0xff] %v393
      %481 = vst [vmem:[%s465 + $0xb1] sm:$0xff] %v394
      %482 = vst [vmem:[%s465 + $0xc1] sm:$0xff] %v395
      %483 = vst [vmem:[%s465 + $0xc9] sm:$0xff] %v396
      %484 = vst [vmem:[%s465 + $0xd9] sm:$0xff] %v397
      %485 = vst [vmem:[%s465 + $0xe1] sm:$0xff] %v398
      %486 = vst [vmem:[%s465 + $0xf1] sm:$0xff] %v399
      %487 = vst [vmem:[%s465 + $0xf9] sm:$0xff] %v400
      %488 = vst [vmem:[%s465 + $0x109] sm:$0xff] %v401
      %489 = vst [vmem:[%s465 + $0x111] sm:$0xff] %v402
      %490 = vst [vmem:[%s465 + $0x121] sm:$0xff] %v403
      %491 = vst [vmem:[%s465 + $0x129] sm:$0xff] %v404
      %492 = vst [vmem:[%s465 + $0x139] sm:$0xff] %v405
      %493 = vst [vmem:[%s465 + $0x141] sm:$0xff] %v406
      %494 = vst [vmem:[%s465 + $0x151] sm:$0xff] %v407
      %495 = vst [vmem:[%s465 + $0x159] sm:$0xff] %v408
      %496 = vst [vmem:[%s465 + $0x169] sm:$0xff] %v409
      %497 = vst [vmem:[%s465 + $0x171] sm:$0xff] %v410
      %v498 = vld [vmem:[#allocation2] sm:$0xff]
      %v499 = vld [vmem:[#allocation2 + $0x8] sm:$0xff]
      %v500 = vld [vmem:[#allocation2 + $0x18] sm:$0xff]
      %v501 = vld [vmem:[#allocation2 + $0x20] sm:$0xff]
      %v502 = vld [vmem:[#allocation2 + $0x30] sm:$0xff]
      %v503 = vld [vmem:[#allocation2 + $0x38] sm:$0xff]
      %v504 = vld [vmem:[#allocation2 + $0x48] sm:$0xff]
      %v505 = vld [vmem:[#allocation2 + $0x50] sm:$0xff]
      %v506 = vld [vmem:[#allocation2 + $0x60] sm:$0xff]
      %v507 = vld [vmem:[#allocation2 + $0x68] sm:$0xff]
      %v508 = vld [vmem:[#allocation2 + $0x78] sm:$0xff]
      %v509 = vld [vmem:[#allocation2 + $0x80] sm:$0xff]
      %v510 = vld [vmem:[#allocation2 + $0x90] sm:$0xff]
      %v511 = vld [vmem:[#allocation2 + $0x98] sm:$0xff]
      %v512 = vld [vmem:[#allocation2 + $0xa8] sm:$0xff]
      %v513 = vld [vmem:[#allocation2 + $0xb0] sm:$0xff]
      %v514 = vld [vmem:[#allocation2 + $0xc0] sm:$0xff]
      %v515 = vld [vmem:[#allocation2 + $0xc8] sm:$0xff]
      %v516 = vld [vmem:[#allocation2 + $0xd8] sm:$0xff]
      %v517 = vld [vmem:[#allocation2 + $0xe0] sm:$0xff]
      %v518 = vld [vmem:[#allocation2 + $0xf0] sm:$0xff]
      %v519 = vld [vmem:[#allocation2 + $0xf8] sm:$0xff]
      %v520 = vld [vmem:[#allocation2 + $0x108] sm:$0xff]
      %v521 = vld [vmem:[#allocation2 + $0x110] sm:$0xff]
      %v522 = vld [vmem:[#allocation2 + $0x120] sm:$0xff]
      %v523 = vld [vmem:[#allocation2 + $0x128] sm:$0xff]
      %v524 = vld [vmem:[#allocation2 + $0x138] sm:$0xff]
      %v525 = vld [vmem:[#allocation2 + $0x140] sm:$0xff]
      %v526 = vld [vmem:[#allocation2 + $0x150] sm:$0xff]
      %v527 = vld [vmem:[#allocation2 + $0x158] sm:$0xff]
      %v528 = vld [vmem:[#allocation2 + $0x168] sm:$0xff]
      %v529 = vld [vmem:[#allocation2 + $0x170] sm:$0xff]
      %v530 = vld [vmem:[#allocation2 + $0x1] sm:$0xff]
      %v531 = vld [vmem:[#allocation2 + $0x9] sm:$0xff]
      %v532 = vld [vmem:[#allocation2 + $0x19] sm:$0xff]
      %v533 = vld [vmem:[#allocation2 + $0x21] sm:$0xff]
      %v534 = vld [vmem:[#allocation2 + $0x31] sm:$0xff]
      %v535 = vld [vmem:[#allocation2 + $0x39] sm:$0xff]
      %v536 = vld [vmem:[#allocation2 + $0x49] sm:$0xff]
      %v537 = vld [vmem:[#allocation2 + $0x51] sm:$0xff]
      %v538 = vld [vmem:[#allocation2 + $0x61] sm:$0xff]
      %v539 = vld [vmem:[#allocation2 + $0x69] sm:$0xff]
      %v540 = vld [vmem:[#allocation2 + $0x79] sm:$0xff]
      %v541 = vld [vmem:[#allocation2 + $0x81] sm:$0xff]
      %v542 = vld [vmem:[#allocation2 + $0x91] sm:$0xff]
      %v543 = vld [vmem:[#allocation2 + $0x99] sm:$0xff]
      %v544 = vld [vmem:[#allocation2 + $0xa9] sm:$0xff]
      %v545 = vld [vmem:[#allocation2 + $0xb1] sm:$0xff]
      %v546 = vld [vmem:[#allocation2 + $0xc1] sm:$0xff]
      %v547 = vld [vmem:[#allocation2 + $0xc9] sm:$0xff]
      %v548 = vld [vmem:[#allocation2 + $0xd9] sm:$0xff]
      %v549 = vld [vmem:[#allocation2 + $0xe1] sm:$0xff]
      %v550 = vld [vmem:[#allocation2 + $0xf1] sm:$0xff]
      %v551 = vld [vmem:[#allocation2 + $0xf9] sm:$0xff]
      %v552 = vld [vmem:[#allocation2 + $0x109] sm:$0xff]
      %v553 = vld [vmem:[#allocation2 + $0x111] sm:$0xff]
      %v554 = vld [vmem:[#allocation2 + $0x121] sm:$0xff]
      %v555 = vld [vmem:[#allocation2 + $0x129] sm:$0xff]
      %v556 = vld [vmem:[#allocation2 + $0x139] sm:$0xff]
      %v557 = vld [vmem:[#allocation2 + $0x141] sm:$0xff]
      %v558 = vld [vmem:[#allocation2 + $0x151] sm:$0xff]
      %v559 = vld [vmem:[#allocation2 + $0x159] sm:$0xff]
      %v560 = vld [vmem:[#allocation2 + $0x169] sm:$0xff]
      %v561 = vld [vmem:[#allocation2 + $0x171] sm:$0xff]
      %v562 = vld [vmem:[#allocation2 + $0x2] sm:$0xff]
      %v563 = vld [vmem:[#allocation2 + $0xa] sm:$0xff]
      %v564 = vld [vmem:[#allocation2 + $0x1a] sm:$0xff]
      %v565 = vld [vmem:[#allocation2 + $0x22] sm:$0xff]
      %v566 = vld [vmem:[#allocation2 + $0x32] sm:$0xff]
      %v567 = vld [vmem:[#allocation2 + $0x3a] sm:$0xff]
      %v568 = vld [vmem:[#allocation2 + $0x4a] sm:$0xff]
      %v569 = vld [vmem:[#allocation2 + $0x52] sm:$0xff]
      %v570 = vld [vmem:[#allocation2 + $0x62] sm:$0xff]
      %v571 = vld [vmem:[#allocation2 + $0x6a] sm:$0xff]
      %v572 = vld [vmem:[#allocation2 + $0x7a] sm:$0xff]
      %v573 = vld [vmem:[#allocation2 + $0x82] sm:$0xff]
      %v574 = vld [vmem:[#allocation2 + $0x92] sm:$0xff]
      %v575 = vld [vmem:[#allocation2 + $0x9a] sm:$0xff]
      %v576 = vld [vmem:[#allocation2 + $0xaa] sm:$0xff]
      %v577 = vld [vmem:[#allocation2 + $0xb2] sm:$0xff]
      %v578 = vld [vmem:[#allocation2 + $0xc2] sm:$0xff]
      %v579 = vld [vmem:[#allocation2 + $0xca] sm:$0xff]
      %v580 = vld [vmem:[#allocation2 + $0xda] sm:$0xff]
      %v581 = vld [vmem:[#allocation2 + $0xe2] sm:$0xff]
      %v582 = vld [vmem:[#allocation2 + $0xf2] sm:$0xff]
      %v583 = vld [vmem:[#allocation2 + $0xfa] sm:$0xff]
      %v584 = vld [vmem:[#allocation2 + $0x10a] sm:$0xff]
      %v585 = vld [vmem:[#allocation2 + $0x112] sm:$0xff]
      %v586 = vld [vmem:[#allocation2 + $0x122] sm:$0xff]
      %v587 = vld [vmem:[#allocation2 + $0x12a] sm:$0xff]
      %v588 = vld [vmem:[#allocation2 + $0x13a] sm:$0xff]
      %v589 = vld [vmem:[#allocation2 + $0x142] sm:$0xff]
      %v590 = vld [vmem:[#allocation2 + $0x152] sm:$0xff]
      %v591 = vld [vmem:[#allocation2 + $0x15a] sm:$0xff]
      %v592 = vld [vmem:[#allocation2 + $0x16a] sm:$0xff]
      %v593 = vld [vmem:[#allocation2 + $0x172] sm:$0xff]
      %v594 = vld [vmem:[%s465] sm:$0xff]
      %v595 = vld [vmem:[%s465 + $0x8] sm:$0xff]
      %v596 = vld [vmem:[%s465 + $0x18] sm:$0xff]
      %v597 = vld [vmem:[%s465 + $0x20] sm:$0xff]
      %v598 = vld [vmem:[%s465 + $0x30] sm:$0xff]
      %v599 = vld [vmem:[%s465 + $0x38] sm:$0xff]
      %v600 = vld [vmem:[%s465 + $0x48] sm:$0xff]
      %v601 = vld [vmem:[%s465 + $0x50] sm:$0xff]
      %v602 = vld [vmem:[%s465 + $0x60] sm:$0xff]
      %v603 = vld [vmem:[%s465 + $0x68] sm:$0xff]
      %v604 = vld [vmem:[%s465 + $0x78] sm:$0xff]
      %v605 = vld [vmem:[%s465 + $0x80] sm:$0xff]
      %v606 = vld [vmem:[%s465 + $0x90] sm:$0xff]
      %v607 = vld [vmem:[%s465 + $0x98] sm:$0xff]
      %v608 = vld [vmem:[%s465 + $0xa8] sm:$0xff]
      %v609 = vld [vmem:[%s465 + $0xb0] sm:$0xff]
      %v610 = vld [vmem:[%s465 + $0xc0] sm:$0xff]
      %v611 = vld [vmem:[%s465 + $0xc8] sm:$0xff]
      %v612 = vld [vmem:[%s465 + $0xd8] sm:$0xff]
      %v613 = vld [vmem:[%s465 + $0xe0] sm:$0xff]
      %v614 = vld [vmem:[%s465 + $0xf0] sm:$0xff]
      %v615 = vld [vmem:[%s465 + $0xf8] sm:$0xff]
      %v616 = vld [vmem:[%s465 + $0x108] sm:$0xff]
      %v617 = vld [vmem:[%s465 + $0x110] sm:$0xff]
      %v618 = vld [vmem:[%s465 + $0x120] sm:$0xff]
      %v619 = vld [vmem:[%s465 + $0x128] sm:$0xff]
      %v620 = vld [vmem:[%s465 + $0x138] sm:$0xff]
      %v621 = vld [vmem:[%s465 + $0x140] sm:$0xff]
      %v622 = vld [vmem:[%s465 + $0x150] sm:$0xff]
      %v623 = vld [vmem:[%s465 + $0x158] sm:$0xff]
      %v624 = vld [vmem:[%s465 + $0x168] sm:$0xff]
      %v625 = vld [vmem:[%s465 + $0x170] sm:$0xff]
      %v626 = vld [vmem:[%s465 + $0x1] sm:$0xff]
      %v627 = vld [vmem:[%s465 + $0x9] sm:$0xff]
      %v628 = vld [vmem:[%s465 + $0x19] sm:$0xff]
      %v629 = vld [vmem:[%s465 + $0x21] sm:$0xff]
      %v630 = vld [vmem:[%s465 + $0x31] sm:$0xff]
      %v631 = vld [vmem:[%s465 + $0x39] sm:$0xff]
      %v632 = vld [vmem:[%s465 + $0x49] sm:$0xff]
      %v633 = vld [vmem:[%s465 + $0x51] sm:$0xff]
      %v634 = vld [vmem:[%s465 + $0x61] sm:$0xff]
      %v635 = vld [vmem:[%s465 + $0x69] sm:$0xff]
      %v636 = vld [vmem:[%s465 + $0x79] sm:$0xff]
      %v637 = vld [vmem:[%s465 + $0x81] sm:$0xff]
      %v638 = vld [vmem:[%s465 + $0x91] sm:$0xff]
      %v639 = vld [vmem:[%s465 + $0x99] sm:$0xff]
      %v640 = vld [vmem:[%s465 + $0xa9] sm:$0xff]
      %v641 = vld [vmem:[%s465 + $0xb1] sm:$0xff]
      %v642 = vld [vmem:[%s465 + $0xc1] sm:$0xff]
      %v643 = vld [vmem:[%s465 + $0xc9] sm:$0xff]
      %v644 = vld [vmem:[%s465 + $0xd9] sm:$0xff]
      %v645 = vld [vmem:[%s465 + $0xe1] sm:$0xff]
      %v646 = vld [vmem:[%s465 + $0xf1] sm:$0xff]
      %v647 = vld [vmem:[%s465 + $0xf9] sm:$0xff]
      %v648 = vld [vmem:[%s465 + $0x109] sm:$0xff]
      %v649 = vld [vmem:[%s465 + $0x111] sm:$0xff]
      %v650 = vld [vmem:[%s465 + $0x121] sm:$0xff]
      %v651 = vld [vmem:[%s465 + $0x129] sm:$0xff]
      %v652 = vld [vmem:[%s465 + $0x139] sm:$0xff]
      %v653 = vld [vmem:[%s465 + $0x141] sm:$0xff]
      %v654 = vld [vmem:[%s465 + $0x151] sm:$0xff]
      %v655 = vld [vmem:[%s465 + $0x159] sm:$0xff]
      %v656 = vld [vmem:[%s465 + $0x169] sm:$0xff]
      %v657 = vld [vmem:[%s465 + $0x171] sm:$0xff]
      %v658 = vld [vmem:[%s465 + $0x2] sm:$0xff]
      %v659 = vld [vmem:[%s465 + $0xa] sm:$0xff]
      %v660 = vld [vmem:[%s465 + $0x1a] sm:$0xff]
      %v661 = vld [vmem:[%s465 + $0x22] sm:$0xff]
      %v662 = vld [vmem:[%s465 + $0x32] sm:$0xff]
      %v663 = vld [vmem:[%s465 + $0x3a] sm:$0xff]
      %v664 = vld [vmem:[%s465 + $0x4a] sm:$0xff]
      %v665 = vld [vmem:[%s465 + $0x52] sm:$0xff]
      %v666 = vld [vmem:[%s465 + $0x62] sm:$0xff]
      %v667 = vld [vmem:[%s465 + $0x6a] sm:$0xff]
      %v668 = vld [vmem:[%s465 + $0x7a] sm:$0xff]
      %v669 = vld [vmem:[%s465 + $0x82] sm:$0xff]
      %v670 = vld [vmem:[%s465 + $0x92] sm:$0xff]
      %v671 = vld [vmem:[%s465 + $0x9a] sm:$0xff]
      %v672 = vld [vmem:[%s465 + $0xaa] sm:$0xff]
      %v673 = vld [vmem:[%s465 + $0xb2] sm:$0xff]
      %v674 = vld [vmem:[%s465 + $0xc2] sm:$0xff]
      %v675 = vld [vmem:[%s465 + $0xca] sm:$0xff]
      %v676 = vld [vmem:[%s465 + $0xda] sm:$0xff]
      %v677 = vld [vmem:[%s465 + $0xe2] sm:$0xff]
      %v678 = vld [vmem:[%s465 + $0xf2] sm:$0xff]
      %v679 = vld [vmem:[%s465 + $0xfa] sm:$0xff]
      %v680 = vld [vmem:[%s465 + $0x10a] sm:$0xff]
      %v681 = vld [vmem:[%s465 + $0x112] sm:$0xff]
      %v682 = vld [vmem:[%s465 + $0x122] sm:$0xff]
      %v683 = vld [vmem:[%s465 + $0x12a] sm:$0xff]
      %v684 = vld [vmem:[%s465 + $0x13a] sm:$0xff]
      %v685 = vld [vmem:[%s465 + $0x142] sm:$0xff]
      %v686 = vld [vmem:[%s465 + $0x152] sm:$0xff]
      %v687 = vld [vmem:[%s465 + $0x15a] sm:$0xff]
      %v688 = vld [vmem:[%s465 + $0x16a] sm:$0xff]
      %v689 = vld [vmem:[%s465 + $0x172] sm:$0xff]
      %s690 = scalar_lea.vmem [#allocation2], 48
      %v691 = vld [vmem:[%s690] sm:$0xff]
      %v692 = vld [vmem:[%s690 + $0x8] sm:$0xff]
      %v693 = vld [vmem:[%s690 + $0x18] sm:$0xff]
      %v694 = vld [vmem:[%s690 + $0x20] sm:$0xff]
      %v695 = vld [vmem:[%s690 + $0x30] sm:$0xff]
      %v696 = vld [vmem:[%s690 + $0x38] sm:$0xff]
      %v697 = vld [vmem:[%s690 + $0x48] sm:$0xff]
      %v698 = vld [vmem:[%s690 + $0x50] sm:$0xff]
      %v699 = vld [vmem:[%s690 + $0x60] sm:$0xff]
      %v700 = vld [vmem:[%s690 + $0x68] sm:$0xff]
      %v701 = vld [vmem:[%s690 + $0x78] sm:$0xff]
      %v702 = vld [vmem:[%s690 + $0x80] sm:$0xff]
      %v703 = vld [vmem:[%s690 + $0x90] sm:$0xff]
      %v704 = vld [vmem:[%s690 + $0x98] sm:$0xff]
      %v705 = vld [vmem:[%s690 + $0xa8] sm:$0xff]
      %v706 = vld [vmem:[%s690 + $0xb0] sm:$0xff]
      %v707 = vld [vmem:[%s690 + $0xc0] sm:$0xff]
      %v708 = vld [vmem:[%s690 + $0xc8] sm:$0xff]
      %v709 = vld [vmem:[%s690 + $0xd8] sm:$0xff]
      %v710 = vld [vmem:[%s690 + $0xe0] sm:$0xff]
      %v711 = vld [vmem:[%s690 + $0xf0] sm:$0xff]
      %v712 = vld [vmem:[%s690 + $0xf8] sm:$0xff]
      %v713 = vld [vmem:[%s690 + $0x108] sm:$0xff]
      %v714 = vld [vmem:[%s690 + $0x110] sm:$0xff]
      %v715 = vld [vmem:[%s690 + $0x120] sm:$0xff]
      %v716 = vld [vmem:[%s690 + $0x128] sm:$0xff]
      %v717 = vld [vmem:[%s690 + $0x138] sm:$0xff]
      %v718 = vld [vmem:[%s690 + $0x140] sm:$0xff]
      %v719 = vld [vmem:[%s690 + $0x150] sm:$0xff]
      %v720 = vld [vmem:[%s690 + $0x158] sm:$0xff]
      %v721 = vld [vmem:[%s690 + $0x168] sm:$0xff]
      %v722 = vld [vmem:[%s690 + $0x170] sm:$0xff]
      %v723 = vld [vmem:[%s690 + $0x1] sm:$0xff]
      %v724 = vld [vmem:[%s690 + $0x9] sm:$0xff]
      %v725 = vld [vmem:[%s690 + $0x19] sm:$0xff]
      %v726 = vld [vmem:[%s690 + $0x21] sm:$0xff]
      %v727 = vld [vmem:[%s690 + $0x31] sm:$0xff]
      %v728 = vld [vmem:[%s690 + $0x39] sm:$0xff]
      %v729 = vld [vmem:[%s690 + $0x49] sm:$0xff]
      %v730 = vld [vmem:[%s690 + $0x51] sm:$0xff]
      %v731 = vld [vmem:[%s690 + $0x61] sm:$0xff]
      %v732 = vld [vmem:[%s690 + $0x69] sm:$0xff]
      %v733 = vld [vmem:[%s690 + $0x79] sm:$0xff]
      %v734 = vld [vmem:[%s690 + $0x81] sm:$0xff]
      %v735 = vld [vmem:[%s690 + $0x91] sm:$0xff]
      %v736 = vld [vmem:[%s690 + $0x99] sm:$0xff]
      %v737 = vld [vmem:[%s690 + $0xa9] sm:$0xff]
      %v738 = vld [vmem:[%s690 + $0xb1] sm:$0xff]
      %v739 = vld [vmem:[%s690 + $0xc1] sm:$0xff]
      %v740 = vld [vmem:[%s690 + $0xc9] sm:$0xff]
      %v741 = vld [vmem:[%s690 + $0xd9] sm:$0xff]
      %v742 = vld [vmem:[%s690 + $0xe1] sm:$0xff]
      %v743 = vld [vmem:[%s690 + $0xf1] sm:$0xff]
      %v744 = vld [vmem:[%s690 + $0xf9] sm:$0xff]
      %v745 = vld [vmem:[%s690 + $0x109] sm:$0xff]
      %v746 = vld [vmem:[%s690 + $0x111] sm:$0xff]
      %v747 = vld [vmem:[%s690 + $0x121] sm:$0xff]
      %v748 = vld [vmem:[%s690 + $0x129] sm:$0xff]
      %v749 = vld [vmem:[%s690 + $0x139] sm:$0xff]
      %v750 = vld [vmem:[%s690 + $0x141] sm:$0xff]
      %v751 = vld [vmem:[%s690 + $0x151] sm:$0xff]
      %v752 = vld [vmem:[%s690 + $0x159] sm:$0xff]
      %v753 = vld [vmem:[%s690 + $0x169] sm:$0xff]
      %v754 = vld [vmem:[%s690 + $0x171] sm:$0xff]
      %v755 = vld [vmem:[%s690 + $0x2] sm:$0xff]
      %v756 = vld [vmem:[%s690 + $0xa] sm:$0xff]
      %v757 = vld [vmem:[%s690 + $0x1a] sm:$0xff]
      %v758 = vld [vmem:[%s690 + $0x22] sm:$0xff]
      %v759 = vld [vmem:[%s690 + $0x32] sm:$0xff]
      %v760 = vld [vmem:[%s690 + $0x3a] sm:$0xff]
      %v761 = vld [vmem:[%s690 + $0x4a] sm:$0xff]
      %v762 = vld [vmem:[%s690 + $0x52] sm:$0xff]
      %v763 = vld [vmem:[%s690 + $0x62] sm:$0xff]
      %v764 = vld [vmem:[%s690 + $0x6a] sm:$0xff]
      %v765 = vld [vmem:[%s690 + $0x7a] sm:$0xff]
      %v766 = vld [vmem:[%s690 + $0x82] sm:$0xff]
      %v767 = vld [vmem:[%s690 + $0x92] sm:$0xff]
      %v768 = vld [vmem:[%s690 + $0x9a] sm:$0xff]
      %v769 = vld [vmem:[%s690 + $0xaa] sm:$0xff]
      %v770 = vld [vmem:[%s690 + $0xb2] sm:$0xff]
      %v771 = vld [vmem:[%s690 + $0xc2] sm:$0xff]
      %v772 = vld [vmem:[%s690 + $0xca] sm:$0xff]
      %v773 = vld [vmem:[%s690 + $0xda] sm:$0xff]
      %v774 = vld [vmem:[%s690 + $0xe2] sm:$0xff]
      %v775 = vld [vmem:[%s690 + $0xf2] sm:$0xff]
      %v776 = vld [vmem:[%s690 + $0xfa] sm:$0xff]
      %v777 = vld [vmem:[%s690 + $0x10a] sm:$0xff]
      %v778 = vld [vmem:[%s690 + $0x112] sm:$0xff]
      %v779 = vld [vmem:[%s690 + $0x122] sm:$0xff]
      %v780 = vld [vmem:[%s690 + $0x12a] sm:$0xff]
      %v781 = vld [vmem:[%s690 + $0x13a] sm:$0xff]
      %v782 = vld [vmem:[%s690 + $0x142] sm:$0xff]
      %v783 = vld [vmem:[%s690 + $0x152] sm:$0xff]
      %v784 = vld [vmem:[%s690 + $0x15a] sm:$0xff]
      %v785 = vld [vmem:[%s690 + $0x16a] sm:$0xff]
      %v786 = vld [vmem:[%s690 + $0x172] sm:$0xff]
      %v787 = vpack.c.bf16 %v499, %v498
      %v788 = vpack.c.bf16 %v531, %v530
      %v789 = vpack.c.bf16 %v563, %v562
      %v790 = vpack.c.bf16 %v595, %v594
      %v791 = vpack.c.bf16 %v627, %v626
      %v792 = vpack.c.bf16 %v659, %v658
      %v793 = vpack.c.bf16 %v692, %v691
      %v794 = vpack.c.bf16 %v724, %v723
      %v795 = vpack.c.bf16 %v756, %v755
      %v796 = vpack.c.bf16 %v501, %v500
      %v797 = vpack.c.bf16 %v533, %v532
      %v798 = vpack.c.bf16 %v565, %v564
      %v799 = vpack.c.bf16 %v597, %v596
      %v800 = vpack.c.bf16 %v629, %v628
      %v801 = vpack.c.bf16 %v661, %v660
      %v802 = vpack.c.bf16 %v694, %v693
      %v803 = vpack.c.bf16 %v726, %v725
      %v804 = vpack.c.bf16 %v758, %v757
      %v805 = vpack.c.bf16 %v503, %v502
      %v806 = vpack.c.bf16 %v535, %v534
      %v807 = vpack.c.bf16 %v567, %v566
      %v808 = vpack.c.bf16 %v599, %v598
      %v809 = vpack.c.bf16 %v631, %v630
      %v810 = vpack.c.bf16 %v663, %v662
      %v811 = vpack.c.bf16 %v696, %v695
      %v812 = vpack.c.bf16 %v728, %v727
      %v813 = vpack.c.bf16 %v760, %v759
      %v814 = vpack.c.bf16 %v505, %v504
      %v815 = vpack.c.bf16 %v537, %v536
      %v816 = vpack.c.bf16 %v569, %v568
      %v817 = vpack.c.bf16 %v601, %v600
      %v818 = vpack.c.bf16 %v633, %v632
      %v819 = vpack.c.bf16 %v665, %v664
      %v820 = vpack.c.bf16 %v698, %v697
      %v821 = vpack.c.bf16 %v730, %v729
      %v822 = vpack.c.bf16 %v762, %v761
      %v823 = vpack.c.bf16 %v507, %v506
      %v824 = vpack.c.bf16 %v539, %v538
      %v825 = vpack.c.bf16 %v571, %v570
      %v826 = vpack.c.bf16 %v603, %v602
      %v827 = vpack.c.bf16 %v635, %v634
      %v828 = vpack.c.bf16 %v667, %v666
      %v829 = vpack.c.bf16 %v700, %v699
      %v830 = vpack.c.bf16 %v732, %v731
      %v831 = vpack.c.bf16 %v764, %v763
      %v832 = vpack.c.bf16 %v509, %v508
      %v833 = vpack.c.bf16 %v541, %v540
      %v834 = vpack.c.bf16 %v573, %v572
      %v835 = vpack.c.bf16 %v605, %v604
      %v836 = vpack.c.bf16 %v637, %v636
      %v837 = vpack.c.bf16 %v669, %v668
      %v838 = vpack.c.bf16 %v702, %v701
      %v839 = vpack.c.bf16 %v734, %v733
      %v840 = vpack.c.bf16 %v766, %v765
      %v841 = vpack.c.bf16 %v511, %v510
      %v842 = vpack.c.bf16 %v543, %v542
      %v843 = vpack.c.bf16 %v575, %v574
      %v844 = vpack.c.bf16 %v607, %v606
      %v845 = vpack.c.bf16 %v639, %v638
      %v846 = vpack.c.bf16 %v671, %v670
      %v847 = vpack.c.bf16 %v704, %v703
      %v848 = vpack.c.bf16 %v736, %v735
      %v849 = vpack.c.bf16 %v768, %v767
      %v850 = vpack.c.bf16 %v513, %v512
      %v851 = vpack.c.bf16 %v545, %v544
      %v852 = vpack.c.bf16 %v577, %v576
      %v853 = vpack.c.bf16 %v609, %v608
      %v854 = vpack.c.bf16 %v641, %v640
      %v855 = vpack.c.bf16 %v673, %v672
      %v856 = vpack.c.bf16 %v706, %v705
      %v857 = vpack.c.bf16 %v738, %v737
      %v858 = vpack.c.bf16 %v770, %v769
      %v859 = vpack.c.bf16 %v515, %v514
      %v860 = vpack.c.bf16 %v547, %v546
      %v861 = vpack.c.bf16 %v579, %v578
      %v862 = vpack.c.bf16 %v611, %v610
      %v863 = vpack.c.bf16 %v643, %v642
      %v864 = vpack.c.bf16 %v675, %v674
      %v865 = vpack.c.bf16 %v708, %v707
      %v866 = vpack.c.bf16 %v740, %v739
      %v867 = vpack.c.bf16 %v772, %v771
      %v868 = vpack.c.bf16 %v517, %v516
      %v869 = vpack.c.bf16 %v549, %v548
      %v870 = vpack.c.bf16 %v581, %v580
      %v871 = vpack.c.bf16 %v613, %v612
      %v872 = vpack.c.bf16 %v645, %v644
      %v873 = vpack.c.bf16 %v677, %v676
      %v874 = vpack.c.bf16 %v710, %v709
      %v875 = vpack.c.bf16 %v742, %v741
      %v876 = vpack.c.bf16 %v774, %v773
      %v877 = vpack.c.bf16 %v519, %v518
      %v878 = vpack.c.bf16 %v551, %v550
      %v879 = vpack.c.bf16 %v583, %v582
      %v880 = vpack.c.bf16 %v615, %v614
      %v881 = vpack.c.bf16 %v647, %v646
      %v882 = vpack.c.bf16 %v679, %v678
      %v883 = vpack.c.bf16 %v712, %v711
      %v884 = vpack.c.bf16 %v744, %v743
      %v885 = vpack.c.bf16 %v776, %v775
      %v886 = vpack.c.bf16 %v521, %v520
      %v887 = vpack.c.bf16 %v553, %v552
      %v888 = vpack.c.bf16 %v585, %v584
      %v889 = vpack.c.bf16 %v617, %v616
      %v890 = vpack.c.bf16 %v649, %v648
      %v891 = vpack.c.bf16 %v681, %v680
      %v892 = vpack.c.bf16 %v714, %v713
      %v893 = vpack.c.bf16 %v746, %v745
      %v894 = vpack.c.bf16 %v778, %v777
      %v895 = vpack.c.bf16 %v523, %v522
      %v896 = vpack.c.bf16 %v555, %v554
      %v897 = vpack.c.bf16 %v587, %v586
      %v898 = vpack.c.bf16 %v619, %v618
      %v899 = vpack.c.bf16 %v651, %v650
      %v900 = vpack.c.bf16 %v683, %v682
      %v901 = vpack.c.bf16 %v716, %v715
      %v902 = vpack.c.bf16 %v748, %v747
      %v903 = vpack.c.bf16 %v780, %v779
      %v904 = vpack.c.bf16 %v525, %v524
      %v905 = vpack.c.bf16 %v557, %v556
      %v906 = vpack.c.bf16 %v589, %v588
      %v907 = vpack.c.bf16 %v621, %v620
      %v908 = vpack.c.bf16 %v653, %v652
      %v909 = vpack.c.bf16 %v685, %v684
      %v910 = vpack.c.bf16 %v718, %v717
      %v911 = vpack.c.bf16 %v750, %v749
      %v912 = vpack.c.bf16 %v782, %v781
      %v913 = vpack.c.bf16 %v527, %v526
      %v914 = vpack.c.bf16 %v559, %v558
      %v915 = vpack.c.bf16 %v591, %v590
      %v916 = vpack.c.bf16 %v623, %v622
      %v917 = vpack.c.bf16 %v655, %v654
      %v918 = vpack.c.bf16 %v687, %v686
      %v919 = vpack.c.bf16 %v720, %v719
      %v920 = vpack.c.bf16 %v752, %v751
      %v921 = vpack.c.bf16 %v784, %v783
      %v922 = vpack.c.bf16 %v529, %v528
      %v923 = vpack.c.bf16 %v561, %v560
      %v924 = vpack.c.bf16 %v593, %v592
      %v925 = vpack.c.bf16 %v625, %v624
      %v926 = vpack.c.bf16 %v657, %v656
      %v927 = vpack.c.bf16 %v689, %v688
      %v928 = vpack.c.bf16 %v722, %v721
      %v929 = vpack.c.bf16 %v754, %v753
      %v930 = vpack.c.bf16 %v786, %v785
      %v931 = vld [vmem:[%s3] sm:$0xf]
      %v932 = vld [vmem:[%s3 + $0x4] sm:$0xf]
      %v933 = vld [vmem:[%s3 + $0x8] sm:$0xf]
      %v934 = vld [vmem:[%s3 + $0xc] sm:$0xf]
      %v935 = vld [vmem:[%s3 + $0x10] sm:$0xf]
      %v936 = vld [vmem:[%s3 + $0x14] sm:$0xf]
      %v937 = vld [vmem:[%s3 + $0x18] sm:$0xf]
      %v938 = vld [vmem:[%s3 + $0x1c] sm:$0xf]
      %v939 = vld [vmem:[%s3 + $0x20] sm:$0xf]
      %v940 = vld [vmem:[%s3 + $0x24] sm:$0xf]
      %v941 = vld [vmem:[%s3 + $0x28] sm:$0xf]
      %v942 = vld [vmem:[%s3 + $0x2c] sm:$0xf]
      %v943 = vld [vmem:[%s3 + $0x30] sm:$0xf]
      %v944 = vld [vmem:[%s3 + $0x34] sm:$0xf]
      %v945 = vld [vmem:[%s3 + $0x38] sm:$0xf]
      %v946 = vld [vmem:[%s3 + $0x3c] sm:$0xf]
      %v947 = vld [vmem:[%s3 + $0x40] sm:$0xf]
      %v948 = vld [vmem:[%s3 + $0x44] sm:$0xf]
      %v949 = vld [vmem:[%s3 + $0x48] sm:$0xf]
      %v950 = vld [vmem:[%s3 + $0x4c] sm:$0xf]
      %v951 = vld [vmem:[%s3 + $0x50] sm:$0xf]
      %v952 = vld [vmem:[%s3 + $0x54] sm:$0xf]
      %v953 = vld [vmem:[%s3 + $0x58] sm:$0xf]
      %v954 = vld [vmem:[%s3 + $0x5c] sm:$0xf]
      %v955 = vld [vmem:[%s3 + $0x60] sm:$0xf]
      %v956 = vld [vmem:[%s3 + $0x64] sm:$0xf]
      %v957 = vld [vmem:[%s3 + $0x68] sm:$0xf]
      %v958 = vld [vmem:[%s3 + $0x6c] sm:$0xf]
      %v959 = vld [vmem:[%s3 + $0x70] sm:$0xf]
      %v960 = vld [vmem:[%s3 + $0x74] sm:$0xf]
      %v961 = vld [vmem:[%s3 + $0x78] sm:$0xf]
      %v962 = vld [vmem:[%s3 + $0x7c] sm:$0xf]
      %v963 = vld [vmem:[%s3 + $0x80] sm:$0xf]
      %v964 = vld [vmem:[%s3 + $0x84] sm:$0xf]
      %v965 = vld [vmem:[%s3 + $0x88] sm:$0xf]
      %v966 = vld [vmem:[%s3 + $0x8c] sm:$0xf]
      %v967 = vld [vmem:[%s3 + $0x90] sm:$0xf]
      %v968 = vld [vmem:[%s3 + $0x94] sm:$0xf]
      %v969 = vld [vmem:[%s3 + $0x98] sm:$0xf]
      %v970 = vld [vmem:[%s3 + $0x9c] sm:$0xf]
      %v971 = vld [vmem:[%s3 + $0xa0] sm:$0xf]
      %v972 = vld [vmem:[%s3 + $0xa4] sm:$0xf]
      %v973 = vld [vmem:[%s3 + $0xa8] sm:$0xf]
      %v974 = vld [vmem:[%s3 + $0xac] sm:$0xf]
      %v975 = vld [vmem:[%s3 + $0xb0] sm:$0xf]
      %v976 = vld [vmem:[%s3 + $0xb4] sm:$0xf]
      %v977 = vld [vmem:[%s3 + $0xb8] sm:$0xf]
      %v978 = vld [vmem:[%s3 + $0xbc] sm:$0xf]
      %v979 = vld [vmem:[%s3 + $0xc0] sm:$0xf]
      %v980 = vld [vmem:[%s3 + $0xc4] sm:$0xf]
      %v981 = vld [vmem:[%s3 + $0xc8] sm:$0xf]
      %v982 = vld [vmem:[%s3 + $0xcc] sm:$0xf]
      %v983 = vld [vmem:[%s3 + $0xd0] sm:$0xf]
      %v984 = vld [vmem:[%s3 + $0xd4] sm:$0xf]
      %v985 = vld [vmem:[%s3 + $0xd8] sm:$0xf]
      %v986 = vld [vmem:[%s3 + $0xdc] sm:$0xf]
      %v987 = vld [vmem:[%s3 + $0xe0] sm:$0xf]
      %v988 = vld [vmem:[%s3 + $0xe4] sm:$0xf]
      %v989 = vld [vmem:[%s3 + $0xe8] sm:$0xf]
      %v990 = vld [vmem:[%s3 + $0xec] sm:$0xf]
      %v991 = vld [vmem:[%s3 + $0xf0] sm:$0xf]
      %v992 = vld [vmem:[%s3 + $0xf4] sm:$0xf]
      %v993 = vld [vmem:[%s3 + $0xf8] sm:$0xf]
      %v994 = vld [vmem:[%s3 + $0xfc] sm:$0xf]
      %v995 = vld [vmem:[%s3 + $0x100] sm:$0xf]
      %v996 = vld [vmem:[%s3 + $0x104] sm:$0xf]
      %v997 = vld [vmem:[%s3 + $0x108] sm:$0xf]
      %v998 = vld [vmem:[%s3 + $0x10c] sm:$0xf]
      %v999 = vld [vmem:[%s3 + $0x110] sm:$0xf]
      %v1000 = vld [vmem:[%s3 + $0x114] sm:$0xf]
      %v1001 = vld [vmem:[%s3 + $0x118] sm:$0xf]
      %v1002 = vld [vmem:[%s3 + $0x11c] sm:$0xf]
      %v1003 = vld [vmem:[%s3 + $0x120] sm:$0xf]
      %v1004 = vld [vmem:[%s3 + $0x124] sm:$0xf]
      %v1005 = vld [vmem:[%s3 + $0x128] sm:$0xf]
      %v1006 = vld [vmem:[%s3 + $0x12c] sm:$0xf]
      %v1007 = vld [vmem:[%s3 + $0x130] sm:$0xf]
      %v1008 = vld [vmem:[%s3 + $0x134] sm:$0xf]
      %v1009 = vld [vmem:[%s3 + $0x138] sm:$0xf]
      %v1010 = vld [vmem:[%s3 + $0x13c] sm:$0xf]
      %v1011 = vld [vmem:[%s3 + $0x140] sm:$0xf]
      %v1012 = vld [vmem:[%s3 + $0x144] sm:$0xf]
      %v1013 = vld [vmem:[%s3 + $0x148] sm:$0xf]
      %v1014 = vld [vmem:[%s3 + $0x14c] sm:$0xf]
      %v1015 = vld [vmem:[%s3 + $0x150] sm:$0xf]
      %v1016 = vld [vmem:[%s3 + $0x154] sm:$0xf]
      %v1017 = vld [vmem:[%s3 + $0x158] sm:$0xf]
      %v1018 = vld [vmem:[%s3 + $0x15c] sm:$0xf]
      %v1019 = vld [vmem:[%s3 + $0x160] sm:$0xf]
      %v1020 = vld [vmem:[%s3 + $0x164] sm:$0xf]
      %v1021 = vld [vmem:[%s3 + $0x168] sm:$0xf]
      %v1022 = vld [vmem:[%s3 + $0x16c] sm:$0xf]
      %v1023 = vld [vmem:[%s3 + $0x170] sm:$0xf]
      %v1024 = vld [vmem:[%s3 + $0x174] sm:$0xf]
      %v1025 = vld [vmem:[%s3 + $0x178] sm:$0xf]
      %v1026 = vld [vmem:[%s3 + $0x17c] sm:$0xf]
      %v1027 = vld [vmem:[%s3 + $0x180] sm:$0xf]
      %v1028 = vld [vmem:[%s3 + $0x184] sm:$0xf]
      %v1029 = vld [vmem:[%s3 + $0x188] sm:$0xf]
      %v1030 = vld [vmem:[%s3 + $0x18c] sm:$0xf]
      %v1031 = vld [vmem:[%s3 + $0x190] sm:$0xf]
      %v1032 = vld [vmem:[%s3 + $0x194] sm:$0xf]
      %v1033 = vld [vmem:[%s3 + $0x198] sm:$0xf]
      %v1034 = vld [vmem:[%s3 + $0x19c] sm:$0xf]
      %v1035 = vld [vmem:[%s3 + $0x1a0] sm:$0xf]
      %v1036 = vld [vmem:[%s3 + $0x1a4] sm:$0xf]
      %v1037 = vld [vmem:[%s3 + $0x1a8] sm:$0xf]
      %v1038 = vld [vmem:[%s3 + $0x1ac] sm:$0xf]
      %v1039 = vld [vmem:[%s3 + $0x1b0] sm:$0xf]
      %v1040 = vld [vmem:[%s3 + $0x1b4] sm:$0xf]
      %v1041 = vld [vmem:[%s3 + $0x1b8] sm:$0xf]
      %v1042 = vld [vmem:[%s3 + $0x1bc] sm:$0xf]
      %v1043 = vld [vmem:[%s3 + $0x1c0] sm:$0xf]
      %v1044 = vld [vmem:[%s3 + $0x1c4] sm:$0xf]
      %v1045 = vld [vmem:[%s3 + $0x1c8] sm:$0xf]
      %v1046 = vld [vmem:[%s3 + $0x1cc] sm:$0xf]
      %v1047 = vld [vmem:[%s3 + $0x1d0] sm:$0xf]
      %v1048 = vld [vmem:[%s3 + $0x1d4] sm:$0xf]
      %v1049 = vld [vmem:[%s3 + $0x1d8] sm:$0xf]
      %v1050 = vld [vmem:[%s3 + $0x1dc] sm:$0xf]
      %v1051 = vld [vmem:[%s3 + $0x1e0] sm:$0xf]
      %v1052 = vld [vmem:[%s3 + $0x1e4] sm:$0xf]
      %v1053 = vld [vmem:[%s3 + $0x1e8] sm:$0xf]
      %v1054 = vld [vmem:[%s3 + $0x1ec] sm:$0xf]
      %v1055 = vld [vmem:[%s3 + $0x1f0] sm:$0xf]
      %v1056 = vld [vmem:[%s3 + $0x1f4] sm:$0xf]
      %v1057 = vld [vmem:[%s3 + $0x1f8] sm:$0xf]
      %v1058 = vld [vmem:[%s3 + $0x1fc] sm:$0xf]
      %v1059 = vld [vmem:[%s3 + $0x200] sm:$0xf]
      %v1060 = vld [vmem:[%s3 + $0x204] sm:$0xf]
      %v1061 = vld [vmem:[%s3 + $0x208] sm:$0xf]
      %v1062 = vld [vmem:[%s3 + $0x20c] sm:$0xf]
      %v1063 = vld [vmem:[%s3 + $0x210] sm:$0xf]
      %v1064 = vld [vmem:[%s3 + $0x214] sm:$0xf]
      %v1065 = vld [vmem:[%s3 + $0x218] sm:$0xf]
      %v1066 = vld [vmem:[%s3 + $0x21c] sm:$0xf]
      %v1067 = vld [vmem:[%s3 + $0x220] sm:$0xf]
      %v1068 = vld [vmem:[%s3 + $0x224] sm:$0xf]
      %v1069 = vld [vmem:[%s3 + $0x228] sm:$0xf]
      %v1070 = vld [vmem:[%s3 + $0x22c] sm:$0xf]
      %v1071 = vld [vmem:[%s3 + $0x230] sm:$0xf]
      %v1072 = vld [vmem:[%s3 + $0x234] sm:$0xf]
      %v1073 = vld [vmem:[%s3 + $0x238] sm:$0xf]
      %v1074 = vld [vmem:[%s3 + $0x23c] sm:$0xf]
      %v1219 = vunpack.c.l.b16 %v931
      %v1220 = vunpack.c.l.b16 %v932
      %v1221 = vunpack.c.l.b16 %v933
      %v1222 = vunpack.c.l.b16 %v934
      %v1223 = vunpack.c.l.b16 %v935
      %v1224 = vunpack.c.l.b16 %v936
      %v1225 = vunpack.c.l.b16 %v937
      %v1226 = vunpack.c.l.b16 %v938
      %v1227 = vunpack.c.l.b16 %v939
      %v1228 = vunpack.c.l.b16 %v940
      %v1229 = vunpack.c.l.b16 %v941
      %v1230 = vunpack.c.l.b16 %v942
      %v1231 = vunpack.c.l.b16 %v943
      %v1232 = vunpack.c.l.b16 %v944
      %v1233 = vunpack.c.l.b16 %v945
      %v1234 = vunpack.c.l.b16 %v946
      %v1235 = vunpack.c.l.b16 %v947
      %v1236 = vunpack.c.l.b16 %v948
      %v1237 = vunpack.c.l.b16 %v949
      %v1238 = vunpack.c.l.b16 %v950
      %v1239 = vunpack.c.l.b16 %v951
      %v1240 = vunpack.c.l.b16 %v952
      %v1241 = vunpack.c.l.b16 %v953
      %v1242 = vunpack.c.l.b16 %v954
      %v1243 = vunpack.c.l.b16 %v955
      %v1244 = vunpack.c.l.b16 %v956
      %v1245 = vunpack.c.l.b16 %v957
      %v1246 = vunpack.c.l.b16 %v958
      %v1247 = vunpack.c.l.b16 %v959
      %v1248 = vunpack.c.l.b16 %v960
      %v1249 = vunpack.c.l.b16 %v961
      %v1250 = vunpack.c.l.b16 %v962
      %v1251 = vunpack.c.l.b16 %v963
      %v1252 = vunpack.c.l.b16 %v964
      %v1253 = vunpack.c.l.b16 %v965
      %v1254 = vunpack.c.l.b16 %v966
      %v1255 = vunpack.c.l.b16 %v967
      %v1256 = vunpack.c.l.b16 %v968
      %v1257 = vunpack.c.l.b16 %v969
      %v1258 = vunpack.c.l.b16 %v970
      %v1259 = vunpack.c.l.b16 %v971
      %v1260 = vunpack.c.l.b16 %v972
      %v1261 = vunpack.c.l.b16 %v973
      %v1262 = vunpack.c.l.b16 %v974
      %v1263 = vunpack.c.l.b16 %v975
      %v1264 = vunpack.c.l.b16 %v976
      %v1265 = vunpack.c.l.b16 %v977
      %v1266 = vunpack.c.l.b16 %v978
      %v1267 = vunpack.c.l.b16 %v979
      %v1268 = vunpack.c.l.b16 %v980
      %v1269 = vunpack.c.l.b16 %v981
      %v1270 = vunpack.c.l.b16 %v982
      %v1271 = vunpack.c.l.b16 %v983
      %v1272 = vunpack.c.l.b16 %v984
      %v1273 = vunpack.c.l.b16 %v985
      %v1274 = vunpack.c.l.b16 %v986
      %v1275 = vunpack.c.l.b16 %v987
      %v1276 = vunpack.c.l.b16 %v988
      %v1277 = vunpack.c.l.b16 %v989
      %v1278 = vunpack.c.l.b16 %v990
      %v1279 = vunpack.c.l.b16 %v991
      %v1280 = vunpack.c.l.b16 %v992
      %v1281 = vunpack.c.l.b16 %v993
      %v1282 = vunpack.c.l.b16 %v994
      %v1283 = vunpack.c.l.b16 %v995
      %v1284 = vunpack.c.l.b16 %v996
      %v1285 = vunpack.c.l.b16 %v997
      %v1286 = vunpack.c.l.b16 %v998
      %v1287 = vunpack.c.l.b16 %v999
      %v1288 = vunpack.c.l.b16 %v1000
      %v1289 = vunpack.c.l.b16 %v1001
      %v1290 = vunpack.c.l.b16 %v1002
      %v1291 = vunpack.c.l.b16 %v1003
      %v1292 = vunpack.c.l.b16 %v1004
      %v1293 = vunpack.c.l.b16 %v1005
      %v1294 = vunpack.c.l.b16 %v1006
      %v1295 = vunpack.c.l.b16 %v1007
      %v1296 = vunpack.c.l.b16 %v1008
      %v1297 = vunpack.c.l.b16 %v1009
      %v1298 = vunpack.c.l.b16 %v1010
      %v1299 = vunpack.c.l.b16 %v1011
      %v1300 = vunpack.c.l.b16 %v1012
      %v1301 = vunpack.c.l.b16 %v1013
      %v1302 = vunpack.c.l.b16 %v1014
      %v1303 = vunpack.c.l.b16 %v1015
      %v1304 = vunpack.c.l.b16 %v1016
      %v1305 = vunpack.c.l.b16 %v1017
      %v1306 = vunpack.c.l.b16 %v1018
      %v1307 = vunpack.c.l.b16 %v1019
      %v1308 = vunpack.c.l.b16 %v1020
      %v1309 = vunpack.c.l.b16 %v1021
      %v1310 = vunpack.c.l.b16 %v1022
      %v1311 = vunpack.c.l.b16 %v1023
      %v1312 = vunpack.c.l.b16 %v1024
      %v1313 = vunpack.c.l.b16 %v1025
      %v1314 = vunpack.c.l.b16 %v1026
      %v1315 = vunpack.c.l.b16 %v1027
      %v1316 = vunpack.c.l.b16 %v1028
      %v1317 = vunpack.c.l.b16 %v1029
      %v1318 = vunpack.c.l.b16 %v1030
      %v1319 = vunpack.c.l.b16 %v1031
      %v1320 = vunpack.c.l.b16 %v1032
      %v1321 = vunpack.c.l.b16 %v1033
      %v1322 = vunpack.c.l.b16 %v1034
      %v1323 = vunpack.c.l.b16 %v1035
      %v1324 = vunpack.c.l.b16 %v1036
      %v1325 = vunpack.c.l.b16 %v1037
      %v1326 = vunpack.c.l.b16 %v1038
      %v1327 = vunpack.c.l.b16 %v1039
      %v1328 = vunpack.c.l.b16 %v1040
      %v1329 = vunpack.c.l.b16 %v1041
      %v1330 = vunpack.c.l.b16 %v1042
      %v1331 = vunpack.c.l.b16 %v1043
      %v1332 = vunpack.c.l.b16 %v1044
      %v1333 = vunpack.c.l.b16 %v1045
      %v1334 = vunpack.c.l.b16 %v1046
      %v1335 = vunpack.c.l.b16 %v1047
      %v1336 = vunpack.c.l.b16 %v1048
      %v1337 = vunpack.c.l.b16 %v1049
      %v1338 = vunpack.c.l.b16 %v1050
      %v1339 = vunpack.c.l.b16 %v1051
      %v1340 = vunpack.c.l.b16 %v1052
      %v1341 = vunpack.c.l.b16 %v1053
      %v1342 = vunpack.c.l.b16 %v1054
      %v1343 = vunpack.c.l.b16 %v1055
      %v1344 = vunpack.c.l.b16 %v1056
      %v1345 = vunpack.c.l.b16 %v1057
      %v1346 = vunpack.c.l.b16 %v1058
      %v1347 = vunpack.c.l.b16 %v1059
      %v1348 = vunpack.c.l.b16 %v1060
      %v1349 = vunpack.c.l.b16 %v1061
      %v1350 = vunpack.c.l.b16 %v1062
      %v1351 = vunpack.c.l.b16 %v1063
      %v1352 = vunpack.c.l.b16 %v1064
      %v1353 = vunpack.c.l.b16 %v1065
      %v1354 = vunpack.c.l.b16 %v1066
      %v1355 = vunpack.c.l.b16 %v1067
      %v1356 = vunpack.c.l.b16 %v1068
      %v1357 = vunpack.c.l.b16 %v1069
      %v1358 = vunpack.c.l.b16 %v1070
      %v1359 = vunpack.c.l.b16 %v1071
      %v1360 = vunpack.c.l.b16 %v1072
      %v1361 = vunpack.c.l.b16 %v1073
      %v1362 = vunpack.c.l.b16 %v1074
      %v1363 = vpack.c.b16 %v1220, %v1219
      %v1364 = vpack.c.b16 %v1222, %v1221
      %v1365 = vpack.c.b16 %v1224, %v1223
      %v1366 = vpack.c.b16 %v1226, %v1225
      %v1367 = vpack.c.b16 %v1228, %v1227
      %v1368 = vpack.c.b16 %v1230, %v1229
      %v1369 = vpack.c.b16 %v1232, %v1231
      %v1370 = vpack.c.b16 %v1234, %v1233
      %v1371 = vpack.c.b16 %v1236, %v1235
      %v1372 = vpack.c.b16 %v1238, %v1237
      %v1373 = vpack.c.b16 %v1240, %v1239
      %v1374 = vpack.c.b16 %v1242, %v1241
      %v1375 = vpack.c.b16 %v1244, %v1243
      %v1376 = vpack.c.b16 %v1246, %v1245
      %v1377 = vpack.c.b16 %v1248, %v1247
      %v1378 = vpack.c.b16 %v1250, %v1249
      %v1379 = vpack.c.b16 %v1252, %v1251
      %v1380 = vpack.c.b16 %v1254, %v1253
      %v1381 = vpack.c.b16 %v1256, %v1255
      %v1382 = vpack.c.b16 %v1258, %v1257
      %v1383 = vpack.c.b16 %v1260, %v1259
      %v1384 = vpack.c.b16 %v1262, %v1261
      %v1385 = vpack.c.b16 %v1264, %v1263
      %v1386 = vpack.c.b16 %v1266, %v1265
      %v1387 = vpack.c.b16 %v1268, %v1267
      %v1388 = vpack.c.b16 %v1270, %v1269
      %v1389 = vpack.c.b16 %v1272, %v1271
      %v1390 = vpack.c.b16 %v1274, %v1273
      %v1391 = vpack.c.b16 %v1276, %v1275
      %v1392 = vpack.c.b16 %v1278, %v1277
      %v1393 = vpack.c.b16 %v1280, %v1279
      %v1394 = vpack.c.b16 %v1282, %v1281
      %v1395 = vpack.c.b16 %v1284, %v1283
      %v1396 = vpack.c.b16 %v1286, %v1285
      %v1397 = vpack.c.b16 %v1288, %v1287
      %v1398 = vpack.c.b16 %v1290, %v1289
      %v1399 = vpack.c.b16 %v1292, %v1291
      %v1400 = vpack.c.b16 %v1294, %v1293
      %v1401 = vpack.c.b16 %v1296, %v1295
      %v1402 = vpack.c.b16 %v1298, %v1297
      %v1403 = vpack.c.b16 %v1300, %v1299
      %v1404 = vpack.c.b16 %v1302, %v1301
      %v1405 = vpack.c.b16 %v1304, %v1303
      %v1406 = vpack.c.b16 %v1306, %v1305
      %v1407 = vpack.c.b16 %v1308, %v1307
      %v1408 = vpack.c.b16 %v1310, %v1309
      %v1409 = vpack.c.b16 %v1312, %v1311
      %v1410 = vpack.c.b16 %v1314, %v1313
      %v1411 = vpack.c.b16 %v1316, %v1315
      %v1412 = vpack.c.b16 %v1318, %v1317
      %v1413 = vpack.c.b16 %v1320, %v1319
      %v1414 = vpack.c.b16 %v1322, %v1321
      %v1415 = vpack.c.b16 %v1324, %v1323
      %v1416 = vpack.c.b16 %v1326, %v1325
      %v1417 = vpack.c.b16 %v1328, %v1327
      %v1418 = vpack.c.b16 %v1330, %v1329
      %v1419 = vpack.c.b16 %v1332, %v1331
      %v1420 = vpack.c.b16 %v1334, %v1333
      %v1421 = vpack.c.b16 %v1336, %v1335
      %v1422 = vpack.c.b16 %v1338, %v1337
      %v1423 = vpack.c.b16 %v1340, %v1339
      %v1424 = vpack.c.b16 %v1342, %v1341
      %v1425 = vpack.c.b16 %v1344, %v1343
      %v1426 = vpack.c.b16 %v1346, %v1345
      %v1427 = vpack.c.b16 %v1348, %v1347
      %v1428 = vpack.c.b16 %v1350, %v1349
      %v1429 = vpack.c.b16 %v1352, %v1351
      %v1430 = vpack.c.b16 %v1354, %v1353
      %v1431 = vpack.c.b16 %v1356, %v1355
      %v1432 = vpack.c.b16 %v1358, %v1357
      %v1433 = vpack.c.b16 %v1360, %v1359
      %v1434 = vpack.c.b16 %v1362, %v1361
      %1507 = vmatprep.subr.bf16.mxu0 0
      %1508 = vmatpush1.bf16.msra.mxu0 %v1363
      %1509 = vmatprep.subr.bf16.mxu0 0
      %1510 = vmatpush1.bf16.msra.mxu0 %v1364
      %1511 = vmatprep.subr.bf16.mxu0 0
      %1512 = vmatpush1.bf16.msra.mxu0 %v1365
      %1513 = vmatprep.subr.bf16.mxu0 0
      %1514 = vmatpush1.bf16.msra.mxu0 %v1366
      %1515 = vmatprep.subr.bf16.mxu0 0
      %1516 = vmatpush1.bf16.msra.mxu0 %v1367
      %1517 = vmatprep.subr.bf16.mxu0 0
      %1518 = vmatpush1.bf16.msra.mxu0 %v1368
      %1519 = vmatprep.subr.bf16.mxu0 0
      %1520 = vmatpush1.bf16.msra.mxu0 %v1369
      %1521 = vmatprep.subr.bf16.mxu0 0
      %1522 = vmatpush1.bf16.msra.mxu0 %v1370
      %1523 = vmatprep.subr.bf16.mxu0 0
      %1524 = vmatpush1.bf16.msra.mxu0 %v1371
      %1525 = vmatprep.subr.bf16.mxu0 0
      %1526 = vmatpush1.bf16.msra.mxu0 %v1372
      %1527 = vmatprep.subr.bf16.mxu0 0
      %1528 = vmatpush1.bf16.msra.mxu0 %v1373
      %1529 = vmatprep.subr.bf16.mxu0 0
      %1530 = vmatpush1.bf16.msra.mxu0 %v1374
      %1531 = vmatprep.subr.bf16.mxu0 0
      %1532 = vmatpush1.bf16.msra.mxu0 %v1375
      %1533 = vmatprep.subr.bf16.mxu0 0
      %1534 = vmatpush1.bf16.msra.mxu0 %v1376
      %1535 = vmatprep.subr.bf16.mxu0 0
      %1536 = vmatpush1.bf16.msra.mxu0 %v1377
      %1537 = vmatprep.subr.bf16.mxu0 0
      %1538 = vmatpush1.bf16.msra.mxu0 %v1378
      %1539 = vmatprep.mubr.bf16.mxu0 %v788
      %1540 = vmatmul.mubr.bf16.gmra.mrb[0].mxu0 %v787
      %v1541 = vpop.f32.mrb[0].mxu0
      %v1542 = vadd.f32 0.0, %v1541
      %v1543 = vpop.f32.mrb[0].mxu0
      %v1544 = vpop.f32.mrb[0].mxu0
      %v1545 = vadd.f32 0.0, %v1544
      %v1546 = vpop.f32.mrb[0].mxu0
      %1547 = vmatprep.mubr.bf16.mxu0 %v797
      %1548 = vmatmul.mubr.bf16.gmra.mrb[0].mxu0 %v796
      %v1549 = vpop.f32.mrb[0].mxu0
      %v1550 = vadd.f32 0.0, %v1549
      %v1551 = vpop.f32.mrb[0].mxu0
      %v1552 = vpop.f32.mrb[0].mxu0
      %v1553 = vadd.f32 0.0, %v1552
      %v1554 = vpop.f32.mrb[0].mxu0
      %1555 = vmatprep.mubr.bf16.mxu0 %v806
      %1556 = vmatmul.mubr.bf16.gmra.mrb[0].mxu0 %v805
      %v1557 = vpop.f32.mrb[0].mxu0
      %v1558 = vadd.f32 0.0, %v1557
      %v1559 = vpop.f32.mrb[0].mxu0
      %v1560 = vpop.f32.mrb[0].mxu0
      %v1561 = vadd.f32 0.0, %v1560
      %v1562 = vpop.f32.mrb[0].mxu0
      %1563 = vmatprep.mubr.bf16.mxu0 %v815
      %1564 = vmatmul.mubr.bf16.gmra.mrb[0].mxu0 %v814
      %v1565 = vpop.f32.mrb[0].mxu0
      %v1566 = vadd.f32 0.0, %v1565
      %v1567 = vpop.f32.mrb[0].mxu0
      %v1568 = vpop.f32.mrb[0].mxu0
      %v1569 = vadd.f32 0.0, %v1568
      %v1570 = vpop.f32.mrb[0].mxu0
      %1571 = vmatprep.mubr.bf16.mxu0 %v824
      %1572 = vmatmul.mubr.bf16.gmra.mrb[0].mxu0 %v823
      %v1573 = vpop.f32.mrb[0].mxu0
      %v1574 = vadd.f32 0.0, %v1573
      %v1575 = vpop.f32.mrb[0].mxu0
      %v1576 = vpop.f32.mrb[0].mxu0
      %v1577 = vadd.f32 0.0, %v1576
      %v1578 = vpop.f32.mrb[0].mxu0
      %1579 = vmatprep.mubr.bf16.mxu0 %v833
      %1580 = vmatmul.mubr.bf16.gmra.mrb[0].mxu0 %v832
      %v1581 = vpop.f32.mrb[0].mxu0
      %v1582 = vadd.f32 0.0, %v1581
      %v1583 = vpop.f32.mrb[0].mxu0
      %v1584 = vpop.f32.mrb[0].mxu0
      %v1585 = vadd.f32 0.0, %v1584
      %v1586 = vpop.f32.mrb[0].mxu0
      %1587 = vmatprep.mubr.bf16.mxu0 %v842
      %1588 = vmatmul.mubr.bf16.gmra.mrb[0].mxu0 %v841
      %v1589 = vpop.f32.mrb[0].mxu0
      %v1590 = vadd.f32 0.0, %v1589
      %v1591 = vpop.f32.mrb[0].mxu0
      %v1592 = vpop.f32.mrb[0].mxu0
      %v1593 = vadd.f32 0.0, %v1592
      %v1594 = vpop.f32.mrb[0].mxu0
      %1595 = vmatprep.mubr.bf16.mxu0 %v851
      %1596 = vmatmul.mubr.bf16.gmra.mrb[0].mxu0 %v850
      %v1597 = vpop.f32.mrb[0].mxu0
      %v1598 = vadd.f32 0.0, %v1597
      %v1599 = vpop.f32.mrb[0].mxu0
      %v1600 = vpop.f32.mrb[0].mxu0
      %v1601 = vadd.f32 0.0, %v1600
      %v1602 = vpop.f32.mrb[0].mxu0
      %1603 = vmatprep.mubr.bf16.mxu0 %v860
      %1604 = vmatmul.mubr.bf16.gmra.mrb[0].mxu0 %v859
      %v1605 = vpop.f32.mrb[0].mxu0
      %v1606 = vadd.f32 0.0, %v1605
      %v1607 = vpop.f32.mrb[0].mxu0
      %v1608 = vpop.f32.mrb[0].mxu0
      %v1609 = vadd.f32 0.0, %v1608
      %v1610 = vpop.f32.mrb[0].mxu0
      %1611 = vmatprep.mubr.bf16.mxu0 %v869
      %1612 = vmatmul.mubr.bf16.gmra.mrb[0].mxu0 %v868
      %v1613 = vpop.f32.mrb[0].mxu0
      %v1614 = vadd.f32 0.0, %v1613
      %v1615 = vpop.f32.mrb[0].mxu0
      %v1616 = vpop.f32.mrb[0].mxu0
      %v1617 = vadd.f32 0.0, %v1616
      %v1618 = vpop.f32.mrb[0].mxu0
      %1619 = vmatprep.mubr.bf16.mxu0 %v878
      %1620 = vmatmul.mubr.bf16.gmra.mrb[0].mxu0 %v877
      %v1621 = vpop.f32.mrb[0].mxu0
      %v1622 = vadd.f32 0.0, %v1621
      %v1623 = vpop.f32.mrb[0].mxu0
      %v1624 = vpop.f32.mrb[0].mxu0
      %v1625 = vadd.f32 0.0, %v1624
      %v1626 = vpop.f32.mrb[0].mxu0
      %1627 = vmatprep.mubr.bf16.mxu0 %v887
      %1628 = vmatmul.mubr.bf16.gmra.mrb[0].mxu0 %v886
      %v1629 = vpop.f32.mrb[0].mxu0
      %v1630 = vadd.f32 0.0, %v1629
      %v1631 = vpop.f32.mrb[0].mxu0
      %v1632 = vpop.f32.mrb[0].mxu0
      %v1633 = vadd.f32 0.0, %v1632
      %v1634 = vpop.f32.mrb[0].mxu0
      %1635 = vmatprep.mubr.bf16.mxu0 %v896
      %1636 = vmatmul.mubr.bf16.gmra.mrb[0].mxu0 %v895
      %v1637 = vpop.f32.mrb[0].mxu0
      %v1638 = vadd.f32 0.0, %v1637
      %v1639 = vpop.f32.mrb[0].mxu0
      %v1640 = vpop.f32.mrb[0].mxu0
      %v1641 = vadd.f32 0.0, %v1640
      %v1642 = vpop.f32.mrb[0].mxu0
      %1643 = vmatprep.mubr.bf16.mxu0 %v905
      %1644 = vmatmul.mubr.bf16.gmra.mrb[0].mxu0 %v904
      %v1645 = vpop.f32.mrb[0].mxu0
      %v1646 = vadd.f32 0.0, %v1645
      %v1647 = vpop.f32.mrb[0].mxu0
      %v1648 = vpop.f32.mrb[0].mxu0
      %v1649 = vadd.f32 0.0, %v1648
      %v1650 = vpop.f32.mrb[0].mxu0
      %1651 = vmatprep.mubr.bf16.mxu0 %v914
      %1652 = vmatmul.mubr.bf16.gmra.mrb[0].mxu0 %v913
      %v1653 = vpop.f32.mrb[0].mxu0
      %v1654 = vadd.f32 0.0, %v1653
      %v1655 = vpop.f32.mrb[0].mxu0
      %v1656 = vpop.f32.mrb[0].mxu0
      %v1657 = vadd.f32 0.0, %v1656
      %v1658 = vpop.f32.mrb[0].mxu0
      %1659 = vmatprep.mubr.bf16.mxu0 %v923
      %1660 = vmatmul.mubr.bf16.gmra.mrb[0].mxu0 %v922
      %v1661 = vpop.f32.mrb[0].mxu0
      %v1662 = vadd.f32 0.0, %v1661
      %v1663 = vpop.f32.mrb[0].mxu0
      %v1664 = vpop.f32.mrb[0].mxu0
      %v1665 = vadd.f32 0.0, %v1664
      %v1666 = vpop.f32.mrb[0].mxu0
      %1667 = vdwg.mxu0
      %1668 = vmatprep.subr.bf16.mxu0 0
      %1669 = vmatpush1.bf16.msra.mxu0 %v1379
      %1670 = vmatprep.subr.bf16.mxu0 0
      %1671 = vmatpush1.bf16.msra.mxu0 %v1380
      %1672 = vmatprep.subr.bf16.mxu0 0
      %1673 = vmatpush1.bf16.msra.mxu0 %v1381
      %1674 = vmatprep.subr.bf16.mxu0 0
      %1675 = vmatpush1.bf16.msra.mxu0 %v1382
      %1676 = vmatprep.subr.bf16.mxu0 0
      %1677 = vmatpush1.bf16.msra.mxu0 %v1383
      %1678 = vmatprep.subr.bf16.mxu0 0
      %1679 = vmatpush1.bf16.msra.mxu0 %v1384
      %1680 = vmatprep.subr.bf16.mxu0 0
      %1681 = vmatpush1.bf16.msra.mxu0 %v1385
      %1682 = vmatprep.subr.bf16.mxu0 0
      %1683 = vmatpush1.bf16.msra.mxu0 %v1386
      %1684 = vmatprep.subr.bf16.mxu0 0
      %1685 = vmatpush1.bf16.msra.mxu0 %v1387
      %1686 = vmatprep.subr.bf16.mxu0 0
      %1687 = vmatpush1.bf16.msra.mxu0 %v1388
      %1688 = vmatprep.subr.bf16.mxu0 0
      %1689 = vmatpush1.bf16.msra.mxu0 %v1389
      %1690 = vmatprep.subr.bf16.mxu0 0
      %1691 = vmatpush1.bf16.msra.mxu0 %v1390
      %1692 = vmatprep.subr.bf16.mxu0 0
      %1693 = vmatpush1.bf16.msra.mxu0 %v1391
      %1694 = vmatprep.subr.bf16.mxu0 0
      %1695 = vmatpush1.bf16.msra.mxu0 %v1392
      %1696 = vmatprep.subr.bf16.mxu0 0
      %1697 = vmatpush1.bf16.msra.mxu0 %v1393
      %1698 = vmatprep.subr.bf16.mxu0 0
      %1699 = vmatpush1.bf16.msra.mxu0 %v1394
      %1700 = vmatprep.mubr.bf16.mxu0 %v790
      %1701 = vmatmul.mubr.bf16.gmra.mrb[0].mxu0 %v789
      %v1702 = vpop.f32.mrb[0].mxu0
      %v1703 = vadd.f32 %v1542, %v1702
      %v1704 = vpop.f32.mrb[0].mxu0
      %v1705 = vpop.f32.mrb[0].mxu0
      %v1706 = vadd.f32 %v1545, %v1705
      %v1707 = vpop.f32.mrb[0].mxu0
      %1708 = vmatprep.mubr.bf16.mxu0 %v799
      %1709 = vmatmul.mubr.bf16.gmra.mrb[0].mxu0 %v798
      %v1710 = vpop.f32.mrb[0].mxu0
      %v1711 = vadd.f32 %v1550, %v1710
      %v1712 = vpop.f32.mrb[0].mxu0
      %v1713 = vpop.f32.mrb[0].mxu0
      %v1714 = vadd.f32 %v1553, %v1713
      %v1715 = vpop.f32.mrb[0].mxu0
      %1716 = vmatprep.mubr.bf16.mxu0 %v808
      %1717 = vmatmul.mubr.bf16.gmra.mrb[0].mxu0 %v807
      %v1718 = vpop.f32.mrb[0].mxu0
      %v1719 = vadd.f32 %v1558, %v1718
      %v1720 = vpop.f32.mrb[0].mxu0
      %v1721 = vpop.f32.mrb[0].mxu0
      %v1722 = vadd.f32 %v1561, %v1721
      %v1723 = vpop.f32.mrb[0].mxu0
      %1724 = vmatprep.mubr.bf16.mxu0 %v817
      %1725 = vmatmul.mubr.bf16.gmra.mrb[0].mxu0 %v816
      %v1726 = vpop.f32.mrb[0].mxu0
      %v1727 = vadd.f32 %v1566, %v1726
      %v1728 = vpop.f32.mrb[0].mxu0
      %v1729 = vpop.f32.mrb[0].mxu0
      %v1730 = vadd.f32 %v1569, %v1729
      %v1731 = vpop.f32.mrb[0].mxu0
      %1732 = vmatprep.mubr.bf16.mxu0 %v826
      %1733 = vmatmul.mubr.bf16.gmra.mrb[0].mxu0 %v825
      %v1734 = vpop.f32.mrb[0].mxu0
      %v1735 = vadd.f32 %v1574, %v1734
      %v1736 = vpop.f32.mrb[0].mxu0
      %v1737 = vpop.f32.mrb[0].mxu0
      %v1738 = vadd.f32 %v1577, %v1737
      %v1739 = vpop.f32.mrb[0].mxu0
      %1740 = vmatprep.mubr.bf16.mxu0 %v835
      %1741 = vmatmul.mubr.bf16.gmra.mrb[0].mxu0 %v834
      %v1742 = vpop.f32.mrb[0].mxu0
      %v1743 = vadd.f32 %v1582, %v1742
      %v1744 = vpop.f32.mrb[0].mxu0
      %v1745 = vpop.f32.mrb[0].mxu0
      %v1746 = vadd.f32 %v1585, %v1745
      %v1747 = vpop.f32.mrb[0].mxu0
      %1748 = vmatprep.mubr.bf16.mxu0 %v844
      %1749 = vmatmul.mubr.bf16.gmra.mrb[0].mxu0 %v843
      %v1750 = vpop.f32.mrb[0].mxu0
      %v1751 = vadd.f32 %v1590, %v1750
      %v1752 = vpop.f32.mrb[0].mxu0
      %v1753 = vpop.f32.mrb[0].mxu0
      %v1754 = vadd.f32 %v1593, %v1753
      %v1755 = vpop.f32.mrb[0].mxu0
      %1756 = vmatprep.mubr.bf16.mxu0 %v853
      %1757 = vmatmul.mubr.bf16.gmra.mrb[0].mxu0 %v852
      %v1758 = vpop.f32.mrb[0].mxu0
      %v1759 = vadd.f32 %v1598, %v1758
      %v1760 = vpop.f32.mrb[0].mxu0
      %v1761 = vpop.f32.mrb[0].mxu0
      %v1762 = vadd.f32 %v1601, %v1761
      %v1763 = vpop.f32.mrb[0].mxu0
      %1764 = vmatprep.mubr.bf16.mxu0 %v862
      %1765 = vmatmul.mubr.bf16.gmra.mrb[0].mxu0 %v861
      %v1766 = vpop.f32.mrb[0].mxu0
      %v1767 = vadd.f32 %v1606, %v1766
      %v1768 = vpop.f32.mrb[0].mxu0
      %v1769 = vpop.f32.mrb[0].mxu0
      %v1770 = vadd.f32 %v1609, %v1769
      %v1771 = vpop.f32.mrb[0].mxu0
      %1772 = vmatprep.mubr.bf16.mxu0 %v871
      %1773 = vmatmul.mubr.bf16.gmra.mrb[0].mxu0 %v870
      %v1774 = vpop.f32.mrb[0].mxu0
      %v1775 = vadd.f32 %v1614, %v1774
      %v1776 = vpop.f32.mrb[0].mxu0
      %v1777 = vpop.f32.mrb[0].mxu0
      %v1778 = vadd.f32 %v1617, %v1777
      %v1779 = vpop.f32.mrb[0].mxu0
      %1780 = vmatprep.mubr.bf16.mxu0 %v880
      %1781 = vmatmul.mubr.bf16.gmra.mrb[0].mxu0 %v879
      %v1782 = vpop.f32.mrb[0].mxu0
      %v1783 = vadd.f32 %v1622, %v1782
      %v1784 = vpop.f32.mrb[0].mxu0
      %v1785 = vpop.f32.mrb[0].mxu0
      %v1786 = vadd.f32 %v1625, %v1785
      %v1787 = vpop.f32.mrb[0].mxu0
      %1788 = vmatprep.mubr.bf16.mxu0 %v889
      %1789 = vmatmul.mubr.bf16.gmra.mrb[0].mxu0 %v888
      %v1790 = vpop.f32.mrb[0].mxu0
      %v1791 = vadd.f32 %v1630, %v1790
      %v1792 = vpop.f32.mrb[0].mxu0
      %v1793 = vpop.f32.mrb[0].mxu0
      %v1794 = vadd.f32 %v1633, %v1793
      %v1795 = vpop.f32.mrb[0].mxu0
      %1796 = vmatprep.mubr.bf16.mxu0 %v898
      %1797 = vmatmul.mubr.bf16.gmra.mrb[0].mxu0 %v897
      %v1798 = vpop.f32.mrb[0].mxu0
      %v1799 = vadd.f32 %v1638, %v1798
      %v1800 = vpop.f32.mrb[0].mxu0
      %v1801 = vpop.f32.mrb[0].mxu0
      %v1802 = vadd.f32 %v1641, %v1801
      %v1803 = vpop.f32.mrb[0].mxu0
      %1804 = vmatprep.mubr.bf16.mxu0 %v907
      %1805 = vmatmul.mubr.bf16.gmra.mrb[0].mxu0 %v906
      %v1806 = vpop.f32.mrb[0].mxu0
      %v1807 = vadd.f32 %v1646, %v1806
      %v1808 = vpop.f32.mrb[0].mxu0
      %v1809 = vpop.f32.mrb[0].mxu0
      %v1810 = vadd.f32 %v1649, %v1809
      %v1811 = vpop.f32.mrb[0].mxu0
      %1812 = vmatprep.mubr.bf16.mxu0 %v916
      %1813 = vmatmul.mubr.bf16.gmra.mrb[0].mxu0 %v915
      %v1814 = vpop.f32.mrb[0].mxu0
      %v1815 = vadd.f32 %v1654, %v1814
      %v1816 = vpop.f32.mrb[0].mxu0
      %v1817 = vpop.f32.mrb[0].mxu0
      %v1818 = vadd.f32 %v1657, %v1817
      %v1819 = vpop.f32.mrb[0].mxu0
      %1820 = vmatprep.mubr.bf16.mxu0 %v925
      %1821 = vmatmul.mubr.bf16.gmra.mrb[0].mxu0 %v924
      %v1822 = vpop.f32.mrb[0].mxu0
      %v1823 = vadd.f32 %v1662, %v1822
      %v1824 = vpop.f32.mrb[0].mxu0
      %v1825 = vpop.f32.mrb[0].mxu0
      %v1826 = vadd.f32 %v1665, %v1825
      %v1827 = vpop.f32.mrb[0].mxu0
      %1828 = vdwg.mxu0
      %1829 = vmatprep.subr.bf16.mxu0 0
      %1830 = vmatpush1.bf16.msra.mxu0 %v1395
      %1831 = vmatprep.subr.bf16.mxu0 0
      %1832 = vmatpush1.bf16.msra.mxu0 %v1396
      %1833 = vmatprep.subr.bf16.mxu0 0
      %1834 = vmatpush1.bf16.msra.mxu0 %v1397
      %1835 = vmatprep.subr.bf16.mxu0 0
      %1836 = vmatpush1.bf16.msra.mxu0 %v1398
      %1837 = vmatprep.subr.bf16.mxu0 0
      %1838 = vmatpush1.bf16.msra.mxu0 %v1399
      %1839 = vmatprep.subr.bf16.mxu0 0
      %1840 = vmatpush1.bf16.msra.mxu0 %v1400
      %1841 = vmatprep.subr.bf16.mxu0 0
      %1842 = vmatpush1.bf16.msra.mxu0 %v1401
      %1843 = vmatprep.subr.bf16.mxu0 0
      %1844 = vmatpush1.bf16.msra.mxu0 %v1402
      %1845 = vmatprep.subr.bf16.mxu0 0
      %1846 = vmatpush1.bf16.msra.mxu0 %v1403
      %1847 = vmatprep.subr.bf16.mxu0 0
      %1848 = vmatpush1.bf16.msra.mxu0 %v1404
      %1849 = vmatprep.subr.bf16.mxu0 0
      %1850 = vmatpush1.bf16.msra.mxu0 %v1405
      %1851 = vmatprep.subr.bf16.mxu0 0
      %1852 = vmatpush1.bf16.msra.mxu0 %v1406
      %1853 = vmatprep.subr.bf16.mxu0 0
      %1854 = vmatpush1.bf16.msra.mxu0 %v1407
      %1855 = vmatprep.subr.bf16.mxu0 0
      %1856 = vmatpush1.bf16.msra.mxu0 %v1408
      %1857 = vmatprep.subr.bf16.mxu0 0
      %1858 = vmatpush1.bf16.msra.mxu0 %v1409
      %1859 = vmatprep.subr.bf16.mxu0 0
      %1860 = vmatpush1.bf16.msra.mxu0 %v1410
      %1861 = vmatprep.mubr.bf16.mxu0 %v792
      %1862 = vmatmul.mubr.bf16.gmra.mrb[0].mxu0 %v791
      %v1863 = vpop.f32.mrb[0].mxu0
      %v1864 = vadd.f32 %v1703, %v1863
      %v1865 = vpop.f32.mrb[0].mxu0
      %v1866 = vpop.f32.mrb[0].mxu0
      %v1867 = vadd.f32 %v1706, %v1866
      %v1868 = vpop.f32.mrb[0].mxu0
      %1869 = vmatprep.mubr.bf16.mxu0 %v801
      %1870 = vmatmul.mubr.bf16.gmra.mrb[0].mxu0 %v800
      %v1871 = vpop.f32.mrb[0].mxu0
      %v1872 = vadd.f32 %v1711, %v1871
      %v1873 = vpop.f32.mrb[0].mxu0
      %v1874 = vpop.f32.mrb[0].mxu0
      %v1875 = vadd.f32 %v1714, %v1874
      %v1876 = vpop.f32.mrb[0].mxu0
      %1877 = vmatprep.mubr.bf16.mxu0 %v810
      %1878 = vmatmul.mubr.bf16.gmra.mrb[0].mxu0 %v809
      %v1879 = vpop.f32.mrb[0].mxu0
      %v1880 = vadd.f32 %v1719, %v1879
      %v1881 = vpop.f32.mrb[0].mxu0
      %v1882 = vpop.f32.mrb[0].mxu0
      %v1883 = vadd.f32 %v1722, %v1882
      %v1884 = vpop.f32.mrb[0].mxu0
      %1885 = vmatprep.mubr.bf16.mxu0 %v819
      %1886 = vmatmul.mubr.bf16.gmra.mrb[0].mxu0 %v818
      %v1887 = vpop.f32.mrb[0].mxu0
      %v1888 = vadd.f32 %v1727, %v1887
      %v1889 = vpop.f32.mrb[0].mxu0
      %v1890 = vpop.f32.mrb[0].mxu0
      %v1891 = vadd.f32 %v1730, %v1890
      %v1892 = vpop.f32.mrb[0].mxu0
      %1893 = vmatprep.mubr.bf16.mxu0 %v828
      %1894 = vmatmul.mubr.bf16.gmra.mrb[0].mxu0 %v827
      %v1895 = vpop.f32.mrb[0].mxu0
      %v1896 = vadd.f32 %v1735, %v1895
      %v1897 = vpop.f32.mrb[0].mxu0
      %v1898 = vpop.f32.mrb[0].mxu0
      %v1899 = vadd.f32 %v1738, %v1898
      %v1900 = vpop.f32.mrb[0].mxu0
      %1901 = vmatprep.mubr.bf16.mxu0 %v837
      %1902 = vmatmul.mubr.bf16.gmra.mrb[0].mxu0 %v836
      %v1903 = vpop.f32.mrb[0].mxu0
      %v1904 = vadd.f32 %v1743, %v1903
      %v1905 = vpop.f32.mrb[0].mxu0
      %v1906 = vpop.f32.mrb[0].mxu0
      %v1907 = vadd.f32 %v1746, %v1906
      %v1908 = vpop.f32.mrb[0].mxu0
      %1909 = vmatprep.mubr.bf16.mxu0 %v846
      %1910 = vmatmul.mubr.bf16.gmra.mrb[0].mxu0 %v845
      %v1911 = vpop.f32.mrb[0].mxu0
      %v1912 = vadd.f32 %v1751, %v1911
      %v1913 = vpop.f32.mrb[0].mxu0
      %v1914 = vpop.f32.mrb[0].mxu0
      %v1915 = vadd.f32 %v1754, %v1914
      %v1916 = vpop.f32.mrb[0].mxu0
      %1917 = vmatprep.mubr.bf16.mxu0 %v855
      %1918 = vmatmul.mubr.bf16.gmra.mrb[0].mxu0 %v854
      %v1919 = vpop.f32.mrb[0].mxu0
      %v1920 = vadd.f32 %v1759, %v1919
      %v1921 = vpop.f32.mrb[0].mxu0
      %v1922 = vpop.f32.mrb[0].mxu0
      %v1923 = vadd.f32 %v1762, %v1922
      %v1924 = vpop.f32.mrb[0].mxu0
      %1925 = vmatprep.mubr.bf16.mxu0 %v864
      %1926 = vmatmul.mubr.bf16.gmra.mrb[0].mxu0 %v863
      %v1927 = vpop.f32.mrb[0].mxu0
      %v1928 = vadd.f32 %v1767, %v1927
      %v1929 = vpop.f32.mrb[0].mxu0
      %v1930 = vpop.f32.mrb[0].mxu0
      %v1931 = vadd.f32 %v1770, %v1930
      %v1932 = vpop.f32.mrb[0].mxu0
      %1933 = vmatprep.mubr.bf16.mxu0 %v873
      %1934 = vmatmul.mubr.bf16.gmra.mrb[0].mxu0 %v872
      %v1935 = vpop.f32.mrb[0].mxu0
      %v1936 = vadd.f32 %v1775, %v1935
      %v1937 = vpop.f32.mrb[0].mxu0
      %v1938 = vpop.f32.mrb[0].mxu0
      %v1939 = vadd.f32 %v1778, %v1938
      %v1940 = vpop.f32.mrb[0].mxu0
      %1941 = vmatprep.mubr.bf16.mxu0 %v882
      %1942 = vmatmul.mubr.bf16.gmra.mrb[0].mxu0 %v881
      %v1943 = vpop.f32.mrb[0].mxu0
      %v1944 = vadd.f32 %v1783, %v1943
      %v1945 = vpop.f32.mrb[0].mxu0
      %v1946 = vpop.f32.mrb[0].mxu0
      %v1947 = vadd.f32 %v1786, %v1946
      %v1948 = vpop.f32.mrb[0].mxu0
      %1949 = vmatprep.mubr.bf16.mxu0 %v891
      %1950 = vmatmul.mubr.bf16.gmra.mrb[0].mxu0 %v890
      %v1951 = vpop.f32.mrb[0].mxu0
      %v1952 = vadd.f32 %v1791, %v1951
      %v1953 = vpop.f32.mrb[0].mxu0
      %v1954 = vpop.f32.mrb[0].mxu0
      %v1955 = vadd.f32 %v1794, %v1954
      %v1956 = vpop.f32.mrb[0].mxu0
      %1957 = vmatprep.mubr.bf16.mxu0 %v900
      %1958 = vmatmul.mubr.bf16.gmra.mrb[0].mxu0 %v899
      %v1959 = vpop.f32.mrb[0].mxu0
      %v1960 = vadd.f32 %v1799, %v1959
      %v1961 = vpop.f32.mrb[0].mxu0
      %v1962 = vpop.f32.mrb[0].mxu0
      %v1963 = vadd.f32 %v1802, %v1962
      %v1964 = vpop.f32.mrb[0].mxu0
      %1965 = vmatprep.mubr.bf16.mxu0 %v909
      %1966 = vmatmul.mubr.bf16.gmra.mrb[0].mxu0 %v908
      %v1967 = vpop.f32.mrb[0].mxu0
      %v1968 = vadd.f32 %v1807, %v1967
      %v1969 = vpop.f32.mrb[0].mxu0
      %v1970 = vpop.f32.mrb[0].mxu0
      %v1971 = vadd.f32 %v1810, %v1970
      %v1972 = vpop.f32.mrb[0].mxu0
      %1973 = vmatprep.mubr.bf16.mxu0 %v918
      %1974 = vmatmul.mubr.bf16.gmra.mrb[0].mxu0 %v917
      %v1975 = vpop.f32.mrb[0].mxu0
      %v1976 = vadd.f32 %v1815, %v1975
      %v1977 = vpop.f32.mrb[0].mxu0
      %v1978 = vpop.f32.mrb[0].mxu0
      %v1979 = vadd.f32 %v1818, %v1978
      %v1980 = vpop.f32.mrb[0].mxu0
      %1981 = vmatprep.mubr.bf16.mxu0 %v927
      %1982 = vmatmul.mubr.bf16.gmra.mrb[0].mxu0 %v926
      %v1983 = vpop.f32.mrb[0].mxu0
      %v1984 = vadd.f32 %v1823, %v1983
      %v1985 = vpop.f32.mrb[0].mxu0
      %v1986 = vpop.f32.mrb[0].mxu0
      %v1987 = vadd.f32 %v1826, %v1986
      %v1988 = vpop.f32.mrb[0].mxu0
      %1989 = vdwg.mxu0
      %1990 = vmatprep.subr.bf16.mxu0 0
      %1991 = vmatpush1.bf16.msra.mxu0 %v1411
      %1992 = vmatprep.subr.bf16.mxu0 0
      %1993 = vmatpush1.bf16.msra.mxu0 %v1412
      %1994 = vmatprep.subr.bf16.mxu0 0
      %1995 = vmatpush1.bf16.msra.mxu0 %v1413
      %1996 = vmatprep.subr.bf16.mxu0 0
      %1997 = vmatpush1.bf16.msra.mxu0 %v1414
      %1998 = vmatprep.subr.bf16.mxu0 0
      %1999 = vmatpush1.bf16.msra.mxu0 %v1415
      %2000 = vmatprep.subr.bf16.mxu0 0
      %2001 = vmatpush1.bf16.msra.mxu0 %v1416
      %2002 = vmatprep.subr.bf16.mxu0 0
      %2003 = vmatpush1.bf16.msra.mxu0 %v1417
      %2004 = vmatprep.subr.bf16.mxu0 0
      %2005 = vmatpush1.bf16.msra.mxu0 %v1418
      %2006 = vmatprep.subr.bf16.mxu0 0
      %2007 = vmatpush1.bf16.msra.mxu0 %v1419
      %2008 = vmatprep.subr.bf16.mxu0 0
      %2009 = vmatpush1.bf16.msra.mxu0 %v1420
      %2010 = vmatprep.subr.bf16.mxu0 0
      %2011 = vmatpush1.bf16.msra.mxu0 %v1421
      %2012 = vmatprep.subr.bf16.mxu0 0
      %2013 = vmatpush1.bf16.msra.mxu0 %v1422
      %2014 = vmatprep.subr.bf16.mxu0 0
      %2015 = vmatpush1.bf16.msra.mxu0 %v1423
      %2016 = vmatprep.subr.bf16.mxu0 0
      %2017 = vmatpush1.bf16.msra.mxu0 %v1424
      %2018 = vmatprep.subr.bf16.mxu0 0
      %2019 = vmatpush1.bf16.msra.mxu0 %v1425
      %2020 = vmatprep.subr.bf16.mxu0 0
      %2021 = vmatpush1.bf16.msra.mxu0 %v1426
      %2022 = vmatprep.mubr.bf16.mxu0 %v794
      %2023 = vmatmul.mubr.bf16.gmra.mrb[0].mxu0 %v793
      %v2024 = vpop.f32.mrb[0].mxu0
      %v2025 = vadd.f32 %v1864, %v2024
      %v2026 = vpop.f32.mrb[0].mxu0
      %v2027 = vpop.f32.mrb[0].mxu0
      %v2028 = vadd.f32 %v1867, %v2027
      %v2029 = vpop.f32.mrb[0].mxu0
      %2030 = vmatprep.mubr.bf16.mxu0 %v803
      %2031 = vmatmul.mubr.bf16.gmra.mrb[0].mxu0 %v802
      %v2032 = vpop.f32.mrb[0].mxu0
      %v2033 = vadd.f32 %v1872, %v2032
      %v2034 = vpop.f32.mrb[0].mxu0
      %v2035 = vpop.f32.mrb[0].mxu0
      %v2036 = vadd.f32 %v1875, %v2035
      %v2037 = vpop.f32.mrb[0].mxu0
      %2038 = vmatprep.mubr.bf16.mxu0 %v812
      %2039 = vmatmul.mubr.bf16.gmra.mrb[0].mxu0 %v811
      %v2040 = vpop.f32.mrb[0].mxu0
      %v2041 = vadd.f32 %v1880, %v2040
      %v2042 = vpop.f32.mrb[0].mxu0
      %v2043 = vpop.f32.mrb[0].mxu0
      %v2044 = vadd.f32 %v1883, %v2043
      %v2045 = vpop.f32.mrb[0].mxu0
      %2046 = vmatprep.mubr.bf16.mxu0 %v821
      %2047 = vmatmul.mubr.bf16.gmra.mrb[0].mxu0 %v820
      %v2048 = vpop.f32.mrb[0].mxu0
      %v2049 = vadd.f32 %v1888, %v2048
      %v2050 = vpop.f32.mrb[0].mxu0
      %v2051 = vpop.f32.mrb[0].mxu0
      %v2052 = vadd.f32 %v1891, %v2051
      %v2053 = vpop.f32.mrb[0].mxu0
      %2054 = vmatprep.mubr.bf16.mxu0 %v830
      %2055 = vmatmul.mubr.bf16.gmra.mrb[0].mxu0 %v829
      %v2056 = vpop.f32.mrb[0].mxu0
      %v2057 = vadd.f32 %v1896, %v2056
      %v2058 = vpop.f32.mrb[0].mxu0
      %v2059 = vpop.f32.mrb[0].mxu0
      %v2060 = vadd.f32 %v1899, %v2059
      %v2061 = vpop.f32.mrb[0].mxu0
      %2062 = vmatprep.mubr.bf16.mxu0 %v839
      %2063 = vmatmul.mubr.bf16.gmra.mrb[0].mxu0 %v838
      %v2064 = vpop.f32.mrb[0].mxu0
      %v2065 = vadd.f32 %v1904, %v2064
      %v2066 = vpop.f32.mrb[0].mxu0
      %v2067 = vpop.f32.mrb[0].mxu0
      %v2068 = vadd.f32 %v1907, %v2067
      %v2069 = vpop.f32.mrb[0].mxu0
      %2070 = vmatprep.mubr.bf16.mxu0 %v848
      %2071 = vmatmul.mubr.bf16.gmra.mrb[0].mxu0 %v847
      %v2072 = vpop.f32.mrb[0].mxu0
      %v2073 = vadd.f32 %v1912, %v2072
      %v2074 = vpop.f32.mrb[0].mxu0
      %v2075 = vpop.f32.mrb[0].mxu0
      %v2076 = vadd.f32 %v1915, %v2075
      %v2077 = vpop.f32.mrb[0].mxu0
      %2078 = vmatprep.mubr.bf16.mxu0 %v857
      %2079 = vmatmul.mubr.bf16.gmra.mrb[0].mxu0 %v856
      %v2080 = vpop.f32.mrb[0].mxu0
      %v2081 = vadd.f32 %v1920, %v2080
      %v2082 = vpop.f32.mrb[0].mxu0
      %v2083 = vpop.f32.mrb[0].mxu0
      %v2084 = vadd.f32 %v1923, %v2083
      %v2085 = vpop.f32.mrb[0].mxu0
      %2086 = vmatprep.mubr.bf16.mxu0 %v866
      %2087 = vmatmul.mubr.bf16.gmra.mrb[0].mxu0 %v865
      %v2088 = vpop.f32.mrb[0].mxu0
      %v2089 = vadd.f32 %v1928, %v2088
      %v2090 = vpop.f32.mrb[0].mxu0
      %v2091 = vpop.f32.mrb[0].mxu0
      %v2092 = vadd.f32 %v1931, %v2091
      %v2093 = vpop.f32.mrb[0].mxu0
      %2094 = vmatprep.mubr.bf16.mxu0 %v875
      %2095 = vmatmul.mubr.bf16.gmra.mrb[0].mxu0 %v874
      %v2096 = vpop.f32.mrb[0].mxu0
      %v2097 = vadd.f32 %v1936, %v2096
      %v2098 = vpop.f32.mrb[0].mxu0
      %v2099 = vpop.f32.mrb[0].mxu0
      %v2100 = vadd.f32 %v1939, %v2099
      %v2101 = vpop.f32.mrb[0].mxu0
      %2102 = vmatprep.mubr.bf16.mxu0 %v884
      %2103 = vmatmul.mubr.bf16.gmra.mrb[0].mxu0 %v883
      %v2104 = vpop.f32.mrb[0].mxu0
      %v2105 = vadd.f32 %v1944, %v2104
      %v2106 = vpop.f32.mrb[0].mxu0
      %v2107 = vpop.f32.mrb[0].mxu0
      %v2108 = vadd.f32 %v1947, %v2107
      %v2109 = vpop.f32.mrb[0].mxu0
      %2110 = vmatprep.mubr.bf16.mxu0 %v893
      %2111 = vmatmul.mubr.bf16.gmra.mrb[0].mxu0 %v892
      %v2112 = vpop.f32.mrb[0].mxu0
      %v2113 = vadd.f32 %v1952, %v2112
      %v2114 = vpop.f32.mrb[0].mxu0
      %v2115 = vpop.f32.mrb[0].mxu0
      %v2116 = vadd.f32 %v1955, %v2115
      %v2117 = vpop.f32.mrb[0].mxu0
      %2118 = vmatprep.mubr.bf16.mxu0 %v902
      %2119 = vmatmul.mubr.bf16.gmra.mrb[0].mxu0 %v901
      %v2120 = vpop.f32.mrb[0].mxu0
      %v2121 = vadd.f32 %v1960, %v2120
      %v2122 = vpop.f32.mrb[0].mxu0
      %v2123 = vpop.f32.mrb[0].mxu0
      %v2124 = vadd.f32 %v1963, %v2123
      %v2125 = vpop.f32.mrb[0].mxu0
      %2126 = vmatprep.mubr.bf16.mxu0 %v911
      %2127 = vmatmul.mubr.bf16.gmra.mrb[0].mxu0 %v910
      %v2128 = vpop.f32.mrb[0].mxu0
      %v2129 = vadd.f32 %v1968, %v2128
      %v2130 = vpop.f32.mrb[0].mxu0
      %v2131 = vpop.f32.mrb[0].mxu0
      %v2132 = vadd.f32 %v1971, %v2131
      %v2133 = vpop.f32.mrb[0].mxu0
      %2134 = vmatprep.mubr.bf16.mxu0 %v920
      %2135 = vmatmul.mubr.bf16.gmra.mrb[0].mxu0 %v919
      %v2136 = vpop.f32.mrb[0].mxu0
      %v2137 = vadd.f32 %v1976, %v2136
      %v2138 = vpop.f32.mrb[0].mxu0
      %v2139 = vpop.f32.mrb[0].mxu0
      %v2140 = vadd.f32 %v1979, %v2139
      %v2141 = vpop.f32.mrb[0].mxu0
      %2142 = vmatprep.mubr.bf16.mxu0 %v929
      %2143 = vmatmul.mubr.bf16.gmra.mrb[0].mxu0 %v928
      %v2144 = vpop.f32.mrb[0].mxu0
      %v2145 = vadd.f32 %v1984, %v2144
      %v2146 = vpop.f32.mrb[0].mxu0
      %v2147 = vpop.f32.mrb[0].mxu0
      %v2148 = vadd.f32 %v1987, %v2147
      %v2149 = vpop.f32.mrb[0].mxu0
      %2150 = vdwg.mxu0
      %2151 = vmatprep.subr.bf16.mxu0 0
      %2152 = vmatpush1.bf16.msra.mxu0 %v1427
      %2153 = vmatprep.subr.bf16.mxu0 0
      %2154 = vmatpush1.bf16.msra.mxu0 %v1428
      %2155 = vmatprep.subr.bf16.mxu0 0
      %2156 = vmatpush1.bf16.msra.mxu0 %v1429
      %2157 = vmatprep.subr.bf16.mxu0 0
      %2158 = vmatpush1.bf16.msra.mxu0 %v1430
      %2159 = vmatprep.subr.bf16.mxu0 0
      %2160 = vmatpush1.bf16.msra.mxu0 %v1431
      %2161 = vmatprep.subr.bf16.mxu0 0
      %2162 = vmatpush1.bf16.msra.mxu0 %v1432
      %2163 = vmatprep.subr.bf16.mxu0 0
      %2164 = vmatpush1.bf16.msra.mxu0 %v1433
      %2165 = vmatprep.subr.bf16.mxu0 0
      %2166 = vmatpush1.bf16.msra.mxu0 %v1434
      %2167 = vmatprep.subr.bf16.mxu0 0
      %2168 = vmatpush1.bf16.msra.mxu0 0
      %2169 = vmatprep.subr.bf16.mxu0 0
      %2170 = vmatpush1.bf16.msra.mxu0 0
      %2171 = vmatprep.subr.bf16.mxu0 0
      %2172 = vmatpush1.bf16.msra.mxu0 0
      %2173 = vmatprep.subr.bf16.mxu0 0
      %2174 = vmatpush1.bf16.msra.mxu0 0
      %2175 = vmatprep.subr.bf16.mxu0 0
      %2176 = vmatpush1.bf16.msra.mxu0 0
      %2177 = vmatprep.subr.bf16.mxu0 0
      %2178 = vmatpush1.bf16.msra.mxu0 0
      %2179 = vmatprep.subr.bf16.mxu0 0
      %2180 = vmatpush1.bf16.msra.mxu0 0
      %2181 = vmatprep.subr.bf16.mxu0 0
      %2182 = vmatpush1.bf16.msra.mxu0 0
      %2183 = vmatprep.mubr.bf16.mxu0 0
      %2184 = vmatmul.mubr.bf16.gmra.mrb[0].mxu0 %v795
      %v2185 = vpop.f32.mrb[0].mxu0
      %v2186 = vadd.f32 %v2025, %v2185
      %v2187 = vpop.f32.mrb[0].mxu0
      %v2188 = vpop.f32.mrb[0].mxu0
      %v2189 = vadd.f32 %v2028, %v2188
      %v2190 = vpop.f32.mrb[0].mxu0
      %2191 = vmatprep.mubr.bf16.mxu0 0
      %2192 = vmatmul.mubr.bf16.gmra.mrb[0].mxu0 %v804
      %v2193 = vpop.f32.mrb[0].mxu0
      %v2194 = vadd.f32 %v2033, %v2193
      %v2195 = vpop.f32.mrb[0].mxu0
      %v2196 = vpop.f32.mrb[0].mxu0
      %v2197 = vadd.f32 %v2036, %v2196
      %v2198 = vpop.f32.mrb[0].mxu0
      %2199 = vmatprep.mubr.bf16.mxu0 0
      %2200 = vmatmul.mubr.bf16.gmra.mrb[0].mxu0 %v813
      %v2201 = vpop.f32.mrb[0].mxu0
      %v2202 = vadd.f32 %v2041, %v2201
      %v2203 = vpop.f32.mrb[0].mxu0
      %v2204 = vpop.f32.mrb[0].mxu0
      %v2205 = vadd.f32 %v2044, %v2204
      %v2206 = vpop.f32.mrb[0].mxu0
      %2207 = vmatprep.mubr.bf16.mxu0 0
      %2208 = vmatmul.mubr.bf16.gmra.mrb[0].mxu0 %v822
      %v2209 = vpop.f32.mrb[0].mxu0
      %v2210 = vadd.f32 %v2049, %v2209
      %v2211 = vpop.f32.mrb[0].mxu0
      %v2212 = vpop.f32.mrb[0].mxu0
      %v2213 = vadd.f32 %v2052, %v2212
      %v2214 = vpop.f32.mrb[0].mxu0
      %2215 = vmatprep.mubr.bf16.mxu0 0
      %2216 = vmatmul.mubr.bf16.gmra.mrb[0].mxu0 %v831
      %v2217 = vpop.f32.mrb[0].mxu0
      %v2218 = vadd.f32 %v2057, %v2217
      %v2219 = vpop.f32.mrb[0].mxu0
      %v2220 = vpop.f32.mrb[0].mxu0
      %v2221 = vadd.f32 %v2060, %v2220
      %v2222 = vpop.f32.mrb[0].mxu0
      %2223 = vmatprep.mubr.bf16.mxu0 0
      %2224 = vmatmul.mubr.bf16.gmra.mrb[0].mxu0 %v840
      %v2225 = vpop.f32.mrb[0].mxu0
      %v2226 = vadd.f32 %v2065, %v2225
      %v2227 = vpop.f32.mrb[0].mxu0
      %v2228 = vpop.f32.mrb[0].mxu0
      %v2229 = vadd.f32 %v2068, %v2228
      %v2230 = vpop.f32.mrb[0].mxu0
      %2231 = vmatprep.mubr.bf16.mxu0 0
      %2232 = vmatmul.mubr.bf16.gmra.mrb[0].mxu0 %v849
      %v2233 = vpop.f32.mrb[0].mxu0
      %v2234 = vadd.f32 %v2073, %v2233
      %v2235 = vpop.f32.mrb[0].mxu0
      %v2236 = vpop.f32.mrb[0].mxu0
      %v2237 = vadd.f32 %v2076, %v2236
      %v2238 = vpop.f32.mrb[0].mxu0
      %2239 = vmatprep.mubr.bf16.mxu0 0
      %2240 = vmatmul.mubr.bf16.gmra.mrb[0].mxu0 %v858
      %v2241 = vpop.f32.mrb[0].mxu0
      %v2242 = vadd.f32 %v2081, %v2241
      %v2243 = vpop.f32.mrb[0].mxu0
      %v2244 = vpop.f32.mrb[0].mxu0
      %v2245 = vadd.f32 %v2084, %v2244
      %v2246 = vpop.f32.mrb[0].mxu0
      %2247 = vmatprep.mubr.bf16.mxu0 0
      %2248 = vmatmul.mubr.bf16.gmra.mrb[0].mxu0 %v867
      %v2249 = vpop.f32.mrb[0].mxu0
      %v2250 = vadd.f32 %v2089, %v2249
      %v2251 = vpop.f32.mrb[0].mxu0
      %v2252 = vpop.f32.mrb[0].mxu0
      %v2253 = vadd.f32 %v2092, %v2252
      %v2254 = vpop.f32.mrb[0].mxu0
      %2255 = vmatprep.mubr.bf16.mxu0 0
      %2256 = vmatmul.mubr.bf16.gmra.mrb[0].mxu0 %v876
      %v2257 = vpop.f32.mrb[0].mxu0
      %v2258 = vadd.f32 %v2097, %v2257
      %v2259 = vpop.f32.mrb[0].mxu0
      %v2260 = vpop.f32.mrb[0].mxu0
      %v2261 = vadd.f32 %v2100, %v2260
      %v2262 = vpop.f32.mrb[0].mxu0
      %2263 = vmatprep.mubr.bf16.mxu0 0
      %2264 = vmatmul.mubr.bf16.gmra.mrb[0].mxu0 %v885
      %v2265 = vpop.f32.mrb[0].mxu0
      %v2266 = vadd.f32 %v2105, %v2265
      %v2267 = vpop.f32.mrb[0].mxu0
      %v2268 = vpop.f32.mrb[0].mxu0
      %v2269 = vadd.f32 %v2108, %v2268
      %v2270 = vpop.f32.mrb[0].mxu0
      %2271 = vmatprep.mubr.bf16.mxu0 0
      %2272 = vmatmul.mubr.bf16.gmra.mrb[0].mxu0 %v894
      %v2273 = vpop.f32.mrb[0].mxu0
      %v2274 = vadd.f32 %v2113, %v2273
      %v2275 = vpop.f32.mrb[0].mxu0
      %v2276 = vpop.f32.mrb[0].mxu0
      %v2277 = vadd.f32 %v2116, %v2276
      %v2278 = vpop.f32.mrb[0].mxu0
      %2279 = vmatprep.mubr.bf16.mxu0 0
      %2280 = vmatmul.mubr.bf16.gmra.mrb[0].mxu0 %v903
      %v2281 = vpop.f32.mrb[0].mxu0
      %v2282 = vadd.f32 %v2121, %v2281
      %v2283 = vpop.f32.mrb[0].mxu0
      %v2284 = vpop.f32.mrb[0].mxu0
      %v2285 = vadd.f32 %v2124, %v2284
      %v2286 = vpop.f32.mrb[0].mxu0
      %2287 = vmatprep.mubr.bf16.mxu0 0
      %2288 = vmatmul.mubr.bf16.gmra.mrb[0].mxu0 %v912
      %v2289 = vpop.f32.mrb[0].mxu0
      %v2290 = vadd.f32 %v2129, %v2289
      %v2291 = vpop.f32.mrb[0].mxu0
      %v2292 = vpop.f32.mrb[0].mxu0
      %v2293 = vadd.f32 %v2132, %v2292
      %v2294 = vpop.f32.mrb[0].mxu0
      %2295 = vmatprep.mubr.bf16.mxu0 0
      %2296 = vmatmul.mubr.bf16.gmra.mrb[0].mxu0 %v921
      %v2297 = vpop.f32.mrb[0].mxu0
      %v2298 = vadd.f32 %v2137, %v2297
      %v2299 = vpop.f32.mrb[0].mxu0
      %v2300 = vpop.f32.mrb[0].mxu0
      %v2301 = vadd.f32 %v2140, %v2300
      %v2302 = vpop.f32.mrb[0].mxu0
      %2303 = vmatprep.mubr.bf16.mxu0 0
      %2304 = vmatmul.mubr.bf16.gmra.mrb[0].mxu0 %v930
      %v2305 = vpop.f32.mrb[0].mxu0
      %v2306 = vadd.f32 %v2145, %v2305
      %v2307 = vpop.f32.mrb[0].mxu0
      %v2308 = vpop.f32.mrb[0].mxu0
      %v2309 = vadd.f32 %v2148, %v2308
      %v2310 = vpop.f32.mrb[0].mxu0
      %2311 = vdwg.mxu0
      %v2312 = vadd.f32 %v2186, %v2189
      %v2313 = vadd.f32 %v2312, %v2194
      %v2314 = vadd.f32 %v2313, %v2197
      %v2315 = vadd.f32 %v2314, %v2202
      %v2316 = vadd.f32 %v2315, %v2205
      %v2317 = vadd.f32 %v2316, %v2210
      %v2318 = vadd.f32 %v2317, %v2213
      %v2319 = vadd.f32 %v2318, %v2218
      %v2320 = vadd.f32 %v2319, %v2221
      %v2321 = vadd.f32 %v2320, %v2226
      %v2322 = vadd.f32 %v2321, %v2229
      %v2323 = vadd.f32 %v2322, %v2234
      %v2324 = vadd.f32 %v2323, %v2237
      %v2325 = vadd.f32 %v2324, %v2242
      %v2326 = vadd.f32 %v2325, %v2245
      %v2327 = vadd.f32 %v2326, %v2250
      %v2328 = vadd.f32 %v2327, %v2253
      %v2329 = vadd.f32 %v2328, %v2258
      %v2330 = vadd.f32 %v2329, %v2261
      %v2331 = vadd.f32 %v2330, %v2266
      %v2332 = vadd.f32 %v2331, %v2269
      %v2333 = vadd.f32 %v2332, %v2274
      %v2334 = vadd.f32 %v2333, %v2277
      %v2335 = vadd.f32 %v2334, %v2282
      %v2336 = vadd.f32 %v2335, %v2285
      %v2337 = vadd.f32 %v2336, %v2290
      %v2338 = vadd.f32 %v2337, %v2293
      %v2339 = vadd.f32 %v2338, %v2298
      %v2340 = vadd.f32 %v2339, %v2301
      %v2341 = vadd.f32 %v2340, %v2306
      %v2342 = vadd.f32 %v2341, %v2309
      %v2343 = vrot.slane %v2342, 4
      %v2344 = vadd.f32 %v2342, %v2343
      %v2345 = vrot.slane %v2344, 2
      %v2346 = vadd.f32 %v2344, %v2345
      %v2347 = vrot.slane %v2346, 1
      %v2348 = vadd.f32 %v2346, %v2347
      %v2349 = vrcp.pop 256.0
      %v2350 = vmul.f32 %v2348, %v2349
      %v2351 = vsub.f32 %v2186, %v2350
      %v2352 = vsub.f32 %v2189, %v2350
      %v2353 = vsub.f32 %v2194, %v2350
      %v2354 = vsub.f32 %v2197, %v2350
      %v2355 = vsub.f32 %v2202, %v2350
      %v2356 = vsub.f32 %v2205, %v2350
      %v2357 = vsub.f32 %v2210, %v2350
      %v2358 = vsub.f32 %v2213, %v2350
      %v2359 = vsub.f32 %v2218, %v2350
      %v2360 = vsub.f32 %v2221, %v2350
      %v2361 = vsub.f32 %v2226, %v2350
      %v2362 = vsub.f32 %v2229, %v2350
      %v2363 = vsub.f32 %v2234, %v2350
      %v2364 = vsub.f32 %v2237, %v2350
      %v2365 = vsub.f32 %v2242, %v2350
      %v2366 = vsub.f32 %v2245, %v2350
      %v2367 = vsub.f32 %v2250, %v2350
      %v2368 = vsub.f32 %v2253, %v2350
      %v2369 = vsub.f32 %v2258, %v2350
      %v2370 = vsub.f32 %v2261, %v2350
      %v2371 = vsub.f32 %v2266, %v2350
      %v2372 = vsub.f32 %v2269, %v2350
      %v2373 = vsub.f32 %v2274, %v2350
      %v2374 = vsub.f32 %v2277, %v2350
      %v2375 = vsub.f32 %v2282, %v2350
      %v2376 = vsub.f32 %v2285, %v2350
      %v2377 = vsub.f32 %v2290, %v2350
      %v2378 = vsub.f32 %v2293, %v2350
      %v2379 = vsub.f32 %v2298, %v2350
      %v2380 = vsub.f32 %v2301, %v2350
      %v2381 = vsub.f32 %v2306, %v2350
      %v2382 = vsub.f32 %v2309, %v2350
      %v2383 = vmul.f32 %v2351, %v2351
      %v2384 = vmul.f32 %v2352, %v2352
      %v2385 = vmul.f32 %v2353, %v2353
      %v2386 = vmul.f32 %v2354, %v2354
      %v2387 = vmul.f32 %v2355, %v2355
      %v2388 = vmul.f32 %v2356, %v2356
      %v2389 = vmul.f32 %v2357, %v2357
      %v2390 = vmul.f32 %v2358, %v2358
      %v2391 = vmul.f32 %v2359, %v2359
      %v2392 = vmul.f32 %v2360, %v2360
      %v2393 = vmul.f32 %v2361, %v2361
      %v2394 = vmul.f32 %v2362, %v2362
      %v2395 = vmul.f32 %v2363, %v2363
      %v2396 = vmul.f32 %v2364, %v2364
      %v2397 = vmul.f32 %v2365, %v2365
      %v2398 = vmul.f32 %v2366, %v2366
      %v2399 = vmul.f32 %v2367, %v2367
      %v2400 = vmul.f32 %v2368, %v2368
      %v2401 = vmul.f32 %v2369, %v2369
      %v2402 = vmul.f32 %v2370, %v2370
      %v2403 = vmul.f32 %v2371, %v2371
      %v2404 = vmul.f32 %v2372, %v2372
      %v2405 = vmul.f32 %v2373, %v2373
      %v2406 = vmul.f32 %v2374, %v2374
      %v2407 = vmul.f32 %v2375, %v2375
      %v2408 = vmul.f32 %v2376, %v2376
      %v2409 = vmul.f32 %v2377, %v2377
      %v2410 = vmul.f32 %v2378, %v2378
      %v2411 = vmul.f32 %v2379, %v2379
      %v2412 = vmul.f32 %v2380, %v2380
      %v2413 = vmul.f32 %v2381, %v2381
      %v2414 = vmul.f32 %v2382, %v2382
      %v2415 = vadd.f32 %v2383, %v2384
      %v2416 = vadd.f32 %v2415, %v2385
      %v2417 = vadd.f32 %v2416, %v2386
      %v2418 = vadd.f32 %v2417, %v2387
      %v2419 = vadd.f32 %v2418, %v2388
      %v2420 = vadd.f32 %v2419, %v2389
      %v2421 = vadd.f32 %v2420, %v2390
      %v2422 = vadd.f32 %v2421, %v2391
      %v2423 = vadd.f32 %v2422, %v2392
      %v2424 = vadd.f32 %v2423, %v2393
      %v2425 = vadd.f32 %v2424, %v2394
      %v2426 = vadd.f32 %v2425, %v2395
      %v2427 = vadd.f32 %v2426, %v2396
      %v2428 = vadd.f32 %v2427, %v2397
      %v2429 = vadd.f32 %v2428, %v2398
      %v2430 = vadd.f32 %v2429, %v2399
      %v2431 = vadd.f32 %v2430, %v2400
      %v2432 = vadd.f32 %v2431, %v2401
      %v2433 = vadd.f32 %v2432, %v2402
      %v2434 = vadd.f32 %v2433, %v2403
      %v2435 = vadd.f32 %v2434, %v2404
      %v2436 = vadd.f32 %v2435, %v2405
      %v2437 = vadd.f32 %v2436, %v2406
      %v2438 = vadd.f32 %v2437, %v2407
      %v2439 = vadd.f32 %v2438, %v2408
      %v2440 = vadd.f32 %v2439, %v2409
      %v2441 = vadd.f32 %v2440, %v2410
      %v2442 = vadd.f32 %v2441, %v2411
      %v2443 = vadd.f32 %v2442, %v2412
      %v2444 = vadd.f32 %v2443, %v2413
      %v2445 = vadd.f32 %v2444, %v2414
      %v2446 = vrot.slane %v2445, 4
      %v2447 = vadd.f32 %v2445, %v2446
      %v2448 = vrot.slane %v2447, 2
      %v2449 = vadd.f32 %v2447, %v2448
      %v2450 = vrot.slane %v2449, 1
      %v2451 = vadd.f32 %v2449, %v2450
      %vm2452 = vcmask 1040384
      %v2453 = vsel %vm2452, %v2350, %v2451
      %2454 = vst [vmem:[%s235] sm:$0x3] %v2453
      %v2455 = vpack.c.bf16 %v2189, %v2186
      %v2456 = vpack.c.bf16 %v2197, %v2194
      %v2457 = vpack.c.bf16 %v2205, %v2202
      %v2458 = vpack.c.bf16 %v2213, %v2210
      %v2459 = vpack.c.bf16 %v2221, %v2218
      %v2460 = vpack.c.bf16 %v2229, %v2226
      %v2461 = vpack.c.bf16 %v2237, %v2234
      %v2462 = vpack.c.bf16 %v2245, %v2242
      %v2463 = vpack.c.bf16 %v2253, %v2250
      %v2464 = vpack.c.bf16 %v2261, %v2258
      %v2465 = vpack.c.bf16 %v2269, %v2266
      %v2466 = vpack.c.bf16 %v2277, %v2274
      %v2467 = vpack.c.bf16 %v2285, %v2282
      %v2468 = vpack.c.bf16 %v2293, %v2290
      %v2469 = vpack.c.bf16 %v2301, %v2298
      %v2470 = vpack.c.bf16 %v2309, %v2306
      %v2487 = vunpack.c.l.b16 %v2455
      %v2488 = vunpack.c.h.b16 %v2455
      %v2489 = vunpack.c.l.b16 %v2456
      %v2490 = vunpack.c.h.b16 %v2456
      %v2491 = vunpack.c.l.b16 %v2457
      %v2492 = vunpack.c.h.b16 %v2457
      %v2493 = vunpack.c.l.b16 %v2458
      %v2494 = vunpack.c.h.b16 %v2458
      %v2495 = vunpack.c.l.b16 %v2459
      %v2496 = vunpack.c.h.b16 %v2459
      %v2497 = vunpack.c.l.b16 %v2460
      %v2498 = vunpack.c.h.b16 %v2460
      %v2499 = vunpack.c.l.b16 %v2461
      %v2500 = vunpack.c.h.b16 %v2461
      %v2501 = vunpack.c.l.b16 %v2462
      %v2502 = vunpack.c.h.b16 %v2462
      %v2503 = vunpack.c.l.b16 %v2463
      %v2504 = vunpack.c.h.b16 %v2463
      %v2505 = vunpack.c.l.b16 %v2464
      %v2506 = vunpack.c.h.b16 %v2464
      %v2507 = vunpack.c.l.b16 %v2465
      %v2508 = vunpack.c.h.b16 %v2465
      %v2509 = vunpack.c.l.b16 %v2466
      %v2510 = vunpack.c.h.b16 %v2466
      %v2511 = vunpack.c.l.b16 %v2467
      %v2512 = vunpack.c.h.b16 %v2467
      %v2513 = vunpack.c.l.b16 %v2468
      %v2514 = vunpack.c.h.b16 %v2468
      %v2515 = vunpack.c.l.b16 %v2469
      %v2516 = vunpack.c.h.b16 %v2469
      %v2517 = vunpack.c.l.b16 %v2470
      %v2518 = vunpack.c.h.b16 %v2470
      %v2519 = vpack.c.b16 %v2487, %v2487
      %v2520 = vpack.c.b16 %v2488, %v2488
      %v2521 = vpack.c.b16 %v2489, %v2489
      %v2522 = vpack.c.b16 %v2490, %v2490
      %v2523 = vpack.c.b16 %v2491, %v2491
      %v2524 = vpack.c.b16 %v2492, %v2492
      %v2525 = vpack.c.b16 %v2493, %v2493
      %v2526 = vpack.c.b16 %v2494, %v2494
      %v2527 = vpack.c.b16 %v2495, %v2495
      %v2528 = vpack.c.b16 %v2496, %v2496
      %v2529 = vpack.c.b16 %v2497, %v2497
      %v2530 = vpack.c.b16 %v2498, %v2498
      %v2531 = vpack.c.b16 %v2499, %v2499
      %v2532 = vpack.c.b16 %v2500, %v2500
      %v2533 = vpack.c.b16 %v2501, %v2501
      %v2534 = vpack.c.b16 %v2502, %v2502
      %v2535 = vpack.c.b16 %v2503, %v2503
      %v2536 = vpack.c.b16 %v2504, %v2504
      %v2537 = vpack.c.b16 %v2505, %v2505
      %v2538 = vpack.c.b16 %v2506, %v2506
      %v2539 = vpack.c.b16 %v2507, %v2507
      %v2540 = vpack.c.b16 %v2508, %v2508
      %v2541 = vpack.c.b16 %v2509, %v2509
      %v2542 = vpack.c.b16 %v2510, %v2510
      %v2543 = vpack.c.b16 %v2511, %v2511
      %v2544 = vpack.c.b16 %v2512, %v2512
      %v2545 = vpack.c.b16 %v2513, %v2513
      %v2546 = vpack.c.b16 %v2514, %v2514
      %v2547 = vpack.c.b16 %v2515, %v2515
      %v2548 = vpack.c.b16 %v2516, %v2516
      %v2549 = vpack.c.b16 %v2517, %v2517
      %v2550 = vpack.c.b16 %v2518, %v2518
      %2583 = vst [vmem:[%s231] sm:$0xf] %v2519
      %2584 = vst [vmem:[%s231 + $0x4] sm:$0xf] %v2520
      %2585 = vst [vmem:[%s231 + $0x8] sm:$0xf] %v2521
      %2586 = vst [vmem:[%s231 + $0xc] sm:$0xf] %v2522
      %2587 = vst [vmem:[%s231 + $0x10] sm:$0xf] %v2523
      %2588 = vst [vmem:[%s231 + $0x14] sm:$0xf] %v2524
      %2589 = vst [vmem:[%s231 + $0x18] sm:$0xf] %v2525
      %2590 = vst [vmem:[%s231 + $0x1c] sm:$0xf] %v2526
      %2591 = vst [vmem:[%s231 + $0x20] sm:$0xf] %v2527
      %2592 = vst [vmem:[%s231 + $0x24] sm:$0xf] %v2528
      %2593 = vst [vmem:[%s231 + $0x28] sm:$0xf] %v2529
      %2594 = vst [vmem:[%s231 + $0x2c] sm:$0xf] %v2530
      %2595 = vst [vmem:[%s231 + $0x30] sm:$0xf] %v2531
      %2596 = vst [vmem:[%s231 + $0x34] sm:$0xf] %v2532
      %2597 = vst [vmem:[%s231 + $0x38] sm:$0xf] %v2533
      %2598 = vst [vmem:[%s231 + $0x3c] sm:$0xf] %v2534
      %2599 = vst [vmem:[%s231 + $0x40] sm:$0xf] %v2535
      %2600 = vst [vmem:[%s231 + $0x44] sm:$0xf] %v2536
      %2601 = vst [vmem:[%s231 + $0x48] sm:$0xf] %v2537
      %2602 = vst [vmem:[%s231 + $0x4c] sm:$0xf] %v2538
      %2603 = vst [vmem:[%s231 + $0x50] sm:$0xf] %v2539
      %2604 = vst [vmem:[%s231 + $0x54] sm:$0xf] %v2540
      %2605 = vst [vmem:[%s231 + $0x58] sm:$0xf] %v2541
      %2606 = vst [vmem:[%s231 + $0x5c] sm:$0xf] %v2542
      %2607 = vst [vmem:[%s231 + $0x60] sm:$0xf] %v2543
      %2608 = vst [vmem:[%s231 + $0x64] sm:$0xf] %v2544
      %2609 = vst [vmem:[%s231 + $0x68] sm:$0xf] %v2545
      %2610 = vst [vmem:[%s231 + $0x6c] sm:$0xf] %v2546
      %2611 = vst [vmem:[%s231 + $0x70] sm:$0xf] %v2547
      %2612 = vst [vmem:[%s231 + $0x74] sm:$0xf] %v2548
      %2613 = vst [vmem:[%s231 + $0x78] sm:$0xf] %v2549
      %2614 = vst [vmem:[%s231 + $0x7c] sm:$0xf] %v2550
      %p2615 = scmp.lt.s32.totalorder %s17, 1
      %s2616 = scalar_select %p2615, %s17, 1
      %s2617 = smul.addr %s2616, 32
      %s2618 = smul.addr %s2617, 4
      %s2619 = scalar_lea.vmem %s4, %s2618
      %p2620 = scmp.lt.s32.totalorder %s17, 1
      %s2621 = scalar_select %p2620, %s17, 1
      %s2622 = smul.addr %s2621, 2
      %s2623 = scalar_lea.vmem %s5, %s2622
      // Predicated region
      $region37: #{bottleneck_forward.5} parent=35 // pred_check
        %p2624 = pneg %p124
      $region38: #{bottleneck_forward.5} parent=35 // pred_check_branch
        %2626 = sbr.rel (%p2624) target = $region40
      $region39: #{bottleneck_forward.5} parent=35 // pred_region
        _
      $region40: #{bottleneck_forward.5} parent=35 // pred_fallthru
        _
      // Predicated region
      $region41: #{bottleneck_forward.5} parent=35 // pred_check
        %p2627 = pneg %p150
      $region42: #{bottleneck_forward.5} parent=35 // pred_check_branch
        %2629 = sbr.rel (%p2627) target = $region44
      $region43: #{bottleneck_forward.5} parent=35 // pred_region
        _
      $region44: #{bottleneck_forward.5} parent=35 // pred_fallthru
        _
    $region36: #{bottleneck_forward.5} parent=5 // pred_fallthru
      _
    %p2630 = scmp.le.s32.totalorder 2, %s12
    // Predicated region
    $region45: #{bottleneck_forward.5} parent=5 // pred_check
      %p2631 = pneg %p2630
    $region46: #{bottleneck_forward.5} parent=5 // pred_check_branch
      %2633 = sbr.rel (%p2631) target = $region48
    $region47: #{bottleneck_forward.5} parent=5 // pred_region
      %s2634 = ssub.s32 %s12, 2
      // Predicated region
      $region49: #{bottleneck_forward.5} parent=47 // pred_check
        %p2635 = pneg %p130
      $region50: #{bottleneck_forward.5} parent=47 // pred_check_branch
        %2637 = sbr.rel (%p2635) target = $region52
      $region51: #{bottleneck_forward.5} parent=47 // pred_region
        %p2638 = scmp.lt.s32.totalorder %s18, 1
        %s2639 = scalar_select %p2638, %s18, 1
        %s2640 = smul.addr %s2639, 32
        %s2641 = smul.addr %s2640, 4
        %s2642 = scalar_lea.vmem %s4, %s2641
      $region52: #{bottleneck_forward.5} parent=47 // pred_fallthru
        _
      // Predicated region
      $region53: #{bottleneck_forward.5} parent=47 // pred_check
        %p2643 = pneg %p156
      $region54: #{bottleneck_forward.5} parent=47 // pred_check_branch
        %2645 = sbr.rel (%p2643) target = $region56
      $region55: #{bottleneck_forward.5} parent=47 // pred_region
        %p2646 = scmp.lt.s32.totalorder %s18, 1
        %s2647 = scalar_select %p2646, %s18, 1
        %s2648 = smul.addr %s2647, 2
        %s2649 = scalar_lea.vmem %s5, %s2648
      $region56: #{bottleneck_forward.5} parent=47 // pred_fallthru
        _
    $region48: #{bottleneck_forward.5} parent=5 // pred_fallthru
      _
  $region6: #{bottleneck_forward.5} parent=0 // loop_footer
    %s16 = sadd.s32 1, %s12
  $region7: #{bottleneck_forward.5} parent=0 // loop_footer_branch
    %11 = sbr.rel target = $region3
  $region8: #{bottleneck_forward.5} parent=0 // loop_exit
    _

</llo_original>
